<compile_context>
chip_gen: v6e
topology: v6e:2x2x1
jax: 0.10.0
libtpu: 0.0.40
codegen_flags: <defaults>
</compile_context>

<pallas_src>
import functools
import math

import jax
import jax.numpy as jnp
from jax import lax
from jax.experimental import pallas as pl
from jax.experimental.pallas import tpu as pltpu

# ----- hyperparameters matching the PyTorch module (MNIST defaults) -----
CIN = 1                 # input_channels
K0 = 5                  # kernels[0]
GMU_PAD = (K0 - 1) // 2
GMU_EPS = 1e-4          # epsilons[0]
BN_EPS = 1e-5
OUT_GMU = 64
NUM_SLICES = 3
GMU_BASIS = NUM_SLICES + 1      # degree=1 -> [ones, 3 weight slices]
CLASSES = 10
E1 = math.exp(-1.0)


def _round_up(x, m):
    return ((x + m - 1) // m) * m


def _pick_col_tile(n_pad, max_tile=512):
    """Largest multiple-of-128 divisor of n_pad that is <= max_tile (n_pad is a 128-multiple)."""
    best, t = 128, 128
    while t <= min(n_pad, max_tile):
        if n_pad % t == 0:
            best = t
        t += 128
    return best


# =====================================================================
# Pallas kernels
# =====================================================================
def _gmu_kernel(y_ref, q_ref, g_ref, o_ref):
    """One column tile: normalize once, one stacked MXU matmul, group-sum, exp map."""
    y = y_ref[...]                                    # (F, TN) f32
    f = y.shape[0]
    # torch.std(dim=1) (unbiased), then y / std   -- computed ONCE per column (not per o).
    mu = jnp.mean(y, axis=0, keepdims=True)
    var = jnp.sum((y - mu) ** 2, axis=0, keepdims=True) * (1.0 / (f - 1))
    yn = y * lax.rsqrt(var)
    ysq = jnp.sum(yn * yn, axis=0, keepdims=True)     # (1, TN)  ||yn||^2
    wq = jnp.dot(q_ref[...], yn, preferred_element_type=jnp.float32)        # (O*d, TN)
    hsq = jnp.dot(g_ref[...], wq * wq, preferred_element_type=jnp.float32)  # (O, TN) ||Q_o^T yn||^2
    err = (ysq - hsq) * (1.0 / f)
    o_ref[...] = (jnp.exp(-err) - E1) * (1.0 / (1.0 - E1)) - 0.5


def gmu_layer(y_fn, q_stacked, g_sum):
    """y_fn: (F, Npad) noised+unfolded columns; q_stacked: (O*d, F); g_sum: (O, O*d).
    Returns (O, Npad) GMU activations."""
    f, n_pad = y_fn.shape
    o = g_sum.shape[0]
    tn = _pick_col_tile(n_pad)
    return pl.pallas_call(
        _gmu_kernel,
        out_shape=jax.ShapeDtypeStruct((o, n_pad), jnp.float32),
        grid=(n_pad // tn,),
        in_specs=[pl.BlockSpec((f, tn), lambda i: (0, i)),
                  pl.BlockSpec(q_stacked.shape, lambda i: (0, 0)),
                  pl.BlockSpec(g_sum.shape, lambda i: (0, 0))],
        out_specs=pl.BlockSpec((o, tn), lambda i: (0, i)),
        compiler_params=pltpu.CompilerParams(dimension_semantics=("parallel",)),
    )(y_fn, q_stacked, g_sum)


def _matmul_affine_kernel(x_ref, w_ref, s_ref, t_ref, o_ref, *, relu):
    acc = jnp.dot(x_ref[...], w_ref[...], preferred_element_type=jnp.float32)
    out = acc * s_ref[...] + t_ref[...]               # fused conv-bias + BN (f32 epilogue)
    if relu:
        out = jnp.maximum(out, 0.0)
    o_ref[...] = out


def matmul_affine(x, w, scale, shift, relu, tile_m=128):
    """x: (N, K) f32, w: (K, Co). Returns relu?(x @ w * scale + shift) as f32 (N, Co).
    MXU operands are bf16, accumulation f32; rows tiled (parallel) when N > tile_m."""
    n, k = x.shape
    co = w.shape[1]
    if n > tile_m:
        tm = tile_m
        n_pad = _round_up(n, tm)
        if n_pad > n:
            x = jnp.pad(x, ((0, n_pad - n), (0, 0)))
    else:
        tm, n_pad = n, n
    out = pl.pallas_call(
        functools.partial(_matmul_affine_kernel, relu=relu),
        out_shape=jax.ShapeDtypeStruct((n_pad, co), jnp.float32),
        grid=(n_pad // tm,),
        in_specs=[pl.BlockSpec((tm, k), lambda i: (i, 0)),
                  pl.BlockSpec((k, co), lambda i: (0, 0)),
                  pl.BlockSpec((1, co), lambda i: (0, 0)),
                  pl.BlockSpec((1, co), lambda i: (0, 0))],
        out_specs=pl.BlockSpec((tm, co), lambda i: (i, 0)),
        compiler_params=pltpu.CompilerParams(dimension_semantics=("parallel",)),
    )(x.astype(jnp.bfloat16), w.astype(jnp.bfloat16),
      scale.reshape(1, co).astype(jnp.float32), shift.reshape(1, co).astype(jnp.float32))
    return out[:n]


def _head_kernel(x_ref, w1_ref, s1_ref, t1_ref, w2_ref, b2_ref, o_ref):
    z = jnp.dot(x_ref[...], w1_ref[...], preferred_element_type=jnp.float32)
    z = jnp.maximum(z * s1_ref[...] + t1_ref[...], 0.0)        # fc1 + bnorm_fc + relu
    o_ref[...] = jnp.dot(z, w2_ref[...], preferred_element_type=jnp.float32) + b2_ref[...]


def head_fused(x, w1, s1, t1, w2, b2):
    """Fused fc1(+BN+ReLU)+fc2 head. x: (B, 128); fc2 output padded to 128 lanes."""
    b, c = x.shape
    co = w2.shape[1]
    return pl.pallas_call(
        _head_kernel,
        out_shape=jax.ShapeDtypeStruct((b, co), jnp.float32),
        grid=(1,),
        in_specs=[pl.BlockSpec((b, c), lambda i: (0, 0)),
                  pl.BlockSpec((c, c), lambda i: (0, 0)),
                  pl.BlockSpec((1, c), lambda i: (0, 0)),
                  pl.BlockSpec((1, c), lambda i: (0, 0)),
                  pl.BlockSpec((c, co), lambda i: (0, 0)),
                  pl.BlockSpec((1, co), lambda i: (0, 0))],
        out_specs=pl.BlockSpec((b, co), lambda i: (0, 0)),
    )(x, w1, s1.reshape(1, c), t1.reshape(1, c), w2, b2.reshape(1, co))


# =====================================================================
# XLA glue: layout only (unfold / im2col / pooling reshapes)
# =====================================================================
def unfold_nchw(x, k, pad):
    """torch.nn.Unfold((k,k), padding=pad): (B,C,H,W) -> (B, C*k*k, Ho*Wo)."""
    b, c, h, w = x.shape
    xp = jnp.pad(x, ((0, 0), (0, 0), (pad, pad), (pad, pad)))
    ho = h + 2 * pad - k + 1
    wo = w + 2 * pad - k + 1
    cols = []
    for kh in range(k):
        for kw in range(k):
            cols.append(xp[:, :, kh:kh + ho, kw:kw + wo])
    y = jnp.stack(cols, axis=2)                       # (B, C, k*k, Ho, Wo)
    return y.reshape(b, c * k * k, ho * wo)


def im2col_nhwc(x, k, pad):
    b, h, w, c = x.shape
    xp = jnp.pad(x, ((0, 0), (pad, pad), (pad, pad), (0, 0)))
    cols = []
    for kh in range(k):
        for kw in range(k):
            cols.append(xp[:, kh:kh + h, kw:kw + w, :])
    p = jnp.stack(cols, axis=3)                       # (B, H, W, k*k, C)
    return p.reshape(b * h * w, k * k * c)


def avg_pool_2x2(x):
    b, h, w, c = x.shape
    return x.reshape(b, h // 2, 2, w // 2, 2, c).mean(axis=(2, 4))


def max_pool_2x2_pad1(x):
    xp = jnp.pad(x, ((0, 0), (1, 1), (1, 1), (0, 0)), constant_values=-jnp.inf)
    b, h, w, c = xp.shape
    return xp.reshape(b, h // 2, 2, w // 2, 2, c).max(axis=(2, 4))


def max_pool_kxk(x, k):
    b, h, w, c = x.shape
    return x.reshape(b, h // k, k, w // k, k, c).max(axis=(2, 4))


# =====================================================================
# Deterministic parameter construction
# =====================================================================
def make_params(key):
    keys = iter(jax.random.split(key, 40))

    def nrm(shape, scale):
        return scale * jax.random.normal(next(keys), shape, jnp.float32)

    def bn(c):
        gamma = 1.0 + 0.1 * jax.random.normal(next(keys), (c,), jnp.float32)
        beta = 0.1 * jax.random.normal(next(keys), (c,), jnp.float32)
        mean = 0.1 * jax.random.normal(next(keys), (c,), jnp.float32)
        var = 0.5 + jax.random.uniform(next(keys), (c,), jnp.float32)
        s = gamma / jnp.sqrt(var + BN_EPS)
        t = beta - mean * s
        return s, t

    p = {}

    # ----- GMU layer: orthonormal basis Q_o of X_o (decay_regress = 0 -> exact projector) -----
    f = CIN * K0 * K0
    wg = nrm((OUT_GMU, CIN, K0, K0, NUM_SLICES), 0.1)
    X = wg.reshape(OUT_GMU, f, NUM_SLICES)            # degree=1 -> no extra powers
    X = jnp.concatenate([jnp.ones((OUT_GMU, f, 1), jnp.float32), X], axis=2)  # (O, F, 4)
    Q, _ = jnp.linalg.qr(X)                           # (O, F, 4); H_o = Q_o Q_o^T
    p["gmu_Q"] = jnp.transpose(Q, (0, 2, 1)).reshape(OUT_GMU * GMU_BASIS, f)  # (256, 25)
    p["gmu_G"] = jnp.kron(jnp.eye(OUT_GMU, dtype=jnp.float32),
                          jnp.ones((1, GMU_BASIS), jnp.float32))              # (64, 256)

    # ----- conv stack (eval-mode BN folded into scale/shift, weights stored bf16) -----
    s1, t1 = bn(64)                                   # bn1 (applied right before conv2)
    w2 = nrm((128, 64, 3, 3), 1.0 / math.sqrt(64.0 * 9.0))
    b2 = nrm((128,), 0.05)
    s2, t2 = bn(128)
    w2f = w2 * s1[None, :, None, None]                # fold bn1 into conv2
    b2f = b2 + jnp.sum(w2 * t1[None, :, None, None], axis=(1, 2, 3))
    p["conv2_w"] = jnp.transpose(w2f, (2, 3, 1, 0)).reshape(9 * 64, 128).astype(jnp.bfloat16)
    p["conv2_scale"] = s2
    p["conv2_shift"] = s2 * b2f + t2

    w3 = nrm((128, 128, 3, 3), 1.0 / math.sqrt(128.0 * 9.0))
    b3 = nrm((128,), 0.05)
    s3, t3 = bn(128)
    p["conv3_w"] = jnp.transpose(w3, (2, 3, 1, 0)).reshape(9 * 128, 128).astype(jnp.bfloat16)
    p["conv3_scale"] = s3
    p["conv3_shift"] = s3 * b3 + t3

    w4 = nrm((128, 128, 3, 3), 1.0 / math.sqrt(128.0 * 9.0))
    b4 = nrm((128,), 0.05)
    s4, t4 = bn(128)
    p["conv4_w"] = jnp.transpose(w4, (2, 3, 1, 0)).reshape(9 * 128, 128).astype(jnp.bfloat16)
    p["conv4_scale"] = s4
    p["conv4_shift"] = s4 * b4 + t4

    # ----- head (f32; fc2 output padded from 10 to 128 lanes) -----
    wf1 = nrm((128, 128, 1, 1), 1.0 / math.sqrt(128.0))
    bf1 = nrm((128,), 0.05)
    sf, tf = bn(128)                                  # bnorm_fc
    p["fc1_w"] = wf1[:, :, 0, 0].T
    p["fc1_scale"] = sf
    p["fc1_shift"] = sf * bf1 + tf

    wf2 = nrm((CLASSES, 128, 1, 1), 1.0 / math.sqrt(128.0))
    bf2 = nrm((CLASSES,), 0.05)
    p["fc2_w"] = jnp.zeros((128, 128), jnp.float32).at[:, :CLASSES].set(wf2[:, :, 0, 0].T)
    p["fc2_b"] = jnp.zeros((128,), jnp.float32).at[:CLASSES].set(bf2)
    return p


# =====================================================================
# Forward pass (mirrors Net_vanilla_CNN_convert.forward)
# =====================================================================
def net_forward(x, params, noise_key):
    """x: (B, Cin, S, S) NCHW float32. Returns (logits (B,10), x_errs (B,128,1,1))."""
    b, _, s, _ = x.shape
    f = CIN * K0 * K0
    n = b * s * s

    # --- GMULayer: unfold + noise + (single-kernel) normalize/project/exp ---
    y = unfold_nchw(x, K0, GMU_PAD)                                   # (B, F, L)
    y = y + GMU_EPS * jax.random.normal(noise_key, y.shape, jnp.float32)
    yfn = jnp.transpose(y, (1, 0, 2)).reshape(f, n)                   # (F, B*L)
    n_pad = _round_up(n, 128)
    if n_pad > n:                                                     # lane-dense columns
        yfn = jnp.pad(yfn, ((0, 0), (0, n_pad - n)), mode="edge")
    a = gmu_layer(yfn, params["gmu_Q"], params["gmu_G"])[:, :n]       # (64, B*L)
    h = jnp.transpose(a.reshape(OUT_GMU, b, s, s), (1, 2, 3, 0))      # NHWC (B, S, S, 64)

    # --- feat_net: mpool1, bn1(folded), conv2+bn2+relu, mpool2, conv3+bn3+relu,
    #               mpool3(pad=1), conv4+bn4+relu, mpool4 ---
    h = avg_pool_2x2(h)
    hs = s // 2
    h = matmul_affine(im2col_nhwc(h, 3, 1), params["conv2_w"],
                      params["conv2_scale"], params["conv2_shift"], relu=True)
    h = h.reshape(b, hs, hs, 128)

    h = avg_pool_2x2(h)
    hs //= 2
    h = matmul_affine(im2col_nhwc(h, 3, 1), params["conv3_w"],
                      params["conv3_scale"], params["conv3_shift"], relu=True)
    h = h.reshape(b, hs, hs, 128)

    h = max_pool_2x2_pad1(h)
    hs = hs // 2 + 1
    h = matmul_affine(im2col_nhwc(h, 3, 1), params["conv4_w"],
                      params["conv4_scale"], params["conv4_shift"], relu=True)
    h = h.reshape(b, hs, hs, 128)

    h = max_pool_kxk(h, 4)                                            # (B, 1, 1, 128)
    x_errs = jnp.transpose(h, (0, 3, 1, 2))                           # (B, 128, 1, 1) NCHW

    # --- fused head: fc1 + bnorm_fc + relu + fc2 (one Pallas call, padded lanes) ---
    flat = h.reshape(b, 128)
    logits = head_fused(flat, params["fc1_w"], params["fc1_scale"], params["fc1_shift"],
                        params["fc2_w"], params["fc2_b"])[:, :CLASSES]
    return logits, x_errs


if __name__ == "__main__":
    key = jax.random.PRNGKey(0)
    pkey, xkey = jax.random.split(key)
    params = make_params(pkey)

    # Small MNIST-like input: batch=2, 1 channel, 24x24 spatial (24 keeps the
    # pool chain 24->12->6->4->1 so the 128-dim FC head applies exactly).
    x = jax.random.normal(xkey, (2, CIN, 24, 24), jnp.float32)

    fwd = jax.jit(net_forward)
    logits, x_errs = fwd(x, params, jax.random.PRNGKey(1))
    jax.block_until_ready(logits)
    jax.block_until_ready(x_errs)

    assert logits.shape == (2, CLASSES)
    assert x_errs.shape == (2, 128, 1, 1)
    assert bool(jnp.all(jnp.isfinite(logits)))
    assert bool(jnp.all(jnp.isfinite(x_errs)))
    print("KERNEL_OK")
</pallas_src>

<mosaic_0001>
module attributes {stable_mosaic.version = 11 : i64} {
  func.func @_gmu_kernel(%arg0: i32, %arg1: memref<25x384xf32, #tpu.memory_space<vmem>>, %arg2: memref<256x25xf32, #tpu.memory_space<vmem>>, %arg3: memref<64x256xf32, #tpu.memory_space<vmem>>, %arg4: memref<64x384xf32, #tpu.memory_space<vmem>>) attributes {dimension_semantics = [#tpu.dimension_semantics<parallel>], iteration_bounds = array<i64: 3>, scalar_prefetch = 0 : i64, scratch_operands = 0 : i64, tpu.core_type = #tpu.core_type<tc>, window_params = [{transform_indices = @transform_0, window_bounds = array<i64: 25, 384>}, {pipeline_mode = #tpu.pipeline_mode<synchronous>, transform_indices = @transform_1, window_bounds = array<i64: 256, 25>}, {pipeline_mode = #tpu.pipeline_mode<synchronous>, transform_indices = @transform_2, window_bounds = array<i64: 64, 256>}, {transform_indices = @transform_3, window_bounds = array<i64: 64, 384>}]} {
    %c0 = arith.constant 0 : index
    %c0_0 = arith.constant 0 : index
    %0 = vector.load %arg1[%c0, %c0_0] : memref<25x384xf32, #tpu.memory_space<vmem>>, vector<25x384xf32>
    %cst = arith.constant dense<0.000000e+00> : vector<384xf32>
    %1 = vector.multi_reduction <add>, %0, %cst [0] : vector<25x384xf32> to vector<384xf32>
    %2 = vector.shape_cast %1 : vector<384xf32> to vector<1x384xf32>
    %cst_1 = arith.constant 2.500000e+01 : f32
    %3 = vector.broadcast %cst_1 : f32 to vector<1x384xf32>
    %4 = arith.divf %2, %3 : vector<1x384xf32>
    %5 = vector.broadcast %4 : vector<1x384xf32> to vector<25x384xf32>
    %6 = arith.subf %0, %5 : vector<25x384xf32>
    %7 = arith.mulf %6, %6 : vector<25x384xf32>
    %cst_2 = arith.constant dense<0.000000e+00> : vector<384xf32>
    %8 = vector.multi_reduction <add>, %7, %cst_2 [0] : vector<25x384xf32> to vector<384xf32>
    %9 = vector.shape_cast %8 : vector<384xf32> to vector<1x384xf32>
    %cst_3 = arith.constant 0.0416666679 : f32
    %10 = vector.broadcast %cst_3 : f32 to vector<1x384xf32>
    %11 = arith.mulf %9, %10 : vector<1x384xf32>
    %12 = math.rsqrt %11 : vector<1x384xf32>
    %13 = vector.broadcast %12 : vector<1x384xf32> to vector<25x384xf32>
    %14 = arith.mulf %0, %13 : vector<25x384xf32>
    %15 = arith.mulf %14, %14 : vector<25x384xf32>
    %cst_4 = arith.constant dense<0.000000e+00> : vector<384xf32>
    %16 = vector.multi_reduction <add>, %15, %cst_4 [0] : vector<25x384xf32> to vector<384xf32>
    %17 = vector.shape_cast %16 : vector<384xf32> to vector<1x384xf32>
    %c0_5 = arith.constant 0 : index
    %c0_6 = arith.constant 0 : index
    %18 = vector.load %arg2[%c0_5, %c0_6] : memref<256x25xf32, #tpu.memory_space<vmem>>, vector<256x25xf32>
    %cst_7 = arith.constant dense<0.000000e+00> : vector<256x384xf32>
    %19 = tpu.matmul %18, %14, %cst_7 {dimension_numbers = #tpu.dot_dimension_numbers<[1], [0], [0], [1], [0, 0, 1, 1], [], []>} : vector<256x25xf32>, vector<25x384xf32>, vector<256x384xf32> -> vector<256x384xf32>
    %c0_8 = arith.constant 0 : index
    %c0_9 = arith.constant 0 : index
    %20 = vector.load %arg3[%c0_8, %c0_9] : memref<64x256xf32, #tpu.memory_space<vmem>>, vector<64x256xf32>
    %21 = arith.mulf %19, %19 : vector<256x384xf32>
    %cst_10 = arith.constant dense<0.000000e+00> : vector<64x384xf32>
    %22 = tpu.matmul %20, %21, %cst_10 {dimension_numbers = #tpu.dot_dimension_numbers<[1], [0], [0], [1], [0, 0, 1, 1], [], []>} : vector<64x256xf32>, vector<256x384xf32>, vector<64x384xf32> -> vector<64x384xf32>
    %23 = vector.broadcast %17 : vector<1x384xf32> to vector<64x384xf32>
    %24 = arith.subf %23, %22 : vector<64x384xf32>
    %cst_11 = arith.constant 4.000000e-02 : f32
    %25 = vector.broadcast %cst_11 : f32 to vector<64x384xf32>
    %26 = arith.mulf %24, %25 : vector<64x384xf32>
    %cst_12 = arith.constant 0.000000e+00 : f32
    %27 = vector.broadcast %cst_12 : f32 to vector<64x384xf32>
    %28 = arith.subf %27, %26 : vector<64x384xf32>
    %29 = math.exp %28 : vector<64x384xf32>
    %cst_13 = arith.constant 0.36787945 : f32
    %30 = vector.broadcast %cst_13 : f32 to vector<64x384xf32>
    %31 = arith.subf %29, %30 : vector<64x384xf32>
    %cst_14 = arith.constant 1.58197665 : f32
    %32 = vector.broadcast %cst_14 : f32 to vector<64x384xf32>
    %33 = arith.mulf %31, %32 : vector<64x384xf32>
    %cst_15 = arith.constant 5.000000e-01 : f32
    %34 = vector.broadcast %cst_15 : f32 to vector<64x384xf32>
    %35 = arith.subf %33, %34 : vector<64x384xf32>
    %c0_16 = arith.constant 0 : index
    %c0_17 = arith.constant 0 : index
    %36 = vector.load %arg4[%c0_16, %c0_17] : memref<64x384xf32, #tpu.memory_space<vmem>>, vector<64x384xf32>
    tpu.vector_store %arg4[%c0_16, %c0_17], %35 {strides = array<i32>} : memref<64x384xf32, #tpu.memory_space<vmem>>, vector<64x384xf32>,
    return
  }
  func.func @transform_0(%arg0: i32) -> (i32, i32) {
    %c0_i32 = arith.constant 0 : i32
    %c0_i32_0 = arith.constant 0 : i32
    return %c0_i32, %arg0 : i32, i32
  }
  func.func @transform_1(%arg0: i32) -> (i32, i32) {
    %c0_i32 = arith.constant 0 : i32
    %c0_i32_0 = arith.constant 0 : i32
    %c0_i32_1 = arith.constant 0 : i32
    return %c0_i32, %c0_i32_0 : i32, i32
  }
  func.func @transform_2(%arg0: i32) -> (i32, i32) {
    %c0_i32 = arith.constant 0 : i32
    %c0_i32_0 = arith.constant 0 : i32
    %c0_i32_1 = arith.constant 0 : i32
    return %c0_i32, %c0_i32_0 : i32, i32
  }
  func.func @transform_3(%arg0: i32) -> (i32, i32) {
    %c0_i32 = arith.constant 0 : i32
    %c0_i32_0 = arith.constant 0 : i32
    return %c0_i32, %arg0 : i32, i32
  }
}

module attributes {stable_mosaic.version = 11 : i64} {
  func.func @_matmul_affine_kernel(%arg0: i32, %arg1: memref<128x576xbf16, #tpu.memory_space<vmem>>, %arg2: memref<576x128xbf16, #tpu.memory_space<vmem>>, %arg3: memref<1x128xf32, #tpu.memory_space<vmem>>, %arg4: memref<1x128xf32, #tpu.memory_space<vmem>>, %arg5: memref<128x128xf32, #tpu.memory_space<vmem>>) attributes {dimension_semantics = [#tpu.dimension_semantics<parallel>], iteration_bounds = array<i64: 3>, scalar_prefetch = 0 : i64, scratch_operands = 0 : i64, tpu.core_type = #tpu.core_type<tc>, window_params = [{transform_indices = @transform_0, window_bounds = array<i64: 128, 576>}, {pipeline_mode = #tpu.pipeline_mode<synchronous>, transform_indices = @transform_1, window_bounds = array<i64: 576, 128>}, {pipeline_mode = #tpu.pipeline_mode<synchronous>, transform_indices = @transform_2, window_bounds = array<i64: 1, 128>}, {pipeline_mode = #tpu.pipeline_mode<synchronous>, transform_indices = @transform_3, window_bounds = array<i64: 1, 128>}, {transform_indices = @transform_4, window_bounds = array<i64: 128, 128>}]} {
    %c0 = arith.constant 0 : index
    %c0_0 = arith.constant 0 : index
    %0 = vector.load %arg1[%c0, %c0_0] : memref<128x576xbf16, #tpu.memory_space<vmem>>, vector<128x576xbf16>
    %c0_1 = arith.constant 0 : index
    %c0_2 = arith.constant 0 : index
    %1 = vector.load %arg2[%c0_1, %c0_2] : memref<576x128xbf16, #tpu.memory_space<vmem>>, vector<576x128xbf16>
    %cst = arith.constant dense<0.000000e+00> : vector<128x128xf32>
    %2 = tpu.matmul %0, %1, %cst {dimension_numbers = #tpu.dot_dimension_numbers<[1], [0], [0], [1], [0, 0, 1, 1], [], []>} : vector<128x576xbf16>, vector<576x128xbf16>, vector<128x128xf32> -> vector<128x128xf32>
    %c0_3 = arith.constant 0 : index
    %c0_4 = arith.constant 0 : index
    %3 = vector.load %arg3[%c0_3, %c0_4] : memref<1x128xf32, #tpu.memory_space<vmem>>, vector<1x128xf32>
    %4 = vector.broadcast %3 : vector<1x128xf32> to vector<128x128xf32>
    %5 = arith.mulf %2, %4 : vector<128x128xf32>
    %c0_5 = arith.constant 0 : index
    %c0_6 = arith.constant 0 : index
    %6 = vector.load %arg4[%c0_5, %c0_6] : memref<1x128xf32, #tpu.memory_space<vmem>>, vector<1x128xf32>
    %7 = vector.broadcast %6 : vector<1x128xf32> to vector<128x128xf32>
    %8 = arith.addf %5, %7 : vector<128x128xf32>
    %cst_7 = arith.constant 0.000000e+00 : f32
    %9 = vector.broadcast %cst_7 : f32 to vector<128x128xf32>
    %10 = arith.maximumf %8, %9 : vector<128x128xf32>
    %c0_8 = arith.constant 0 : index
    %c0_9 = arith.constant 0 : index
    %11 = vector.load %arg5[%c0_8, %c0_9] : memref<128x128xf32, #tpu.memory_space<vmem>>, vector<128x128xf32>
    tpu.vector_store %arg5[%c0_8, %c0_9], %10 {strides = array<i32>} : memref<128x128xf32, #tpu.memory_space<vmem>>, vector<128x128xf32>,
    return
  }
  func.func @transform_0(%arg0: i32) -> (i32, i32) {
    %c0_i32 = arith.constant 0 : i32
    %c0_i32_0 = arith.constant 0 : i32
    return %arg0, %c0_i32 : i32, i32
  }
  func.func @transform_1(%arg0: i32) -> (i32, i32) {
    %c0_i32 = arith.constant 0 : i32
    %c0_i32_0 = arith.constant 0 : i32
    %c0_i32_1 = arith.constant 0 : i32
    return %c0_i32, %c0_i32_0 : i32, i32
  }
  func.func @transform_2(%arg0: i32) -> (i32, i32) {
    %c0_i32 = arith.constant 0 : i32
    %c0_i32_0 = arith.constant 0 : i32
    %c0_i32_1 = arith.constant 0 : i32
    return %c0_i32, %c0_i32_0 : i32, i32
  }
  func.func @transform_3(%arg0: i32) -> (i32, i32) {
    %c0_i32 = arith.constant 0 : i32
    %c0_i32_0 = arith.constant 0 : i32
    %c0_i32_1 = arith.constant 0 : i32
    return %c0_i32, %c0_i32_0 : i32, i32
  }
  func.func @transform_4(%arg0: i32) -> (i32, i32) {
    %c0_i32 = arith.constant 0 : i32
    %c0_i32_0 = arith.constant 0 : i32
    return %arg0, %c0_i32 : i32, i32
  }
}

module attributes {stable_mosaic.version = 11 : i64} {
  func.func @_matmul_affine_kernel(%arg0: i32, %arg1: memref<72x1152xbf16, #tpu.memory_space<vmem>>, %arg2: memref<1152x128xbf16, #tpu.memory_space<vmem>>, %arg3: memref<1x128xf32, #tpu.memory_space<vmem>>, %arg4: memref<1x128xf32, #tpu.memory_space<vmem>>, %arg5: memref<72x128xf32, #tpu.memory_space<vmem>>) attributes {dimension_semantics = [#tpu.dimension_semantics<parallel>], iteration_bounds = array<i64: 1>, scalar_prefetch = 0 : i64, scratch_operands = 0 : i64, tpu.core_type = #tpu.core_type<tc>, window_params = [{transform_indices = @transform_0, window_bounds = array<i64: 72, 1152>}, {pipeline_mode = #tpu.pipeline_mode<synchronous>, transform_indices = @transform_1, window_bounds = array<i64: 1152, 128>}, {pipeline_mode = #tpu.pipeline_mode<synchronous>, transform_indices = @transform_2, window_bounds = array<i64: 1, 128>}, {pipeline_mode = #tpu.pipeline_mode<synchronous>, transform_indices = @transform_3, window_bounds = array<i64: 1, 128>}, {transform_indices = @transform_4, window_bounds = array<i64: 72, 128>}]} {
    %c0 = arith.constant 0 : index
    %c0_0 = arith.constant 0 : index
    %0 = vector.load %arg1[%c0, %c0_0] : memref<72x1152xbf16, #tpu.memory_space<vmem>>, vector<72x1152xbf16>
    %c0_1 = arith.constant 0 : index
    %c0_2 = arith.constant 0 : index
    %1 = vector.load %arg2[%c0_1, %c0_2] : memref<1152x128xbf16, #tpu.memory_space<vmem>>, vector<1152x128xbf16>
    %cst = arith.constant dense<0.000000e+00> : vector<72x128xf32>
    %2 = tpu.matmul %0, %1, %cst {dimension_numbers = #tpu.dot_dimension_numbers<[1], [0], [0], [1], [0, 0, 1, 1], [], []>} : vector<72x1152xbf16>, vector<1152x128xbf16>, vector<72x128xf32> -> vector<72x128xf32>
    %c0_3 = arith.constant 0 : index
    %c0_4 = arith.constant 0 : index
    %3 = vector.load %arg3[%c0_3, %c0_4] : memref<1x128xf32, #tpu.memory_space<vmem>>, vector<1x128xf32>
    %4 = vector.broadcast %3 : vector<1x128xf32> to vector<72x128xf32>
    %5 = arith.mulf %2, %4 : vector<72x128xf32>
    %c0_5 = arith.constant 0 : index
    %c0_6 = arith.constant 0 : index
    %6 = vector.load %arg4[%c0_5, %c0_6] : memref<1x128xf32, #tpu.memory_space<vmem>>, vector<1x128xf32>
    %7 = vector.broadcast %6 : vector<1x128xf32> to vector<72x128xf32>
    %8 = arith.addf %5, %7 : vector<72x128xf32>
    %cst_7 = arith.constant 0.000000e+00 : f32
    %9 = vector.broadcast %cst_7 : f32 to vector<72x128xf32>
    %10 = arith.maximumf %8, %9 : vector<72x128xf32>
    %c0_8 = arith.constant 0 : index
    %c0_9 = arith.constant 0 : index
    %11 = vector.load %arg5[%c0_8, %c0_9] : memref<72x128xf32, #tpu.memory_space<vmem>>, vector<72x128xf32>
    tpu.vector_store %arg5[%c0_8, %c0_9], %10 {strides = array<i32>} : memref<72x128xf32, #tpu.memory_space<vmem>>, vector<72x128xf32>,
    return
  }
  func.func @transform_0(%arg0: i32) -> (i32, i32) {
    %c0_i32 = arith.constant 0 : i32
    %c0_i32_0 = arith.constant 0 : i32
    return %arg0, %c0_i32 : i32, i32
  }
  func.func @transform_1(%arg0: i32) -> (i32, i32) {
    %c0_i32 = arith.constant 0 : i32
    %c0_i32_0 = arith.constant 0 : i32
    %c0_i32_1 = arith.constant 0 : i32
    return %c0_i32, %c0_i32_0 : i32, i32
  }
  func.func @transform_2(%arg0: i32) -> (i32, i32) {
    %c0_i32 = arith.constant 0 : i32
    %c0_i32_0 = arith.constant 0 : i32
    %c0_i32_1 = arith.constant 0 : i32
    return %c0_i32, %c0_i32_0 : i32, i32
  }
  func.func @transform_3(%arg0: i32) -> (i32, i32) {
    %c0_i32 = arith.constant 0 : i32
    %c0_i32_0 = arith.constant 0 : i32
    %c0_i32_1 = arith.constant 0 : i32
    return %c0_i32, %c0_i32_0 : i32, i32
  }
  func.func @transform_4(%arg0: i32) -> (i32, i32) {
    %c0_i32 = arith.constant 0 : i32
    %c0_i32_0 = arith.constant 0 : i32
    return %arg0, %c0_i32 : i32, i32
  }
}

module attributes {stable_mosaic.version = 11 : i64} {
  func.func @_matmul_affine_kernel(%arg0: i32, %arg1: memref<32x1152xbf16, #tpu.memory_space<vmem>>, %arg2: memref<1152x128xbf16, #tpu.memory_space<vmem>>, %arg3: memref<1x128xf32, #tpu.memory_space<vmem>>, %arg4: memref<1x128xf32, #tpu.memory_space<vmem>>, %arg5: memref<32x128xf32, #tpu.memory_space<vmem>>) attributes {dimension_semantics = [#tpu.dimension_semantics<parallel>], iteration_bounds = array<i64: 1>, scalar_prefetch = 0 : i64, scratch_operands = 0 : i64, tpu.core_type = #tpu.core_type<tc>, window_params = [{transform_indices = @transform_0, window_bounds = array<i64: 32, 1152>}, {pipeline_mode = #tpu.pipeline_mode<synchronous>, transform_indices = @transform_1, window_bounds = array<i64: 1152, 128>}, {pipeline_mode = #tpu.pipeline_mode<synchronous>, transform_indices = @transform_2, window_bounds = array<i64: 1, 128>}, {pipeline_mode = #tpu.pipeline_mode<synchronous>, transform_indices = @transform_3, window_bounds = array<i64: 1, 128>}, {transform_indices = @transform_4, window_bounds = array<i64: 32, 128>}]} {
    %c0 = arith.constant 0 : index
    %c0_0 = arith.constant 0 : index
    %0 = vector.load %arg1[%c0, %c0_0] : memref<32x1152xbf16, #tpu.memory_space<vmem>>, vector<32x1152xbf16>
    %c0_1 = arith.constant 0 : index
    %c0_2 = arith.constant 0 : index
    %1 = vector.load %arg2[%c0_1, %c0_2] : memref<1152x128xbf16, #tpu.memory_space<vmem>>, vector<1152x128xbf16>
    %cst = arith.constant dense<0.000000e+00> : vector<32x128xf32>
    %2 = tpu.matmul %0, %1, %cst {dimension_numbers = #tpu.dot_dimension_numbers<[1], [0], [0], [1], [0, 0, 1, 1], [], []>} : vector<32x1152xbf16>, vector<1152x128xbf16>, vector<32x128xf32> -> vector<32x128xf32>
    %c0_3 = arith.constant 0 : index
    %c0_4 = arith.constant 0 : index
    %3 = vector.load %arg3[%c0_3, %c0_4] : memref<1x128xf32, #tpu.memory_space<vmem>>, vector<1x128xf32>
    %4 = vector.broadcast %3 : vector<1x128xf32> to vector<32x128xf32>
    %5 = arith.mulf %2, %4 : vector<32x128xf32>
    %c0_5 = arith.constant 0 : index
    %c0_6 = arith.constant 0 : index
    %6 = vector.load %arg4[%c0_5, %c0_6] : memref<1x128xf32, #tpu.memory_space<vmem>>, vector<1x128xf32>
    %7 = vector.broadcast %6 : vector<1x128xf32> to vector<32x128xf32>
    %8 = arith.addf %5, %7 : vector<32x128xf32>
    %cst_7 = arith.constant 0.000000e+00 : f32
    %9 = vector.broadcast %cst_7 : f32 to vector<32x128xf32>
    %10 = arith.maximumf %8, %9 : vector<32x128xf32>
    %c0_8 = arith.constant 0 : index
    %c0_9 = arith.constant 0 : index
    %11 = vector.load %arg5[%c0_8, %c0_9] : memref<32x128xf32, #tpu.memory_space<vmem>>, vector<32x128xf32>
    tpu.vector_store %arg5[%c0_8, %c0_9], %10 {strides = array<i32>} : memref<32x128xf32, #tpu.memory_space<vmem>>, vector<32x128xf32>,
    return
  }
  func.func @transform_0(%arg0: i32) -> (i32, i32) {
    %c0_i32 = arith.constant 0 : i32
    %c0_i32_0 = arith.constant 0 : i32
    return %arg0, %c0_i32 : i32, i32
  }
  func.func @transform_1(%arg0: i32) -> (i32, i32) {
    %c0_i32 = arith.constant 0 : i32
    %c0_i32_0 = arith.constant 0 : i32
    %c0_i32_1 = arith.constant 0 : i32
    return %c0_i32, %c0_i32_0 : i32, i32
  }
  func.func @transform_2(%arg0: i32) -> (i32, i32) {
    %c0_i32 = arith.constant 0 : i32
    %c0_i32_0 = arith.constant 0 : i32
    %c0_i32_1 = arith.constant 0 : i32
    return %c0_i32, %c0_i32_0 : i32, i32
  }
  func.func @transform_3(%arg0: i32) -> (i32, i32) {
    %c0_i32 = arith.constant 0 : i32
    %c0_i32_0 = arith.constant 0 : i32
    %c0_i32_1 = arith.constant 0 : i32
    return %c0_i32, %c0_i32_0 : i32, i32
  }
  func.func @transform_4(%arg0: i32) -> (i32, i32) {
    %c0_i32 = arith.constant 0 : i32
    %c0_i32_0 = arith.constant 0 : i32
    return %arg0, %c0_i32 : i32, i32
  }
}

module attributes {stable_mosaic.version = 11 : i64} {
  func.func @_head_kernel(%arg0: i32, %arg1: memref<2x128xf32, #tpu.memory_space<vmem>>, %arg2: memref<128x128xf32, #tpu.memory_space<vmem>>, %arg3: memref<1x128xf32, #tpu.memory_space<vmem>>, %arg4: memref<1x128xf32, #tpu.memory_space<vmem>>, %arg5: memref<128x128xf32, #tpu.memory_space<vmem>>, %arg6: memref<1x128xf32, #tpu.memory_space<vmem>>, %arg7: memref<2x128xf32, #tpu.memory_space<vmem>>) attributes {dimension_semantics = [#tpu.dimension_semantics<arbitrary>], iteration_bounds = array<i64: 1>, scalar_prefetch = 0 : i64, scratch_operands = 0 : i64, tpu.core_type = #tpu.core_type<tc>, window_params = [{pipeline_mode = #tpu.pipeline_mode<synchronous>, transform_indices = @transform_0, window_bounds = array<i64: 2, 128>}, {pipeline_mode = #tpu.pipeline_mode<synchronous>, transform_indices = @transform_1, window_bounds = array<i64: 128, 128>}, {pipeline_mode = #tpu.pipeline_mode<synchronous>, transform_indices = @transform_2, window_bounds = array<i64: 1, 128>}, {pipeline_mode = #tpu.pipeline_mode<synchronous>, transform_indices = @transform_3, window_bounds = array<i64: 1, 128>}, {pipeline_mode = #tpu.pipeline_mode<synchronous>, transform_indices = @transform_4, window_bounds = array<i64: 128, 128>}, {pipeline_mode = #tpu.pipeline_mode<synchronous>, transform_indices = @transform_5, window_bounds = array<i64: 1, 128>}, {pipeline_mode = #tpu.pipeline_mode<synchronous>, transform_indices = @transform_6, window_bounds = array<i64: 2, 128>}]} {
    %c0 = arith.constant 0 : index
    %c0_0 = arith.constant 0 : index
    %0 = vector.load %arg1[%c0, %c0_0] : memref<2x128xf32, #tpu.memory_space<vmem>>, vector<2x128xf32>
    %c0_1 = arith.constant 0 : index
    %c0_2 = arith.constant 0 : index
    %1 = vector.load %arg2[%c0_1, %c0_2] : memref<128x128xf32, #tpu.memory_space<vmem>>, vector<128x128xf32>
    %cst = arith.constant dense<0.000000e+00> : vector<2x128xf32>
    %2 = tpu.matmul %0, %1, %cst {dimension_numbers = #tpu.dot_dimension_numbers<[1], [0], [0], [1], [0, 0, 1, 1], [], []>} : vector<2x128xf32>, vector<128x128xf32>, vector<2x128xf32> -> vector<2x128xf32>
    %c0_3 = arith.constant 0 : index
    %c0_4 = arith.constant 0 : index
    %3 = vector.load %arg3[%c0_3, %c0_4] : memref<1x128xf32, #tpu.memory_space<vmem>>, vector<1x128xf32>
    %4 = vector.broadcast %3 : vector<1x128xf32> to vector<2x128xf32>
    %5 = arith.mulf %2, %4 : vector<2x128xf32>
    %c0_5 = arith.constant 0 : index
    %c0_6 = arith.constant 0 : index
    %6 = vector.load %arg4[%c0_5, %c0_6] : memref<1x128xf32, #tpu.memory_space<vmem>>, vector<1x128xf32>
    %7 = vector.broadcast %6 : vector<1x128xf32> to vector<2x128xf32>
    %8 = arith.addf %5, %7 : vector<2x128xf32>
    %cst_7 = arith.constant 0.000000e+00 : f32
    %9 = vector.broadcast %cst_7 : f32 to vector<2x128xf32>
    %10 = arith.maximumf %8, %9 : vector<2x128xf32>
    %c0_8 = arith.constant 0 : index
    %c0_9 = arith.constant 0 : index
    %11 = vector.load %arg5[%c0_8, %c0_9] : memref<128x128xf32, #tpu.memory_space<vmem>>, vector<128x128xf32>
    %cst_10 = arith.constant dense<0.000000e+00> : vector<2x128xf32>
    %12 = tpu.matmul %10, %11, %cst_10 {dimension_numbers = #tpu.dot_dimension_numbers<[1], [0], [0], [1], [0, 0, 1, 1], [], []>} : vector<2x128xf32>, vector<128x128xf32>, vector<2x128xf32> -> vector<2x128xf32>
    %c0_11 = arith.constant 0 : index
    %c0_12 = arith.constant 0 : index
    %13 = vector.load %arg6[%c0_11, %c0_12] : memref<1x128xf32, #tpu.memory_space<vmem>>, vector<1x128xf32>
    %14 = vector.broadcast %13 : vector<1x128xf32> to vector<2x128xf32>
    %15 = arith.addf %12, %14 : vector<2x128xf32>
    %c0_13 = arith.constant 0 : index
    %c0_14 = arith.constant 0 : index
    %16 = vector.load %arg7[%c0_13, %c0_14] : memref<2x128xf32, #tpu.memory_space<vmem>>, vector<2x128xf32>
    tpu.vector_store %arg7[%c0_13, %c0_14], %15 {strides = array<i32>} : memref<2x128xf32, #tpu.memory_space<vmem>>, vector<2x128xf32>,
    return
  }
  func.func @transform_0(%arg0: i32) -> (i32, i32) {
    %c0_i32 = arith.constant 0 : i32
    %c0_i32_0 = arith.constant 0 : i32
    %c0_i32_1 = arith.constant 0 : i32
    return %c0_i32, %c0_i32_0 : i32, i32
  }
  func.func @transform_1(%arg0: i32) -> (i32, i32) {
    %c0_i32 = arith.constant 0 : i32
    %c0_i32_0 = arith.constant 0 : i32
    %c0_i32_1 = arith.constant 0 : i32
    return %c0_i32, %c0_i32_0 : i32, i32
  }
  func.func @transform_2(%arg0: i32) -> (i32, i32) {
    %c0_i32 = arith.constant 0 : i32
    %c0_i32_0 = arith.constant 0 : i32
    %c0_i32_1 = arith.constant 0 : i32
    return %c0_i32, %c0_i32_0 : i32, i32
  }
  func.func @transform_3(%arg0: i32) -> (i32, i32) {
    %c0_i32 = arith.constant 0 : i32
    %c0_i32_0 = arith.constant 0 : i32
    %c0_i32_1 = arith.constant 0 : i32
    return %c0_i32, %c0_i32_0 : i32, i32
  }
  func.func @transform_4(%arg0: i32) -> (i32, i32) {
    %c0_i32 = arith.constant 0 : i32
    %c0_i32_0 = arith.constant 0 : i32
    %c0_i32_1 = arith.constant 0 : i32
    return %c0_i32, %c0_i32_0 : i32, i32
  }
  func.func @transform_5(%arg0: i32) -> (i32, i32) {
    %c0_i32 = arith.constant 0 : i32
    %c0_i32_0 = arith.constant 0 : i32
    %c0_i32_1 = arith.constant 0 : i32
    return %c0_i32, %c0_i32_0 : i32, i32
  }
  func.func @transform_6(%arg0: i32) -> (i32, i32) {
    %c0_i32 = arith.constant 0 : i32
    %c0_i32_0 = arith.constant 0 : i32
    %c0_i32_1 = arith.constant 0 : i32
    return %c0_i32, %c0_i32_0 : i32, i32
  }
}

</mosaic_0001>

<llo_original>
// kernel: net_forward.5
$region0: #{net_forward.5}
  #allocation0 [shape = 'u32[]', space=smem, size = 0x4, offset = 0x4, fixed_abs, tag = 'smem constant byte address 0x4 - core index']
  #allocation1 [shape = 'u32[144,128]{1,0:T(1,128)}', space=vmem, size = 0x12000, scoped, tag = 'internal scratch']
  %s0 = inlined_call_operand.vmem [shape: f32[25,1152], index: 0, kind: input, shape index: {}]
  %s1 = inlined_call_operand.vmem [shape: f32[256,25], index: 1, kind: input, shape index: {}]
  %s2 = inlined_call_operand.vmem [shape: f32[64,256], index: 2, kind: input, shape index: {}]
  %s3 = inlined_call_operand.vmem [shape: f32[64,1152], index: 3, kind: output, shape index: {}]
  %s4 = sld [smem:[#allocation0]]
  $region87: #{net_forward.5} parent=0
    _
  %s6 = ssub.s32 1, %s4
  %s7 = scalar_select 0, %s6, %s4
  $region1: #{net_forward.5} parent=0
    #allocation2 [shape = 'u8[98304]{0}', space=vmem, size = 0x18000, scoped, tag = 'input window, operand 0']
    #allocation3 [shape = 'u8[196608]{0}', space=vmem, size = 0x30000, scoped, tag = 'output window, operand 0']
    loop: start=0, step=1, limit=5
    $region2: #{net_forward.5} parent=1 // loop_pre_header
      _
    $region3: #{net_forward.5} parent=1 // loop_header
      %s9 = sphi 0, %s13
      %p10 = scmp.ge.s32.totalorder %s9, 5
      %s19 = sphi 0, %s21
      %s22 = sphi 0, %s19
      %s23 = sphi 0, %s22
      %s39 = sphi 0, %s23
      %s43 = sphi 0, %s43
      %s45 = sphi 0, %s43
      %s46 = sphi 0, %s45
      %s60 = sphi 0, %s46
      %s64 = sphi 0, %s64
      %s66 = sphi 0, %s64
      %s67 = sphi 0, %s66
      %s81 = sphi 0, %s67
      %s87 = sphi 0, %s89
      %s90 = sphi 0, %s87
      %s91 = sphi 0, %s90
      %s107 = sphi 0, %s91
    $region4: #{net_forward.5} parent=1 // loop_header_branch
      %12 = sbr.rel (%p10) target = $region8
    $region5: #{net_forward.5} parent=1 // loop_body
      %s14 = ssub.s32 %s9, 1
      %s15 = ssub.s32 %s9, 2
      %s16 = sadd.s32 %s9, 1
      %s17 = ssub.s32 %s9, %s16
      %p18 = scmp.eq.s32.totalorder %s17, 0
      %s20 = sadd.s32 %s19, 1
      %s21 = scalar_select %p18, %s19, %s20
      %p24 = pneg %p18
      %p25 = scmp.eq.s32.totalorder %s9, 2
      %p26 = por %p24, %p25
      %p27 = scmp.ne.s32.totalorder %s19, %s22
      %p28 = scmp.eq.s32.totalorder %s9, 0
      %p29 = por %p27, %p28
      %p30 = scmp.ne.s32.totalorder %s19, %s22
      %p31 = scmp.eq.s32.totalorder %s14, 2
      %p32 = por %p30, %p31
      %p33 = scmp.ne.s32.totalorder %s22, %s23
      %p34 = scmp.eq.s32.totalorder %s14, 0
      %p35 = por %p33, %p34
      %p36 = scmp.ne.s32.totalorder %s22, %s23
      %p37 = scmp.eq.s32.totalorder %s15, 2
      %p38 = por %p36, %p37
      %p40 = scmp.ne.s32.totalorder %s23, %s39
      %p41 = scmp.eq.s32.totalorder %s15, 0
      %p42 = por %p40, %p41
      %s44 = sadd.s32 %s43, 1
      %p47 = scmp.eq.s32.totalorder %s9, 2
      %p48 = scmp.ne.s32.totalorder %s43, %s45
      %p49 = scmp.eq.s32.totalorder %s9, 0
      %p50 = por %p48, %p49
      %p51 = scmp.ne.s32.totalorder %s43, %s45
      %p52 = scmp.eq.s32.totalorder %s14, 2
      %p53 = por %p51, %p52
      %p54 = scmp.ne.s32.totalorder %s45, %s46
      %p55 = scmp.eq.s32.totalorder %s14, 0
      %p56 = por %p54, %p55
      %p57 = scmp.ne.s32.totalorder %s45, %s46
      %p58 = scmp.eq.s32.totalorder %s15, 2
      %p59 = por %p57, %p58
      %p61 = scmp.ne.s32.totalorder %s46, %s60
      %p62 = scmp.eq.s32.totalorder %s15, 0
      %p63 = por %p61, %p62
      %s65 = sadd.s32 %s64, 1
      %p68 = scmp.eq.s32.totalorder %s9, 2
      %p69 = scmp.ne.s32.totalorder %s64, %s66
      %p70 = scmp.eq.s32.totalorder %s9, 0
      %p71 = por %p69, %p70
      %p72 = scmp.ne.s32.totalorder %s64, %s66
      %p73 = scmp.eq.s32.totalorder %s14, 2
      %p74 = por %p72, %p73
      %p75 = scmp.ne.s32.totalorder %s66, %s67
      %p76 = scmp.eq.s32.totalorder %s14, 0
      %p77 = por %p75, %p76
      %p78 = scmp.ne.s32.totalorder %s66, %s67
      %p79 = scmp.eq.s32.totalorder %s15, 2
      %p80 = por %p78, %p79
      %p82 = scmp.ne.s32.totalorder %s67, %s81
      %p83 = scmp.eq.s32.totalorder %s15, 0
      %p84 = por %p82, %p83
      %s85 = ssub.s32 %s9, %s16
      %p86 = scmp.eq.s32.totalorder %s85, 0
      %s88 = sadd.s32 %s87, 1
      %s89 = scalar_select %p86, %s87, %s88
      %p92 = pneg %p86
      %p93 = scmp.eq.s32.totalorder %s9, 2
      %p94 = por %p92, %p93
      %p95 = scmp.ne.s32.totalorder %s87, %s90
      %p96 = scmp.eq.s32.totalorder %s9, 0
      %p97 = por %p95, %p96
      %p98 = scmp.ne.s32.totalorder %s87, %s90
      %p99 = scmp.eq.s32.totalorder %s14, 2
      %p100 = por %p98, %p99
      %p101 = scmp.ne.s32.totalorder %s90, %s91
      %p102 = scmp.eq.s32.totalorder %s14, 0
      %p103 = por %p101, %p102
      %p104 = scmp.ne.s32.totalorder %s90, %s91
      %p105 = scmp.eq.s32.totalorder %s15, 2
      %p106 = por %p104, %p105
      %p108 = scmp.ne.s32.totalorder %s91, %s107
      %p109 = scmp.eq.s32.totalorder %s15, 0
      %p110 = por %p108, %p109
      %p111 = scmp.le.s32.totalorder 1, %s9
      %p112 = scmp.lt.s32.totalorder %s9, 4
      %p113 = pnand %p111, %p112
      %p114 = pneg %p113
      // Predicated region
      $region9: #{net_forward.5} parent=5 // pred_check
        _
      $region10: #{net_forward.5} parent=5 // pred_check_branch
        %116 = sbr.rel (%p113) target = $region12
      $region11: #{net_forward.5} parent=5 // pred_region
        %s117 = ssub.s32 %s9, 1
        // Predicated region
        $region13: #{net_forward.5} parent=11 // pred_check
          %p118 = pneg %p56
        $region14: #{net_forward.5} parent=11 // pred_check_branch
          %120 = sbr.rel (%p118) target = $region16
        $region15: #{net_forward.5} parent=11 // pred_region
          _
        $region16: #{net_forward.5} parent=11 // pred_fallthru
          _
        // Predicated region
        $region17: #{net_forward.5} parent=11 // pred_check
          %p121 = pneg %p77
        $region18: #{net_forward.5} parent=11 // pred_check_branch
          %123 = sbr.rel (%p121) target = $region20
        $region19: #{net_forward.5} parent=11 // pred_region
          _
        $region20: #{net_forward.5} parent=11 // pred_fallthru
          _
      $region12: #{net_forward.5} parent=5 // pred_fallthru
        _
      %p124 = scmp.lt.s32.totalorder %s9, 3
      // Predicated region
      $region21: #{net_forward.5} parent=5 // pred_check
        %p125 = pneg %p124
      $region22: #{net_forward.5} parent=5 // pred_check_branch
        %127 = sbr.rel (%p125) target = $region24
      $region23: #{net_forward.5} parent=5 // pred_region
        // Predicated region
        $region25: #{net_forward.5} parent=23 // pred_check
          %p128 = pneg %p29
        $region26: #{net_forward.5} parent=23 // pred_check_branch
          %130 = sbr.rel (%p128) target = $region28
        $region27: #{net_forward.5} parent=23 // pred_region
          %s131 = sand.u32 %s19, 1
          %s132 = sand.u32 %s19, 1
          %s133 = smul.addr %s132, 96
          %s134 = scalar_lea.vmem [#allocation2], %s133
          %s135 = smul.u32 3, %s9
          %s136 = smul.addr %s135, 8
          %s137 = scalar_lea.vmem %s0, %s136
          // Predicated region
          $region29: #{net_forward.5} parent=27 // pred_check
            _
          $region30: #{net_forward.5} parent=27 // pred_check_branch
            %139 = sbr.rel (0) target = $region32
          $region31: #{net_forward.5} parent=27 // pred_region
            // Predicated region
            $region33: #{net_forward.5} parent=31 // pred_check
              _
            $region34: #{net_forward.5} parent=31 // pred_check_branch
              %141 = sbr.rel (0) target = $region36
            $region35: #{net_forward.5} parent=31 // pred_region
              loop: start=0, step=1, limit=1
              $region37: #{net_forward.5} parent=35 // loop_pre_header
                _
              $region38: #{net_forward.5} parent=35 // loop_header
                %s143 = sphi 0, %s147
                %p144 = scmp.ge.s32.totalorder %s143, 1
                %s148 = sphi %s137, %s137
                %s149 = sphi %s134, %s134
              $region39: #{net_forward.5} parent=35 // loop_header_branch
                %146 = sbr.rel (%p144) target = $region43
              $region40: #{net_forward.5} parent=35 // loop_body
                %v150 = vld [vmem:[%s148] sm:$0xff]
                %151 = vst [vmem:[%s149] sm:$0xff] %v150
                %v152 = vld [vmem:[%s148 + $0x8] sm:$0xff]
                %153 = vst [vmem:[%s149 + $0x8] sm:$0xff] %v152
                %v154 = vld [vmem:[%s148 + $0x10] sm:$0xff]
                %155 = vst [vmem:[%s149 + $0x10] sm:$0xff] %v154
                %v156 = vld [vmem:[%s148 + $0x48] sm:$0xff]
                %157 = vst [vmem:[%s149 + $0x18] sm:$0xff] %v156
                %v158 = vld [vmem:[%s148 + $0x50] sm:$0xff]
                %159 = vst [vmem:[%s149 + $0x20] sm:$0xff] %v158
                %v160 = vld [vmem:[%s148 + $0x58] sm:$0xff]
                %161 = vst [vmem:[%s149 + $0x28] sm:$0xff] %v160
                %v162 = vld [vmem:[%s148 + $0x90] sm:$0xff]
                %163 = vst [vmem:[%s149 + $0x30] sm:$0xff] %v162
                %v164 = vld [vmem:[%s148 + $0x98] sm:$0xff]
                %165 = vst [vmem:[%s149 + $0x38] sm:$0xff] %v164
                %v166 = vld [vmem:[%s148 + $0xa0] sm:$0xff]
                %167 = vst [vmem:[%s149 + $0x40] sm:$0xff] %v166
                %v168 = vld [vmem:[%s148 + $0xd8] sm:$0xff]
                %169 = vst [vmem:[%s149 + $0x48] sm:$0xff] %v168
                %v170 = vld [vmem:[%s148 + $0xe0] sm:$0xff]
                %171 = vst [vmem:[%s149 + $0x50] sm:$0xff] %v170
                %v172 = vld [vmem:[%s148 + $0xe8] sm:$0xff]
                %173 = vst [vmem:[%s149 + $0x58] sm:$0xff] %v172
              $region41: #{net_forward.5} parent=35 // loop_footer
                %s147 = sadd.s32 1, %s143
              $region42: #{net_forward.5} parent=35 // loop_footer_branch
                %142 = sbr.rel target = $region38
              $region43: #{net_forward.5} parent=35 // loop_exit
                _
            $region36: #{net_forward.5} parent=31 // pred_fallthru
              _
            // Predicated region
            $region44: #{net_forward.5} parent=31 // pred_check
              _
            $region45: #{net_forward.5} parent=31 // pred_check_branch
              %175 = sbr.rel target = $region47
            $region46: #{net_forward.5} parent=31 // pred_region
              _
            $region47: #{net_forward.5} parent=31 // pred_fallthru
              _
          $region32: #{net_forward.5} parent=27 // pred_fallthru
            _
          %176 = vnop
        $region28: #{net_forward.5} parent=23 // pred_fallthru
          _
      $region24: #{net_forward.5} parent=5 // pred_fallthru
        _
      %p177 = scmp.le.s32.totalorder 1, %s9
      %p178 = scmp.lt.s32.totalorder %s9, 4
      %p179 = pnand %p177, %p178
      %p180 = pneg %p179
      // Predicated region
      $region48: #{net_forward.5} parent=5 // pred_check
        _
      $region49: #{net_forward.5} parent=5 // pred_check_branch
        %182 = sbr.rel (%p179) target = $region51
      $region50: #{net_forward.5} parent=5 // pred_region
        %s183 = ssub.s32 %s9, 1
        %s184 = sand.u32 %s22, 1
        %s185 = sand.u32 %s22, 1
        %s186 = smul.addr %s185, 96
        %s187 = scalar_lea.vmem [#allocation2], %s186
        // Predicated region
        $region52: #{net_forward.5} parent=50 // pred_check
          %p188 = pneg %p35
        $region53: #{net_forward.5} parent=50 // pred_check_branch
          %190 = sbr.rel (%p188) target = $region55
        $region54: #{net_forward.5} parent=50 // pred_region
          _
        $region55: #{net_forward.5} parent=50 // pred_fallthru
          _
        %s191 = sand.u32 %s22, 1
        %s192 = sand.u32 %s22, 1
        %s193 = smul.addr %s192, 96
        %s194 = scalar_lea.vmem [#allocation2], %s193
        %p195 = pneg %p35
        %p196 = pneg %p32
        %p197 = pneg %p56
        %p198 = pneg %p53
        %p199 = pneg %p77
        %p200 = pneg %p74
        %p201 = pneg %p103
        %p202 = pneg %p100
        %s203 = sand.u32 %s90, 1
        %s204 = sand.u32 %s90, 1
        %s205 = smul.addr %s204, 192
        %s206 = scalar_lea.vmem [#allocation3], %s205
        %s207 = smul.u32 3, %s14
        %s208 = smul.u32 3, %s14
        %v209 = vld [vmem:[%s187] sm:$0xff]
        %v210 = vld [vmem:[%s187 + $0x8] sm:$0xff]
        %v211 = vld [vmem:[%s187 + $0x10] sm:$0xff]
        %v212 = vld [vmem:[%s187 + $0x18] sm:$0xff]
        %v213 = vld [vmem:[%s187 + $0x20] sm:$0xff]
        %v214 = vld [vmem:[%s187 + $0x28] sm:$0xff]
        %v215 = vld [vmem:[%s187 + $0x30] sm:$0xff]
        %v216 = vld [vmem:[%s187 + $0x38] sm:$0xff]
        %v217 = vld [vmem:[%s187 + $0x40] sm:$0xff]
        %v218 = vld [vmem:[%s187 + $0x48] sm:$0x1]
        %v219 = vld [vmem:[%s187 + $0x50] sm:$0x1]
        %v220 = vld [vmem:[%s187 + $0x58] sm:$0x1]
        %v221 = vadd.f32 %v209, %v212
        %v222 = vadd.f32 %v221, %v215
        %vm223 = vcmask 1040384
        %v224 = vsel %vm223, %v218, 0.0
        %v225 = vadd.f32 %v222, %v224
        %v226 = vrot.slane %v225, 4
        %v227 = vadd.f32 %v225, %v226
        %v228 = vrot.slane %v227, 2
        %v229 = vadd.f32 %v227, %v228
        %v230 = vrot.slane %v229, 1
        %v231 = vadd.f32 %v229, %v230
        %v232 = vadd.f32 %v210, %v213
        %v233 = vadd.f32 %v232, %v216
        %v234 = vsel %vm223, %v219, 0.0
        %v235 = vadd.f32 %v233, %v234
        %v236 = vrot.slane %v235, 4
        %v237 = vadd.f32 %v235, %v236
        %v238 = vrot.slane %v237, 2
        %v239 = vadd.f32 %v237, %v238
        %v240 = vrot.slane %v239, 1
        %v241 = vadd.f32 %v239, %v240
        %v242 = vadd.f32 %v211, %v214
        %v243 = vadd.f32 %v242, %v217
        %v244 = vsel %vm223, %v220, 0.0
        %v245 = vadd.f32 %v243, %v244
        %v246 = vrot.slane %v245, 4
        %v247 = vadd.f32 %v245, %v246
        %v248 = vrot.slane %v247, 2
        %v249 = vadd.f32 %v247, %v248
        %v250 = vrot.slane %v249, 1
        %v251 = vadd.f32 %v249, %v250
        %v252 = vrcp.pop 25.0
        %v253 = vmul.f32 %v231, %v252
        %v254 = vmul.f32 %v241, %v252
        %v255 = vmul.f32 %v251, %v252
        %v256 = vsub.f32 %v209, %v253
        %v257 = vsub.f32 %v210, %v254
        %v258 = vsub.f32 %v211, %v255
        %v259 = vsub.f32 %v212, %v253
        %v260 = vsub.f32 %v213, %v254
        %v261 = vsub.f32 %v214, %v255
        %v262 = vsub.f32 %v215, %v253
        %v263 = vsub.f32 %v216, %v254
        %v264 = vsub.f32 %v217, %v255
        %v265 = vsub.f32 %v218, %v253
        %v266 = vsub.f32 %v219, %v254
        %v267 = vsub.f32 %v220, %v255
        %v268 = vmul.f32 %v256, %v256
        %v269 = vmul.f32 %v257, %v257
        %v270 = vmul.f32 %v258, %v258
        %v271 = vmul.f32 %v259, %v259
        %v272 = vmul.f32 %v260, %v260
        %v273 = vmul.f32 %v261, %v261
        %v274 = vmul.f32 %v262, %v262
        %v275 = vmul.f32 %v263, %v263
        %v276 = vmul.f32 %v264, %v264
        %v277 = vmul.f32 %v265, %v265
        %v278 = vmul.f32 %v266, %v266
        %v279 = vmul.f32 %v267, %v267
        %v280 = vadd.f32 %v268, %v271
        %v281 = vadd.f32 %v280, %v274
        %v282 = vsel %vm223, %v277, 0.0
        %v283 = vadd.f32 %v281, %v282
        %v284 = vrot.slane %v283, 4
        %v285 = vadd.f32 %v283, %v284
        %v286 = vrot.slane %v285, 2
        %v287 = vadd.f32 %v285, %v286
        %v288 = vrot.slane %v287, 1
        %v289 = vadd.f32 %v287, %v288
        %v290 = vadd.f32 %v269, %v272
        %v291 = vadd.f32 %v290, %v275
        %v292 = vsel %vm223, %v278, 0.0
        %v293 = vadd.f32 %v291, %v292
        %v294 = vrot.slane %v293, 4
        %v295 = vadd.f32 %v293, %v294
        %v296 = vrot.slane %v295, 2
        %v297 = vadd.f32 %v295, %v296
        %v298 = vrot.slane %v297, 1
        %v299 = vadd.f32 %v297, %v298
        %v300 = vadd.f32 %v270, %v273
        %v301 = vadd.f32 %v300, %v276
        %v302 = vsel %vm223, %v279, 0.0
        %v303 = vadd.f32 %v301, %v302
        %v304 = vrot.slane %v303, 4
        %v305 = vadd.f32 %v303, %v304
        %v306 = vrot.slane %v305, 2
        %v307 = vadd.f32 %v305, %v306
        %v308 = vrot.slane %v307, 1
        %v309 = vadd.f32 %v307, %v308
        %v310 = vmul.f32 %v289, 0.041666668
        %v311 = vmul.f32 %v299, 0.041666668
        %v312 = vmul.f32 %v309, 0.041666668
        %v313 = vrsqrt.pop %v310
        %v314 = vrsqrt.pop %v311
        %v315 = vrsqrt.pop %v312
        %v316 = vmul.f32 %v209, %v313
        %v317 = vmul.f32 %v210, %v314
        %v318 = vmul.f32 %v211, %v315
        %v319 = vmul.f32 %v212, %v313
        %v320 = vmul.f32 %v213, %v314
        %v321 = vmul.f32 %v214, %v315
        %v322 = vmul.f32 %v215, %v313
        %v323 = vmul.f32 %v216, %v314
        %v324 = vmul.f32 %v217, %v315
        %v325 = vmul.f32 %v218, %v313
        %v326 = vmul.f32 %v219, %v314
        %v327 = vmul.f32 %v220, %v315
        %v328 = vmul.f32 %v316, %v316
        %v329 = vmul.f32 %v317, %v317
        %v330 = vmul.f32 %v318, %v318
        %v331 = vmul.f32 %v319, %v319
        %v332 = vmul.f32 %v320, %v320
        %v333 = vmul.f32 %v321, %v321
        %v334 = vmul.f32 %v322, %v322
        %v335 = vmul.f32 %v323, %v323
        %v336 = vmul.f32 %v324, %v324
        %v337 = vmul.f32 %v325, %v325
        %v338 = vmul.f32 %v326, %v326
        %v339 = vmul.f32 %v327, %v327
        %v340 = vadd.f32 %v328, %v331
        %v341 = vadd.f32 %v340, %v334
        %v342 = vsel %vm223, %v337, 0.0
        %v343 = vadd.f32 %v341, %v342
        %v344 = vrot.slane %v343, 4
        %v345 = vadd.f32 %v343, %v344
        %v346 = vrot.slane %v345, 2
        %v347 = vadd.f32 %v345, %v346
        %v348 = vrot.slane %v347, 1
        %v349 = vadd.f32 %v347, %v348
        %v350 = vadd.f32 %v329, %v332
        %v351 = vadd.f32 %v350, %v335
        %v352 = vsel %vm223, %v338, 0.0
        %v353 = vadd.f32 %v351, %v352
        %v354 = vrot.slane %v353, 4
        %v355 = vadd.f32 %v353, %v354
        %v356 = vrot.slane %v355, 2
        %v357 = vadd.f32 %v355, %v356
        %v358 = vrot.slane %v357, 1
        %v359 = vadd.f32 %v357, %v358
        %v360 = vadd.f32 %v330, %v333
        %v361 = vadd.f32 %v360, %v336
        %v362 = vsel %vm223, %v339, 0.0
        %v363 = vadd.f32 %v361, %v362
        %v364 = vrot.slane %v363, 4
        %v365 = vadd.f32 %v363, %v364
        %v366 = vrot.slane %v365, 2
        %v367 = vadd.f32 %v365, %v366
        %v368 = vrot.slane %v367, 1
        %v369 = vadd.f32 %v367, %v368
        %v370 = vld [vmem:[%s1] sm:$0xff]
        %v371 = vld [vmem:[%s1 + $0x8] sm:$0xff]
        %v372 = vld [vmem:[%s1 + $0x10] sm:$0xff]
        %v373 = vld [vmem:[%s1 + $0x18] sm:$0xff]
        %v374 = vld [vmem:[%s1 + $0x20] sm:$0xff]
        %v375 = vld [vmem:[%s1 + $0x28] sm:$0xff]
        %v376 = vld [vmem:[%s1 + $0x30] sm:$0xff]
        %v377 = vld [vmem:[%s1 + $0x38] sm:$0xff]
        %v378 = vld [vmem:[%s1 + $0x40] sm:$0xff]
        %v379 = vld [vmem:[%s1 + $0x48] sm:$0xff]
        %v380 = vld [vmem:[%s1 + $0x50] sm:$0xff]
        %v381 = vld [vmem:[%s1 + $0x58] sm:$0xff]
        %v382 = vld [vmem:[%s1 + $0x60] sm:$0xff]
        %v383 = vld [vmem:[%s1 + $0x68] sm:$0xff]
        %v384 = vld [vmem:[%s1 + $0x70] sm:$0xff]
        %v385 = vld [vmem:[%s1 + $0x78] sm:$0xff]
        %v386 = vld [vmem:[%s1 + $0x80] sm:$0xff]
        %v387 = vld [vmem:[%s1 + $0x88] sm:$0xff]
        %v388 = vld [vmem:[%s1 + $0x90] sm:$0xff]
        %v389 = vld [vmem:[%s1 + $0x98] sm:$0xff]
        %v390 = vld [vmem:[%s1 + $0xa0] sm:$0xff]
        %v391 = vld [vmem:[%s1 + $0xa8] sm:$0xff]
        %v392 = vld [vmem:[%s1 + $0xb0] sm:$0xff]
        %v393 = vld [vmem:[%s1 + $0xb8] sm:$0xff]
        %v394 = vld [vmem:[%s1 + $0xc0] sm:$0xff]
        %v395 = vld [vmem:[%s1 + $0xc8] sm:$0xff]
        %v396 = vld [vmem:[%s1 + $0xd0] sm:$0xff]
        %v397 = vld [vmem:[%s1 + $0xd8] sm:$0xff]
        %v398 = vld [vmem:[%s1 + $0xe0] sm:$0xff]
        %v399 = vld [vmem:[%s1 + $0xe8] sm:$0xff]
        %v400 = vld [vmem:[%s1 + $0xf0] sm:$0xff]
        %v401 = vld [vmem:[%s1 + $0xf8] sm:$0xff]
        %vm402 = vcmask 203776
        %v404 = vsel %vm402, %v370, 0
        %v407 = vsel %vm402, %v371, 0
        %v410 = vsel %vm402, %v372, 0
        %v413 = vsel %vm402, %v373, 0
        %v416 = vsel %vm402, %v374, 0
        %v419 = vsel %vm402, %v375, 0
        %v422 = vsel %vm402, %v376, 0
        %v425 = vsel %vm402, %v377, 0
        %v428 = vsel %vm402, %v378, 0
        %v431 = vsel %vm402, %v379, 0
        %v434 = vsel %vm402, %v380, 0
        %v437 = vsel %vm402, %v381, 0
        %v440 = vsel %vm402, %v382, 0
        %v443 = vsel %vm402, %v383, 0
        %v446 = vsel %vm402, %v384, 0
        %v449 = vsel %vm402, %v385, 0
        %v452 = vsel %vm402, %v386, 0
        %v455 = vsel %vm402, %v387, 0
        %v458 = vsel %vm402, %v388, 0
        %v461 = vsel %vm402, %v389, 0
        %v464 = vsel %vm402, %v390, 0
        %v467 = vsel %vm402, %v391, 0
        %v470 = vsel %vm402, %v392, 0
        %v473 = vsel %vm402, %v393, 0
        %v476 = vsel %vm402, %v394, 0
        %v479 = vsel %vm402, %v395, 0
        %v482 = vsel %vm402, %v396, 0
        %v485 = vsel %vm402, %v397, 0
        %v488 = vsel %vm402, %v398, 0
        %v491 = vsel %vm402, %v399, 0
        %v494 = vsel %vm402, %v400, 0
        %v497 = vsel %vm402, %v401, 0
        %v500 = vsel %vm223, %v325, 0
        %v503 = vsel %vm223, %v326, 0
        %v506 = vsel %vm223, %v327, 0
        %508 = vmatprep.subr.mxu0 0.0
        %509 = vmatpush1.msra.mxu0 0.0
        %510 = vmatprep.subr.mxu0 0.0
        %511 = vmatpush1.msra.mxu0 0.0
        %512 = vmatprep.subr.mxu0 0.0
        %513 = vmatpush1.msra.mxu0 0.0
        %514 = vmatprep.subr.mxu0 0.0
        %515 = vmatpush1.msra.mxu0 0.0
        %516 = vmatprep.subr.mxu0 0.0
        %517 = vmatpush1.msra.mxu0 0.0
        %518 = vmatprep.subr.mxu0 0.0
        %519 = vmatpush1.msra.mxu0 0.0
        %520 = vmatprep.subr.mxu0 0.0
        %521 = vmatpush1.msra.mxu0 0.0
        %522 = vmatprep.subr.mxu0 0.0
        %523 = vmatpush1.msra.mxu0 0.0
        %524 = vmatprep.subr.mxu0 0.0
        %525 = vmatpush1.msra.mxu0 0.0
        %526 = vmatprep.subr.mxu0 0.0
        %527 = vmatpush1.msra.mxu0 0.0
        %528 = vmatprep.subr.mxu0 0.0
        %529 = vmatpush1.msra.mxu0 0.0
        %530 = vmatprep.subr.mxu0 0.0
        %531 = vmatpush1.msra.mxu0 0.0
        %532 = vmatprep.subr.mxu0 %v503
        %533 = vmatpush1.msra.mxu0 %v500
        %534 = vmatprep.subr.mxu0 %v323
        %535 = vmatpush1.msra.mxu0 %v322
        %536 = vmatprep.subr.mxu0 %v320
        %537 = vmatpush1.msra.mxu0 %v319
        %538 = vmatprep.subr.mxu0 %v317
        %539 = vmatpush1.msra.mxu0 %v316
        %540 = vmatprep.subr.mxu0 0.0
        %541 = vmatpush2.msra.mxu0 0.0
        %542 = vmatprep.subr.mxu0 0.0
        %543 = vmatpush2.msra.mxu0 0.0
        %544 = vmatprep.subr.mxu0 0.0
        %545 = vmatpush2.msra.mxu0 0.0
        %546 = vmatprep.subr.mxu0 0.0
        %547 = vmatpush2.msra.mxu0 0.0
        %548 = vmatprep.subr.mxu0 0.0
        %549 = vmatpush2.msra.mxu0 0.0
        %550 = vmatprep.subr.mxu0 0.0
        %551 = vmatpush2.msra.mxu0 0.0
        %552 = vmatprep.subr.mxu0 0.0
        %553 = vmatpush2.msra.mxu0 0.0
        %554 = vmatprep.subr.mxu0 0.0
        %555 = vmatpush2.msra.mxu0 0.0
        %556 = vmatprep.subr.mxu0 0.0
        %557 = vmatpush2.msra.mxu0 0.0
        %558 = vmatprep.subr.mxu0 0.0
        %559 = vmatpush2.msra.mxu0 0.0
        %560 = vmatprep.subr.mxu0 0.0
        %561 = vmatpush2.msra.mxu0 0.0
        %562 = vmatprep.subr.mxu0 0.0
        %563 = vmatpush2.msra.mxu0 0.0
        %564 = vmatprep.subr.mxu0 0.0
        %565 = vmatpush2.msra.mxu0 0.0
        %566 = vmatprep.subr.mxu0 0.0
        %567 = vmatpush2.msra.mxu0 0.0
        %568 = vmatprep.subr.mxu0 0.0
        %569 = vmatpush2.msra.mxu0 0.0
        %570 = vmatprep.subr.mxu0 0.0
        %571 = vmatpush2.msra.mxu0 0.0
        %572 = vmatprep.mubr.f32.mxu0 0.0
        %573 = vmatmul.mubr.f32.gmra.mxu0 %v404
        %v574 = vpop.f32.mrf.mxu0
        %v575 = vadd.f32 0.0, %v574
        %v576 = vpop.f32.mrf.mxu0
        %v577 = vadd.f32 0.0, %v576
        %578 = vmatprep.mubr.f32.mxu0 0.0
        %579 = vmatmul.mubr.f32.gmra.mxu0 %v407
        %v580 = vpop.f32.mrf.mxu0
        %v581 = vadd.f32 0.0, %v580
        %v582 = vpop.f32.mrf.mxu0
        %v583 = vadd.f32 0.0, %v582
        %584 = vmatprep.mubr.f32.mxu0 0.0
        %585 = vmatmul.mubr.f32.gmra.mxu0 %v410
        %v586 = vpop.f32.mrf.mxu0
        %v587 = vadd.f32 0.0, %v586
        %v588 = vpop.f32.mrf.mxu0
        %v589 = vadd.f32 0.0, %v588
        %590 = vmatprep.mubr.f32.mxu0 0.0
        %591 = vmatmul.mubr.f32.gmra.mxu0 %v413
        %v592 = vpop.f32.mrf.mxu0
        %v593 = vadd.f32 0.0, %v592
        %v594 = vpop.f32.mrf.mxu0
        %v595 = vadd.f32 0.0, %v594
        %596 = vmatprep.mubr.f32.mxu0 0.0
        %597 = vmatmul.mubr.f32.gmra.mxu0 %v416
        %v598 = vpop.f32.mrf.mxu0
        %v599 = vadd.f32 0.0, %v598
        %v600 = vpop.f32.mrf.mxu0
        %v601 = vadd.f32 0.0, %v600
        %602 = vmatprep.mubr.f32.mxu0 0.0
        %603 = vmatmul.mubr.f32.gmra.mxu0 %v419
        %v604 = vpop.f32.mrf.mxu0
        %v605 = vadd.f32 0.0, %v604
        %v606 = vpop.f32.mrf.mxu0
        %v607 = vadd.f32 0.0, %v606
        %608 = vmatprep.mubr.f32.mxu0 0.0
        %609 = vmatmul.mubr.f32.gmra.mxu0 %v422
        %v610 = vpop.f32.mrf.mxu0
        %v611 = vadd.f32 0.0, %v610
        %v612 = vpop.f32.mrf.mxu0
        %v613 = vadd.f32 0.0, %v612
        %614 = vmatprep.mubr.f32.mxu0 0.0
        %615 = vmatmul.mubr.f32.gmra.mxu0 %v425
        %v616 = vpop.f32.mrf.mxu0
        %v617 = vadd.f32 0.0, %v616
        %v618 = vpop.f32.mrf.mxu0
        %v619 = vadd.f32 0.0, %v618
        %620 = vmatprep.mubr.f32.mxu0 0.0
        %621 = vmatmul.mubr.f32.gmra.mxu0 %v428
        %v622 = vpop.f32.mrf.mxu0
        %v623 = vadd.f32 0.0, %v622
        %v624 = vpop.f32.mrf.mxu0
        %v625 = vadd.f32 0.0, %v624
        %626 = vmatprep.mubr.f32.mxu0 0.0
        %627 = vmatmul.mubr.f32.gmra.mxu0 %v431
        %v628 = vpop.f32.mrf.mxu0
        %v629 = vadd.f32 0.0, %v628
        %v630 = vpop.f32.mrf.mxu0
        %v631 = vadd.f32 0.0, %v630
        %632 = vmatprep.mubr.f32.mxu0 0.0
        %633 = vmatmul.mubr.f32.gmra.mxu0 %v434
        %v634 = vpop.f32.mrf.mxu0
        %v635 = vadd.f32 0.0, %v634
        %v636 = vpop.f32.mrf.mxu0
        %v637 = vadd.f32 0.0, %v636
        %638 = vmatprep.mubr.f32.mxu0 0.0
        %639 = vmatmul.mubr.f32.gmra.mxu0 %v437
        %v640 = vpop.f32.mrf.mxu0
        %v641 = vadd.f32 0.0, %v640
        %v642 = vpop.f32.mrf.mxu0
        %v643 = vadd.f32 0.0, %v642
        %644 = vmatprep.mubr.f32.mxu0 0.0
        %645 = vmatmul.mubr.f32.gmra.mxu0 %v440
        %v646 = vpop.f32.mrf.mxu0
        %v647 = vadd.f32 0.0, %v646
        %v648 = vpop.f32.mrf.mxu0
        %v649 = vadd.f32 0.0, %v648
        %650 = vmatprep.mubr.f32.mxu0 0.0
        %651 = vmatmul.mubr.f32.gmra.mxu0 %v443
        %v652 = vpop.f32.mrf.mxu0
        %v653 = vadd.f32 0.0, %v652
        %v654 = vpop.f32.mrf.mxu0
        %v655 = vadd.f32 0.0, %v654
        %656 = vmatprep.mubr.f32.mxu0 0.0
        %657 = vmatmul.mubr.f32.gmra.mxu0 %v446
        %v658 = vpop.f32.mrf.mxu0
        %v659 = vadd.f32 0.0, %v658
        %v660 = vpop.f32.mrf.mxu0
        %v661 = vadd.f32 0.0, %v660
        %662 = vmatprep.mubr.f32.mxu0 0.0
        %663 = vmatmul.mubr.f32.gmra.mxu0 %v449
        %v664 = vpop.f32.mrf.mxu0
        %v665 = vadd.f32 0.0, %v664
        %v666 = vpop.f32.mrf.mxu0
        %v667 = vadd.f32 0.0, %v666
        %668 = vmatprep.mubr.f32.mxu0 0.0
        %669 = vmatmul.mubr.f32.gmra.mxu0 %v452
        %v670 = vpop.f32.mrf.mxu0
        %v671 = vadd.f32 0.0, %v670
        %v672 = vpop.f32.mrf.mxu0
        %v673 = vadd.f32 0.0, %v672
        %674 = vmatprep.mubr.f32.mxu0 0.0
        %675 = vmatmul.mubr.f32.gmra.mxu0 %v455
        %v676 = vpop.f32.mrf.mxu0
        %v677 = vadd.f32 0.0, %v676
        %v678 = vpop.f32.mrf.mxu0
        %v679 = vadd.f32 0.0, %v678
        %680 = vmatprep.mubr.f32.mxu0 0.0
        %681 = vmatmul.mubr.f32.gmra.mxu0 %v458
        %v682 = vpop.f32.mrf.mxu0
        %v683 = vadd.f32 0.0, %v682
        %v684 = vpop.f32.mrf.mxu0
        %v685 = vadd.f32 0.0, %v684
        %686 = vmatprep.mubr.f32.mxu0 0.0
        %687 = vmatmul.mubr.f32.gmra.mxu0 %v461
        %v688 = vpop.f32.mrf.mxu0
        %v689 = vadd.f32 0.0, %v688
        %v690 = vpop.f32.mrf.mxu0
        %v691 = vadd.f32 0.0, %v690
        %692 = vmatprep.mubr.f32.mxu0 0.0
        %693 = vmatmul.mubr.f32.gmra.mxu0 %v464
        %v694 = vpop.f32.mrf.mxu0
        %v695 = vadd.f32 0.0, %v694
        %v696 = vpop.f32.mrf.mxu0
        %v697 = vadd.f32 0.0, %v696
        %698 = vmatprep.mubr.f32.mxu0 0.0
        %699 = vmatmul.mubr.f32.gmra.mxu0 %v467
        %v700 = vpop.f32.mrf.mxu0
        %v701 = vadd.f32 0.0, %v700
        %v702 = vpop.f32.mrf.mxu0
        %v703 = vadd.f32 0.0, %v702
        %704 = vmatprep.mubr.f32.mxu0 0.0
        %705 = vmatmul.mubr.f32.gmra.mxu0 %v470
        %v706 = vpop.f32.mrf.mxu0
        %v707 = vadd.f32 0.0, %v706
        %v708 = vpop.f32.mrf.mxu0
        %v709 = vadd.f32 0.0, %v708
        %710 = vmatprep.mubr.f32.mxu0 0.0
        %711 = vmatmul.mubr.f32.gmra.mxu0 %v473
        %v712 = vpop.f32.mrf.mxu0
        %v713 = vadd.f32 0.0, %v712
        %v714 = vpop.f32.mrf.mxu0
        %v715 = vadd.f32 0.0, %v714
        %716 = vmatprep.mubr.f32.mxu0 0.0
        %717 = vmatmul.mubr.f32.gmra.mxu0 %v476
        %v718 = vpop.f32.mrf.mxu0
        %v719 = vadd.f32 0.0, %v718
        %v720 = vpop.f32.mrf.mxu0
        %v721 = vadd.f32 0.0, %v720
        %722 = vmatprep.mubr.f32.mxu0 0.0
        %723 = vmatmul.mubr.f32.gmra.mxu0 %v479
        %v724 = vpop.f32.mrf.mxu0
        %v725 = vadd.f32 0.0, %v724
        %v726 = vpop.f32.mrf.mxu0
        %v727 = vadd.f32 0.0, %v726
        %728 = vmatprep.mubr.f32.mxu0 0.0
        %729 = vmatmul.mubr.f32.gmra.mxu0 %v482
        %v730 = vpop.f32.mrf.mxu0
        %v731 = vadd.f32 0.0, %v730
        %v732 = vpop.f32.mrf.mxu0
        %v733 = vadd.f32 0.0, %v732
        %734 = vmatprep.mubr.f32.mxu0 0.0
        %735 = vmatmul.mubr.f32.gmra.mxu0 %v485
        %v736 = vpop.f32.mrf.mxu0
        %v737 = vadd.f32 0.0, %v736
        %v738 = vpop.f32.mrf.mxu0
        %v739 = vadd.f32 0.0, %v738
        %740 = vmatprep.mubr.f32.mxu0 0.0
        %741 = vmatmul.mubr.f32.gmra.mxu0 %v488
        %v742 = vpop.f32.mrf.mxu0
        %v743 = vadd.f32 0.0, %v742
        %v744 = vpop.f32.mrf.mxu0
        %v745 = vadd.f32 0.0, %v744
        %746 = vmatprep.mubr.f32.mxu0 0.0
        %747 = vmatmul.mubr.f32.gmra.mxu0 %v491
        %v748 = vpop.f32.mrf.mxu0
        %v749 = vadd.f32 0.0, %v748
        %v750 = vpop.f32.mrf.mxu0
        %v751 = vadd.f32 0.0, %v750
        %752 = vmatprep.mubr.f32.mxu0 0.0
        %753 = vmatmul.mubr.f32.gmra.mxu0 %v494
        %v754 = vpop.f32.mrf.mxu0
        %v755 = vadd.f32 0.0, %v754
        %v756 = vpop.f32.mrf.mxu0
        %v757 = vadd.f32 0.0, %v756
        %758 = vmatprep.mubr.f32.mxu0 0.0
        %759 = vmatmul.mubr.f32.gmra.mxu0 %v497
        %v760 = vpop.f32.mrf.mxu0
        %v761 = vadd.f32 0.0, %v760
        %v762 = vpop.f32.mrf.mxu0
        %v763 = vadd.f32 0.0, %v762
        %764 = vdwg.mxu0
        %765 = vmatprep.subr.mxu0 0.0
        %766 = vmatpush1.msra.mxu0 0.0
        %767 = vmatprep.subr.mxu0 0.0
        %768 = vmatpush1.msra.mxu0 0.0
        %769 = vmatprep.subr.mxu0 0.0
        %770 = vmatpush1.msra.mxu0 0.0
        %771 = vmatprep.subr.mxu0 0.0
        %772 = vmatpush1.msra.mxu0 0.0
        %773 = vmatprep.subr.mxu0 0.0
        %774 = vmatpush1.msra.mxu0 0.0
        %775 = vmatprep.subr.mxu0 0.0
        %776 = vmatpush1.msra.mxu0 0.0
        %777 = vmatprep.subr.mxu0 0.0
        %778 = vmatpush1.msra.mxu0 0.0
        %779 = vmatprep.subr.mxu0 0.0
        %780 = vmatpush1.msra.mxu0 0.0
        %781 = vmatprep.subr.mxu0 0.0
        %782 = vmatpush1.msra.mxu0 0.0
        %783 = vmatprep.subr.mxu0 0.0
        %784 = vmatpush1.msra.mxu0 0.0
        %785 = vmatprep.subr.mxu0 0.0
        %786 = vmatpush1.msra.mxu0 0.0
        %787 = vmatprep.subr.mxu0 0.0
        %788 = vmatpush1.msra.mxu0 0.0
        %789 = vmatprep.subr.mxu0 0.0
        %790 = vmatpush1.msra.mxu0 %v506
        %791 = vmatprep.subr.mxu0 0.0
        %792 = vmatpush1.msra.mxu0 %v324
        %793 = vmatprep.subr.mxu0 0.0
        %794 = vmatpush1.msra.mxu0 %v321
        %795 = vmatprep.subr.mxu0 0.0
        %796 = vmatpush1.msra.mxu0 %v318
        %797 = vmatprep.subr.mxu0 0.0
        %798 = vmatpush2.msra.mxu0 0.0
        %799 = vmatprep.subr.mxu0 0.0
        %800 = vmatpush2.msra.mxu0 0.0
        %801 = vmatprep.subr.mxu0 0.0
        %802 = vmatpush2.msra.mxu0 0.0
        %803 = vmatprep.subr.mxu0 0.0
        %804 = vmatpush2.msra.mxu0 0.0
        %805 = vmatprep.subr.mxu0 0.0
        %806 = vmatpush2.msra.mxu0 0.0
        %807 = vmatprep.subr.mxu0 0.0
        %808 = vmatpush2.msra.mxu0 0.0
        %809 = vmatprep.subr.mxu0 0.0
        %810 = vmatpush2.msra.mxu0 0.0
        %811 = vmatprep.subr.mxu0 0.0
        %812 = vmatpush2.msra.mxu0 0.0
        %813 = vmatprep.subr.mxu0 0.0
        %814 = vmatpush2.msra.mxu0 0.0
        %815 = vmatprep.subr.mxu0 0.0
        %816 = vmatpush2.msra.mxu0 0.0
        %817 = vmatprep.subr.mxu0 0.0
        %818 = vmatpush2.msra.mxu0 0.0
        %819 = vmatprep.subr.mxu0 0.0
        %820 = vmatpush2.msra.mxu0 0.0
        %821 = vmatprep.subr.mxu0 0.0
        %822 = vmatpush2.msra.mxu0 0.0
        %823 = vmatprep.subr.mxu0 0.0
        %824 = vmatpush2.msra.mxu0 0.0
        %825 = vmatprep.subr.mxu0 0.0
        %826 = vmatpush2.msra.mxu0 0.0
        %827 = vmatprep.subr.mxu0 0.0
        %828 = vmatpush2.msra.mxu0 0.0
        %829 = vmatprep.mubr.f32.mxu0 0.0
        %830 = vmatmul.mubr.f32.gmra.mxu0 %v404
        %v831 = vpop.f32.mrf.mxu0
        %v832 = vadd.f32 0.0, %v831
        %v833 = vpop.f32.mrf.mxu0
        %834 = vmatprep.mubr.f32.mxu0 0.0
        %835 = vmatmul.mubr.f32.gmra.mxu0 %v407
        %v836 = vpop.f32.mrf.mxu0
        %v837 = vadd.f32 0.0, %v836
        %v838 = vpop.f32.mrf.mxu0
        %839 = vmatprep.mubr.f32.mxu0 0.0
        %840 = vmatmul.mubr.f32.gmra.mxu0 %v410
        %v841 = vpop.f32.mrf.mxu0
        %v842 = vadd.f32 0.0, %v841
        %v843 = vpop.f32.mrf.mxu0
        %844 = vmatprep.mubr.f32.mxu0 0.0
        %845 = vmatmul.mubr.f32.gmra.mxu0 %v413
        %v846 = vpop.f32.mrf.mxu0
        %v847 = vadd.f32 0.0, %v846
        %v848 = vpop.f32.mrf.mxu0
        %849 = vmatprep.mubr.f32.mxu0 0.0
        %850 = vmatmul.mubr.f32.gmra.mxu0 %v416
        %v851 = vpop.f32.mrf.mxu0
        %v852 = vadd.f32 0.0, %v851
        %v853 = vpop.f32.mrf.mxu0
        %854 = vmatprep.mubr.f32.mxu0 0.0
        %855 = vmatmul.mubr.f32.gmra.mxu0 %v419
        %v856 = vpop.f32.mrf.mxu0
        %v857 = vadd.f32 0.0, %v856
        %v858 = vpop.f32.mrf.mxu0
        %859 = vmatprep.mubr.f32.mxu0 0.0
        %860 = vmatmul.mubr.f32.gmra.mxu0 %v422
        %v861 = vpop.f32.mrf.mxu0
        %v862 = vadd.f32 0.0, %v861
        %v863 = vpop.f32.mrf.mxu0
        %864 = vmatprep.mubr.f32.mxu0 0.0
        %865 = vmatmul.mubr.f32.gmra.mxu0 %v425
        %v866 = vpop.f32.mrf.mxu0
        %v867 = vadd.f32 0.0, %v866
        %v868 = vpop.f32.mrf.mxu0
        %869 = vmatprep.mubr.f32.mxu0 0.0
        %870 = vmatmul.mubr.f32.gmra.mxu0 %v428
        %v871 = vpop.f32.mrf.mxu0
        %v872 = vadd.f32 0.0, %v871
        %v873 = vpop.f32.mrf.mxu0
        %874 = vmatprep.mubr.f32.mxu0 0.0
        %875 = vmatmul.mubr.f32.gmra.mxu0 %v431
        %v876 = vpop.f32.mrf.mxu0
        %v877 = vadd.f32 0.0, %v876
        %v878 = vpop.f32.mrf.mxu0
        %879 = vmatprep.mubr.f32.mxu0 0.0
        %880 = vmatmul.mubr.f32.gmra.mxu0 %v434
        %v881 = vpop.f32.mrf.mxu0
        %v882 = vadd.f32 0.0, %v881
        %v883 = vpop.f32.mrf.mxu0
        %884 = vmatprep.mubr.f32.mxu0 0.0
        %885 = vmatmul.mubr.f32.gmra.mxu0 %v437
        %v886 = vpop.f32.mrf.mxu0
        %v887 = vadd.f32 0.0, %v886
        %v888 = vpop.f32.mrf.mxu0
        %889 = vmatprep.mubr.f32.mxu0 0.0
        %890 = vmatmul.mubr.f32.gmra.mxu0 %v440
        %v891 = vpop.f32.mrf.mxu0
        %v892 = vadd.f32 0.0, %v891
        %v893 = vpop.f32.mrf.mxu0
        %894 = vmatprep.mubr.f32.mxu0 0.0
        %895 = vmatmul.mubr.f32.gmra.mxu0 %v443
        %v896 = vpop.f32.mrf.mxu0
        %v897 = vadd.f32 0.0, %v896
        %v898 = vpop.f32.mrf.mxu0
        %899 = vmatprep.mubr.f32.mxu0 0.0
        %900 = vmatmul.mubr.f32.gmra.mxu0 %v446
        %v901 = vpop.f32.mrf.mxu0
        %v902 = vadd.f32 0.0, %v901
        %v903 = vpop.f32.mrf.mxu0
        %904 = vmatprep.mubr.f32.mxu0 0.0
        %905 = vmatmul.mubr.f32.gmra.mxu0 %v449
        %v906 = vpop.f32.mrf.mxu0
        %v907 = vadd.f32 0.0, %v906
        %v908 = vpop.f32.mrf.mxu0
        %909 = vmatprep.mubr.f32.mxu0 0.0
        %910 = vmatmul.mubr.f32.gmra.mxu0 %v452
        %v911 = vpop.f32.mrf.mxu0
        %v912 = vadd.f32 0.0, %v911
        %v913 = vpop.f32.mrf.mxu0
        %914 = vmatprep.mubr.f32.mxu0 0.0
        %915 = vmatmul.mubr.f32.gmra.mxu0 %v455
        %v916 = vpop.f32.mrf.mxu0
        %v917 = vadd.f32 0.0, %v916
        %v918 = vpop.f32.mrf.mxu0
        %919 = vmatprep.mubr.f32.mxu0 0.0
        %920 = vmatmul.mubr.f32.gmra.mxu0 %v458
        %v921 = vpop.f32.mrf.mxu0
        %v922 = vadd.f32 0.0, %v921
        %v923 = vpop.f32.mrf.mxu0
        %924 = vmatprep.mubr.f32.mxu0 0.0
        %925 = vmatmul.mubr.f32.gmra.mxu0 %v461
        %v926 = vpop.f32.mrf.mxu0
        %v927 = vadd.f32 0.0, %v926
        %v928 = vpop.f32.mrf.mxu0
        %929 = vmatprep.mubr.f32.mxu0 0.0
        %930 = vmatmul.mubr.f32.gmra.mxu0 %v464
        %v931 = vpop.f32.mrf.mxu0
        %v932 = vadd.f32 0.0, %v931
        %v933 = vpop.f32.mrf.mxu0
        %934 = vmatprep.mubr.f32.mxu0 0.0
        %935 = vmatmul.mubr.f32.gmra.mxu0 %v467
        %v936 = vpop.f32.mrf.mxu0
        %v937 = vadd.f32 0.0, %v936
        %v938 = vpop.f32.mrf.mxu0
        %939 = vmatprep.mubr.f32.mxu0 0.0
        %940 = vmatmul.mubr.f32.gmra.mxu0 %v470
        %v941 = vpop.f32.mrf.mxu0
        %v942 = vadd.f32 0.0, %v941
        %v943 = vpop.f32.mrf.mxu0
        %944 = vmatprep.mubr.f32.mxu0 0.0
        %945 = vmatmul.mubr.f32.gmra.mxu0 %v473
        %v946 = vpop.f32.mrf.mxu0
        %v947 = vadd.f32 0.0, %v946
        %v948 = vpop.f32.mrf.mxu0
        %949 = vmatprep.mubr.f32.mxu0 0.0
        %950 = vmatmul.mubr.f32.gmra.mxu0 %v476
        %v951 = vpop.f32.mrf.mxu0
        %v952 = vadd.f32 0.0, %v951
        %v953 = vpop.f32.mrf.mxu0
        %954 = vmatprep.mubr.f32.mxu0 0.0
        %955 = vmatmul.mubr.f32.gmra.mxu0 %v479
        %v956 = vpop.f32.mrf.mxu0
        %v957 = vadd.f32 0.0, %v956
        %v958 = vpop.f32.mrf.mxu0
        %959 = vmatprep.mubr.f32.mxu0 0.0
        %960 = vmatmul.mubr.f32.gmra.mxu0 %v482
        %v961 = vpop.f32.mrf.mxu0
        %v962 = vadd.f32 0.0, %v961
        %v963 = vpop.f32.mrf.mxu0
        %964 = vmatprep.mubr.f32.mxu0 0.0
        %965 = vmatmul.mubr.f32.gmra.mxu0 %v485
        %v966 = vpop.f32.mrf.mxu0
        %v967 = vadd.f32 0.0, %v966
        %v968 = vpop.f32.mrf.mxu0
        %969 = vmatprep.mubr.f32.mxu0 0.0
        %970 = vmatmul.mubr.f32.gmra.mxu0 %v488
        %v971 = vpop.f32.mrf.mxu0
        %v972 = vadd.f32 0.0, %v971
        %v973 = vpop.f32.mrf.mxu0
        %974 = vmatprep.mubr.f32.mxu0 0.0
        %975 = vmatmul.mubr.f32.gmra.mxu0 %v491
        %v976 = vpop.f32.mrf.mxu0
        %v977 = vadd.f32 0.0, %v976
        %v978 = vpop.f32.mrf.mxu0
        %979 = vmatprep.mubr.f32.mxu0 0.0
        %980 = vmatmul.mubr.f32.gmra.mxu0 %v494
        %v981 = vpop.f32.mrf.mxu0
        %v982 = vadd.f32 0.0, %v981
        %v983 = vpop.f32.mrf.mxu0
        %984 = vmatprep.mubr.f32.mxu0 0.0
        %985 = vmatmul.mubr.f32.gmra.mxu0 %v497
        %v986 = vpop.f32.mrf.mxu0
        %v987 = vadd.f32 0.0, %v986
        %v988 = vpop.f32.mrf.mxu0
        %989 = vdwg.mxu0
        %v990 = vld [vmem:[%s2] sm:$0xff]
        %v991 = vld [vmem:[%s2 + $0x8] sm:$0xff]
        %v992 = vld [vmem:[%s2 + $0x10] sm:$0xff]
        %v993 = vld [vmem:[%s2 + $0x18] sm:$0xff]
        %v994 = vld [vmem:[%s2 + $0x20] sm:$0xff]
        %v995 = vld [vmem:[%s2 + $0x28] sm:$0xff]
        %v996 = vld [vmem:[%s2 + $0x30] sm:$0xff]
        %v997 = vld [vmem:[%s2 + $0x38] sm:$0xff]
        %v998 = vld [vmem:[%s2 + $0x40] sm:$0xff]
        %v999 = vld [vmem:[%s2 + $0x48] sm:$0xff]
        %v1000 = vld [vmem:[%s2 + $0x50] sm:$0xff]
        %v1001 = vld [vmem:[%s2 + $0x58] sm:$0xff]
        %v1002 = vld [vmem:[%s2 + $0x60] sm:$0xff]
        %v1003 = vld [vmem:[%s2 + $0x68] sm:$0xff]
        %v1004 = vld [vmem:[%s2 + $0x70] sm:$0xff]
        %v1005 = vld [vmem:[%s2 + $0x78] sm:$0xff]
        %v1006 = vmul.f32 %v575, %v575
        %v1007 = vmul.f32 %v577, %v577
        %v1008 = vmul.f32 %v832, %v832
        %v1009 = vmul.f32 %v581, %v581
        %v1010 = vmul.f32 %v583, %v583
        %v1011 = vmul.f32 %v837, %v837
        %v1012 = vmul.f32 %v587, %v587
        %v1013 = vmul.f32 %v589, %v589
        %v1014 = vmul.f32 %v842, %v842
        %v1015 = vmul.f32 %v593, %v593
        %v1016 = vmul.f32 %v595, %v595
        %v1017 = vmul.f32 %v847, %v847
        %v1018 = vmul.f32 %v599, %v599
        %v1019 = vmul.f32 %v601, %v601
        %v1020 = vmul.f32 %v852, %v852
        %v1021 = vmul.f32 %v605, %v605
        %v1022 = vmul.f32 %v607, %v607
        %v1023 = vmul.f32 %v857, %v857
        %v1024 = vmul.f32 %v611, %v611
        %v1025 = vmul.f32 %v613, %v613
        %v1026 = vmul.f32 %v862, %v862
        %v1027 = vmul.f32 %v617, %v617
        %v1028 = vmul.f32 %v619, %v619
        %v1029 = vmul.f32 %v867, %v867
        %v1030 = vmul.f32 %v623, %v623
        %v1031 = vmul.f32 %v625, %v625
        %v1032 = vmul.f32 %v872, %v872
        %v1033 = vmul.f32 %v629, %v629
        %v1034 = vmul.f32 %v631, %v631
        %v1035 = vmul.f32 %v877, %v877
        %v1036 = vmul.f32 %v635, %v635
        %v1037 = vmul.f32 %v637, %v637
        %v1038 = vmul.f32 %v882, %v882
        %v1039 = vmul.f32 %v641, %v641
        %v1040 = vmul.f32 %v643, %v643
        %v1041 = vmul.f32 %v887, %v887
        %v1042 = vmul.f32 %v647, %v647
        %v1043 = vmul.f32 %v649, %v649
        %v1044 = vmul.f32 %v892, %v892
        %v1045 = vmul.f32 %v653, %v653
        %v1046 = vmul.f32 %v655, %v655
        %v1047 = vmul.f32 %v897, %v897
        %v1048 = vmul.f32 %v659, %v659
        %v1049 = vmul.f32 %v661, %v661
        %v1050 = vmul.f32 %v902, %v902
        %v1051 = vmul.f32 %v665, %v665
        %v1052 = vmul.f32 %v667, %v667
        %v1053 = vmul.f32 %v907, %v907
        %v1054 = vmul.f32 %v671, %v671
        %v1055 = vmul.f32 %v673, %v673
        %v1056 = vmul.f32 %v912, %v912
        %v1057 = vmul.f32 %v677, %v677
        %v1058 = vmul.f32 %v679, %v679
        %v1059 = vmul.f32 %v917, %v917
        %v1060 = vmul.f32 %v683, %v683
        %v1061 = vmul.f32 %v685, %v685
        %v1062 = vmul.f32 %v922, %v922
        %v1063 = vmul.f32 %v689, %v689
        %v1064 = vmul.f32 %v691, %v691
        %v1065 = vmul.f32 %v927, %v927
        %v1066 = vmul.f32 %v695, %v695
        %v1067 = vmul.f32 %v697, %v697
        %v1068 = vmul.f32 %v932, %v932
        %v1069 = vmul.f32 %v701, %v701
        %v1070 = vmul.f32 %v703, %v703
        %v1071 = vmul.f32 %v937, %v937
        %v1072 = vmul.f32 %v707, %v707
        %v1073 = vmul.f32 %v709, %v709
        %v1074 = vmul.f32 %v942, %v942
        %v1075 = vmul.f32 %v713, %v713
        %v1076 = vmul.f32 %v715, %v715
        %v1077 = vmul.f32 %v947, %v947
        %v1078 = vmul.f32 %v719, %v719
        %v1079 = vmul.f32 %v721, %v721
        %v1080 = vmul.f32 %v952, %v952
        %v1081 = vmul.f32 %v725, %v725
        %v1082 = vmul.f32 %v727, %v727
        %v1083 = vmul.f32 %v957, %v957
        %v1084 = vmul.f32 %v731, %v731
        %v1085 = vmul.f32 %v733, %v733
        %v1086 = vmul.f32 %v962, %v962
        %v1087 = vmul.f32 %v737, %v737
        %v1088 = vmul.f32 %v739, %v739
        %v1089 = vmul.f32 %v967, %v967
        %v1090 = vmul.f32 %v743, %v743
        %v1091 = vmul.f32 %v745, %v745
        %v1092 = vmul.f32 %v972, %v972
        %v1093 = vmul.f32 %v749, %v749
        %v1094 = vmul.f32 %v751, %v751
        %v1095 = vmul.f32 %v977, %v977
        %v1096 = vmul.f32 %v755, %v755
        %v1097 = vmul.f32 %v757, %v757
        %v1098 = vmul.f32 %v982, %v982
        %v1099 = vmul.f32 %v761, %v761
        %v1100 = vmul.f32 %v763, %v763
        %v1101 = vmul.f32 %v987, %v987
        %1102 = vmatprep.subr.mxu0 %v1052
        %1103 = vmatpush1.msra.mxu0 %v1051
        %1104 = vmatprep.subr.mxu0 %v1049
        %1105 = vmatpush1.msra.mxu0 %v1048
        %1106 = vmatprep.subr.mxu0 %v1046
        %1107 = vmatpush1.msra.mxu0 %v1045
        %1108 = vmatprep.subr.mxu0 %v1043
        %1109 = vmatpush1.msra.mxu0 %v1042
        %1110 = vmatprep.subr.mxu0 %v1040
        %1111 = vmatpush1.msra.mxu0 %v1039
        %1112 = vmatprep.subr.mxu0 %v1037
        %1113 = vmatpush1.msra.mxu0 %v1036
        %1114 = vmatprep.subr.mxu0 %v1034
        %1115 = vmatpush1.msra.mxu0 %v1033
        %1116 = vmatprep.subr.mxu0 %v1031
        %1117 = vmatpush1.msra.mxu0 %v1030
        %1118 = vmatprep.subr.mxu0 %v1028
        %1119 = vmatpush1.msra.mxu0 %v1027
        %1120 = vmatprep.subr.mxu0 %v1025
        %1121 = vmatpush1.msra.mxu0 %v1024
        %1122 = vmatprep.subr.mxu0 %v1022
        %1123 = vmatpush1.msra.mxu0 %v1021
        %1124 = vmatprep.subr.mxu0 %v1019
        %1125 = vmatpush1.msra.mxu0 %v1018
        %1126 = vmatprep.subr.mxu0 %v1016
        %1127 = vmatpush1.msra.mxu0 %v1015
        %1128 = vmatprep.subr.mxu0 %v1013
        %1129 = vmatpush1.msra.mxu0 %v1012
        %1130 = vmatprep.subr.mxu0 %v1010
        %1131 = vmatpush1.msra.mxu0 %v1009
        %1132 = vmatprep.subr.mxu0 %v1007
        %1133 = vmatpush1.msra.mxu0 %v1006
        %1134 = vmatprep.subr.mxu0 %v1100
        %1135 = vmatpush2.msra.mxu0 %v1099
        %1136 = vmatprep.subr.mxu0 %v1097
        %1137 = vmatpush2.msra.mxu0 %v1096
        %1138 = vmatprep.subr.mxu0 %v1094
        %1139 = vmatpush2.msra.mxu0 %v1093
        %1140 = vmatprep.subr.mxu0 %v1091
        %1141 = vmatpush2.msra.mxu0 %v1090
        %1142 = vmatprep.subr.mxu0 %v1088
        %1143 = vmatpush2.msra.mxu0 %v1087
        %1144 = vmatprep.subr.mxu0 %v1085
        %1145 = vmatpush2.msra.mxu0 %v1084
        %1146 = vmatprep.subr.mxu0 %v1082
        %1147 = vmatpush2.msra.mxu0 %v1081
        %1148 = vmatprep.subr.mxu0 %v1079
        %1149 = vmatpush2.msra.mxu0 %v1078
        %1150 = vmatprep.subr.mxu0 %v1076
        %1151 = vmatpush2.msra.mxu0 %v1075
        %1152 = vmatprep.subr.mxu0 %v1073
        %1153 = vmatpush2.msra.mxu0 %v1072
        %1154 = vmatprep.subr.mxu0 %v1070
        %1155 = vmatpush2.msra.mxu0 %v1069
        %1156 = vmatprep.subr.mxu0 %v1067
        %1157 = vmatpush2.msra.mxu0 %v1066
        %1158 = vmatprep.subr.mxu0 %v1064
        %1159 = vmatpush2.msra.mxu0 %v1063
        %1160 = vmatprep.subr.mxu0 %v1061
        %1161 = vmatpush2.msra.mxu0 %v1060
        %1162 = vmatprep.subr.mxu0 %v1058
        %1163 = vmatpush2.msra.mxu0 %v1057
        %1164 = vmatprep.subr.mxu0 %v1055
        %1165 = vmatpush2.msra.mxu0 %v1054
        %1166 = vmatprep.mubr.f32.mxu0 %v991
        %1167 = vmatmul.mubr.f32.gmra.mxu0 %v990
        %v1168 = vpop.f32.mrf.mxu0
        %v1169 = vadd.f32 0.0, %v1168
        %v1170 = vpop.f32.mrf.mxu0
        %v1171 = vadd.f32 0.0, %v1170
        %1172 = vmatprep.mubr.f32.mxu0 %v993
        %1173 = vmatmul.mubr.f32.gmra.mxu0 %v992
        %v1174 = vpop.f32.mrf.mxu0
        %v1175 = vadd.f32 0.0, %v1174
        %v1176 = vpop.f32.mrf.mxu0
        %v1177 = vadd.f32 0.0, %v1176
        %1178 = vmatprep.mubr.f32.mxu0 %v995
        %1179 = vmatmul.mubr.f32.gmra.mxu0 %v994
        %v1180 = vpop.f32.mrf.mxu0
        %v1181 = vadd.f32 0.0, %v1180
        %v1182 = vpop.f32.mrf.mxu0
        %v1183 = vadd.f32 0.0, %v1182
        %1184 = vmatprep.mubr.f32.mxu0 %v997
        %1185 = vmatmul.mubr.f32.gmra.mxu0 %v996
        %v1186 = vpop.f32.mrf.mxu0
        %v1187 = vadd.f32 0.0, %v1186
        %v1188 = vpop.f32.mrf.mxu0
        %v1189 = vadd.f32 0.0, %v1188
        %1190 = vmatprep.mubr.f32.mxu0 %v999
        %1191 = vmatmul.mubr.f32.gmra.mxu0 %v998
        %v1192 = vpop.f32.mrf.mxu0
        %v1193 = vadd.f32 0.0, %v1192
        %v1194 = vpop.f32.mrf.mxu0
        %v1195 = vadd.f32 0.0, %v1194
        %1196 = vmatprep.mubr.f32.mxu0 %v1001
        %1197 = vmatmul.mubr.f32.gmra.mxu0 %v1000
        %v1198 = vpop.f32.mrf.mxu0
        %v1199 = vadd.f32 0.0, %v1198
        %v1200 = vpop.f32.mrf.mxu0
        %v1201 = vadd.f32 0.0, %v1200
        %1202 = vmatprep.mubr.f32.mxu0 %v1003
        %1203 = vmatmul.mubr.f32.gmra.mxu0 %v1002
        %v1204 = vpop.f32.mrf.mxu0
        %v1205 = vadd.f32 0.0, %v1204
        %v1206 = vpop.f32.mrf.mxu0
        %v1207 = vadd.f32 0.0, %v1206
        %1208 = vmatprep.mubr.f32.mxu0 %v1005
        %1209 = vmatmul.mubr.f32.gmra.mxu0 %v1004
        %v1210 = vpop.f32.mrf.mxu0
        %v1211 = vadd.f32 0.0, %v1210
        %v1212 = vpop.f32.mrf.mxu0
        %v1213 = vadd.f32 0.0, %v1212
        %1214 = vdwg.mxu0
        %1215 = vmatprep.subr.mxu0 0.0
        %1216 = vmatpush1.msra.mxu0 %v1053
        %1217 = vmatprep.subr.mxu0 0.0
        %1218 = vmatpush1.msra.mxu0 %v1050
        %1219 = vmatprep.subr.mxu0 0.0
        %1220 = vmatpush1.msra.mxu0 %v1047
        %1221 = vmatprep.subr.mxu0 0.0
        %1222 = vmatpush1.msra.mxu0 %v1044
        %1223 = vmatprep.subr.mxu0 0.0
        %1224 = vmatpush1.msra.mxu0 %v1041
        %1225 = vmatprep.subr.mxu0 0.0
        %1226 = vmatpush1.msra.mxu0 %v1038
        %1227 = vmatprep.subr.mxu0 0.0
        %1228 = vmatpush1.msra.mxu0 %v1035
        %1229 = vmatprep.subr.mxu0 0.0
        %1230 = vmatpush1.msra.mxu0 %v1032
        %1231 = vmatprep.subr.mxu0 0.0
        %1232 = vmatpush1.msra.mxu0 %v1029
        %1233 = vmatprep.subr.mxu0 0.0
        %1234 = vmatpush1.msra.mxu0 %v1026
        %1235 = vmatprep.subr.mxu0 0.0
        %1236 = vmatpush1.msra.mxu0 %v1023
        %1237 = vmatprep.subr.mxu0 0.0
        %1238 = vmatpush1.msra.mxu0 %v1020
        %1239 = vmatprep.subr.mxu0 0.0
        %1240 = vmatpush1.msra.mxu0 %v1017
        %1241 = vmatprep.subr.mxu0 0.0
        %1242 = vmatpush1.msra.mxu0 %v1014
        %1243 = vmatprep.subr.mxu0 0.0
        %1244 = vmatpush1.msra.mxu0 %v1011
        %1245 = vmatprep.subr.mxu0 0.0
        %1246 = vmatpush1.msra.mxu0 %v1008
        %1247 = vmatprep.subr.mxu0 0.0
        %1248 = vmatpush2.msra.mxu0 %v1101
        %1249 = vmatprep.subr.mxu0 0.0
        %1250 = vmatpush2.msra.mxu0 %v1098
        %1251 = vmatprep.subr.mxu0 0.0
        %1252 = vmatpush2.msra.mxu0 %v1095
        %1253 = vmatprep.subr.mxu0 0.0
        %1254 = vmatpush2.msra.mxu0 %v1092
        %1255 = vmatprep.subr.mxu0 0.0
        %1256 = vmatpush2.msra.mxu0 %v1089
        %1257 = vmatprep.subr.mxu0 0.0
        %1258 = vmatpush2.msra.mxu0 %v1086
        %1259 = vmatprep.subr.mxu0 0.0
        %1260 = vmatpush2.msra.mxu0 %v1083
        %1261 = vmatprep.subr.mxu0 0.0
        %1262 = vmatpush2.msra.mxu0 %v1080
        %1263 = vmatprep.subr.mxu0 0.0
        %1264 = vmatpush2.msra.mxu0 %v1077
        %1265 = vmatprep.subr.mxu0 0.0
        %1266 = vmatpush2.msra.mxu0 %v1074
        %1267 = vmatprep.subr.mxu0 0.0
        %1268 = vmatpush2.msra.mxu0 %v1071
        %1269 = vmatprep.subr.mxu0 0.0
        %1270 = vmatpush2.msra.mxu0 %v1068
        %1271 = vmatprep.subr.mxu0 0.0
        %1272 = vmatpush2.msra.mxu0 %v1065
        %1273 = vmatprep.subr.mxu0 0.0
        %1274 = vmatpush2.msra.mxu0 %v1062
        %1275 = vmatprep.subr.mxu0 0.0
        %1276 = vmatpush2.msra.mxu0 %v1059
        %1277 = vmatprep.subr.mxu0 0.0
        %1278 = vmatpush2.msra.mxu0 %v1056
        %1279 = vmatprep.mubr.f32.mxu0 %v991
        %1280 = vmatmul.mubr.f32.gmra.mxu0 %v990
        %v1281 = vpop.f32.mrf.mxu0
        %v1282 = vadd.f32 0.0, %v1281
        %v1283 = vpop.f32.mrf.mxu0
        %1284 = vmatprep.mubr.f32.mxu0 %v993
        %1285 = vmatmul.mubr.f32.gmra.mxu0 %v992
        %v1286 = vpop.f32.mrf.mxu0
        %v1287 = vadd.f32 0.0, %v1286
        %v1288 = vpop.f32.mrf.mxu0
        %1289 = vmatprep.mubr.f32.mxu0 %v995
        %1290 = vmatmul.mubr.f32.gmra.mxu0 %v994
        %v1291 = vpop.f32.mrf.mxu0
        %v1292 = vadd.f32 0.0, %v1291
        %v1293 = vpop.f32.mrf.mxu0
        %1294 = vmatprep.mubr.f32.mxu0 %v997
        %1295 = vmatmul.mubr.f32.gmra.mxu0 %v996
        %v1296 = vpop.f32.mrf.mxu0
        %v1297 = vadd.f32 0.0, %v1296
        %v1298 = vpop.f32.mrf.mxu0
        %1299 = vmatprep.mubr.f32.mxu0 %v999
        %1300 = vmatmul.mubr.f32.gmra.mxu0 %v998
        %v1301 = vpop.f32.mrf.mxu0
        %v1302 = vadd.f32 0.0, %v1301
        %v1303 = vpop.f32.mrf.mxu0
        %1304 = vmatprep.mubr.f32.mxu0 %v1001
        %1305 = vmatmul.mubr.f32.gmra.mxu0 %v1000
        %v1306 = vpop.f32.mrf.mxu0
        %v1307 = vadd.f32 0.0, %v1306
        %v1308 = vpop.f32.mrf.mxu0
        %1309 = vmatprep.mubr.f32.mxu0 %v1003
        %1310 = vmatmul.mubr.f32.gmra.mxu0 %v1002
        %v1311 = vpop.f32.mrf.mxu0
        %v1312 = vadd.f32 0.0, %v1311
        %v1313 = vpop.f32.mrf.mxu0
        %1314 = vmatprep.mubr.f32.mxu0 %v1005
        %1315 = vmatmul.mubr.f32.gmra.mxu0 %v1004
        %v1316 = vpop.f32.mrf.mxu0
        %v1317 = vadd.f32 0.0, %v1316
        %v1318 = vpop.f32.mrf.mxu0
        %1319 = vdwg.mxu0
        %v1320 = vsub.f32 %v349, %v1169
        %v1321 = vsub.f32 %v359, %v1171
        %v1322 = vsub.f32 %v369, %v1282
        %v1323 = vsub.f32 %v349, %v1175
        %v1324 = vsub.f32 %v359, %v1177
        %v1325 = vsub.f32 %v369, %v1287
        %v1326 = vsub.f32 %v349, %v1181
        %v1327 = vsub.f32 %v359, %v1183
        %v1328 = vsub.f32 %v369, %v1292
        %v1329 = vsub.f32 %v349, %v1187
        %v1330 = vsub.f32 %v359, %v1189
        %v1331 = vsub.f32 %v369, %v1297
        %v1332 = vsub.f32 %v349, %v1193
        %v1333 = vsub.f32 %v359, %v1195
        %v1334 = vsub.f32 %v369, %v1302
        %v1335 = vsub.f32 %v349, %v1199
        %v1336 = vsub.f32 %v359, %v1201
        %v1337 = vsub.f32 %v369, %v1307
        %v1338 = vsub.f32 %v349, %v1205
        %v1339 = vsub.f32 %v359, %v1207
        %v1340 = vsub.f32 %v369, %v1312
        %v1341 = vsub.f32 %v349, %v1211
        %v1342 = vsub.f32 %v359, %v1213
        %v1343 = vsub.f32 %v369, %v1317
        %v1344 = vmul.f32 %v1320, 0.04
        %v1345 = vmul.f32 %v1321, 0.04
        %v1346 = vmul.f32 %v1322, 0.04
        %v1347 = vmul.f32 %v1323, 0.04
        %v1348 = vmul.f32 %v1324, 0.04
        %v1349 = vmul.f32 %v1325, 0.04
        %v1350 = vmul.f32 %v1326, 0.04
        %v1351 = vmul.f32 %v1327, 0.04
        %v1352 = vmul.f32 %v1328, 0.04
        %v1353 = vmul.f32 %v1329, 0.04
        %v1354 = vmul.f32 %v1330, 0.04
        %v1355 = vmul.f32 %v1331, 0.04
        %v1356 = vmul.f32 %v1332, 0.04
        %v1357 = vmul.f32 %v1333, 0.04
        %v1358 = vmul.f32 %v1334, 0.04
        %v1359 = vmul.f32 %v1335, 0.04
        %v1360 = vmul.f32 %v1336, 0.04
        %v1361 = vmul.f32 %v1337, 0.04
        %v1362 = vmul.f32 %v1338, 0.04
        %v1363 = vmul.f32 %v1339, 0.04
        %v1364 = vmul.f32 %v1340, 0.04
        %v1365 = vmul.f32 %v1341, 0.04
        %v1366 = vmul.f32 %v1342, 0.04
        %v1367 = vmul.f32 %v1343, 0.04
        %v1368 = vsub.f32 0.0, %v1344
        %v1369 = vsub.f32 0.0, %v1345
        %v1370 = vsub.f32 0.0, %v1346
        %v1371 = vsub.f32 0.0, %v1347
        %v1372 = vsub.f32 0.0, %v1348
        %v1373 = vsub.f32 0.0, %v1349
        %v1374 = vsub.f32 0.0, %v1350
        %v1375 = vsub.f32 0.0, %v1351
        %v1376 = vsub.f32 0.0, %v1352
        %v1377 = vsub.f32 0.0, %v1353
        %v1378 = vsub.f32 0.0, %v1354
        %v1379 = vsub.f32 0.0, %v1355
        %v1380 = vsub.f32 0.0, %v1356
        %v1381 = vsub.f32 0.0, %v1357
        %v1382 = vsub.f32 0.0, %v1358
        %v1383 = vsub.f32 0.0, %v1359
        %v1384 = vsub.f32 0.0, %v1360
        %v1385 = vsub.f32 0.0, %v1361
        %v1386 = vsub.f32 0.0, %v1362
        %v1387 = vsub.f32 0.0, %v1363
        %v1388 = vsub.f32 0.0, %v1364
        %v1389 = vsub.f32 0.0, %v1365
        %v1390 = vsub.f32 0.0, %v1366
        %v1391 = vsub.f32 0.0, %v1367
        %v1392 = vmul.f32 %v1368, 1.442695
        %v1393 = vpow.pop %v1392
        %v1394 = vmul.f32 %v1369, 1.442695
        %v1395 = vpow.pop %v1394
        %v1396 = vmul.f32 %v1370, 1.442695
        %v1397 = vpow.pop %v1396
        %v1398 = vmul.f32 %v1371, 1.442695
        %v1399 = vpow.pop %v1398
        %v1400 = vmul.f32 %v1372, 1.442695
        %v1401 = vpow.pop %v1400
        %v1402 = vmul.f32 %v1373, 1.442695
        %v1403 = vpow.pop %v1402
        %v1404 = vmul.f32 %v1374, 1.442695
        %v1405 = vpow.pop %v1404
        %v1406 = vmul.f32 %v1375, 1.442695
        %v1407 = vpow.pop %v1406
        %v1408 = vmul.f32 %v1376, 1.442695
        %v1409 = vpow.pop %v1408
        %v1410 = vmul.f32 %v1377, 1.442695
        %v1411 = vpow.pop %v1410
        %v1412 = vmul.f32 %v1378, 1.442695
        %v1413 = vpow.pop %v1412
        %v1414 = vmul.f32 %v1379, 1.442695
        %v1415 = vpow.pop %v1414
        %v1416 = vmul.f32 %v1380, 1.442695
        %v1417 = vpow.pop %v1416
        %v1418 = vmul.f32 %v1381, 1.442695
        %v1419 = vpow.pop %v1418
        %v1420 = vmul.f32 %v1382, 1.442695
        %v1421 = vpow.pop %v1420
        %v1422 = vmul.f32 %v1383, 1.442695
        %v1423 = vpow.pop %v1422
        %v1424 = vmul.f32 %v1384, 1.442695
        %v1425 = vpow.pop %v1424
        %v1426 = vmul.f32 %v1385, 1.442695
        %v1427 = vpow.pop %v1426
        %v1428 = vmul.f32 %v1386, 1.442695
        %v1429 = vpow.pop %v1428
        %v1430 = vmul.f32 %v1387, 1.442695
        %v1431 = vpow.pop %v1430
        %v1432 = vmul.f32 %v1388, 1.442695
        %v1433 = vpow.pop %v1432
        %v1434 = vmul.f32 %v1389, 1.442695
        %v1435 = vpow.pop %v1434
        %v1436 = vmul.f32 %v1390, 1.442695
        %v1437 = vpow.pop %v1436
        %v1438 = vmul.f32 %v1391, 1.442695
        %v1439 = vpow.pop %v1438
        %v1440 = vsub.f32 %v1393, 0.36787945
        %v1441 = vsub.f32 %v1395, 0.36787945
        %v1442 = vsub.f32 %v1397, 0.36787945
        %v1443 = vsub.f32 %v1399, 0.36787945
        %v1444 = vsub.f32 %v1401, 0.36787945
        %v1445 = vsub.f32 %v1403, 0.36787945
        %v1446 = vsub.f32 %v1405, 0.36787945
        %v1447 = vsub.f32 %v1407, 0.36787945
        %v1448 = vsub.f32 %v1409, 0.36787945
        %v1449 = vsub.f32 %v1411, 0.36787945
        %v1450 = vsub.f32 %v1413, 0.36787945
        %v1451 = vsub.f32 %v1415, 0.36787945
        %v1452 = vsub.f32 %v1417, 0.36787945
        %v1453 = vsub.f32 %v1419, 0.36787945
        %v1454 = vsub.f32 %v1421, 0.36787945
        %v1455 = vsub.f32 %v1423, 0.36787945
        %v1456 = vsub.f32 %v1425, 0.36787945
        %v1457 = vsub.f32 %v1427, 0.36787945
        %v1458 = vsub.f32 %v1429, 0.36787945
        %v1459 = vsub.f32 %v1431, 0.36787945
        %v1460 = vsub.f32 %v1433, 0.36787945
        %v1461 = vsub.f32 %v1435, 0.36787945
        %v1462 = vsub.f32 %v1437, 0.36787945
        %v1463 = vsub.f32 %v1439, 0.36787945
        %v1464 = vmul.f32 %v1440, 1.5819767
        %v1465 = vmul.f32 %v1441, 1.5819767
        %v1466 = vmul.f32 %v1442, 1.5819767
        %v1467 = vmul.f32 %v1443, 1.5819767
        %v1468 = vmul.f32 %v1444, 1.5819767
        %v1469 = vmul.f32 %v1445, 1.5819767
        %v1470 = vmul.f32 %v1446, 1.5819767
        %v1471 = vmul.f32 %v1447, 1.5819767
        %v1472 = vmul.f32 %v1448, 1.5819767
        %v1473 = vmul.f32 %v1449, 1.5819767
        %v1474 = vmul.f32 %v1450, 1.5819767
        %v1475 = vmul.f32 %v1451, 1.5819767
        %v1476 = vmul.f32 %v1452, 1.5819767
        %v1477 = vmul.f32 %v1453, 1.5819767
        %v1478 = vmul.f32 %v1454, 1.5819767
        %v1479 = vmul.f32 %v1455, 1.5819767
        %v1480 = vmul.f32 %v1456, 1.5819767
        %v1481 = vmul.f32 %v1457, 1.5819767
        %v1482 = vmul.f32 %v1458, 1.5819767
        %v1483 = vmul.f32 %v1459, 1.5819767
        %v1484 = vmul.f32 %v1460, 1.5819767
        %v1485 = vmul.f32 %v1461, 1.5819767
        %v1486 = vmul.f32 %v1462, 1.5819767
        %v1487 = vmul.f32 %v1463, 1.5819767
        %v1488 = vsub.f32 %v1464, 0.5
        %v1489 = vsub.f32 %v1465, 0.5
        %v1490 = vsub.f32 %v1466, 0.5
        %v1491 = vsub.f32 %v1467, 0.5
        %v1492 = vsub.f32 %v1468, 0.5
        %v1493 = vsub.f32 %v1469, 0.5
        %v1494 = vsub.f32 %v1470, 0.5
        %v1495 = vsub.f32 %v1471, 0.5
        %v1496 = vsub.f32 %v1472, 0.5
        %v1497 = vsub.f32 %v1473, 0.5
        %v1498 = vsub.f32 %v1474, 0.5
        %v1499 = vsub.f32 %v1475, 0.5
        %v1500 = vsub.f32 %v1476, 0.5
        %v1501 = vsub.f32 %v1477, 0.5
        %v1502 = vsub.f32 %v1478, 0.5
        %v1503 = vsub.f32 %v1479, 0.5
        %v1504 = vsub.f32 %v1480, 0.5
        %v1505 = vsub.f32 %v1481, 0.5
        %v1506 = vsub.f32 %v1482, 0.5
        %v1507 = vsub.f32 %v1483, 0.5
        %v1508 = vsub.f32 %v1484, 0.5
        %v1509 = vsub.f32 %v1485, 0.5
        %v1510 = vsub.f32 %v1486, 0.5
        %v1511 = vsub.f32 %v1487, 0.5
        %1512 = vst [vmem:[%s206] sm:$0xff] %v1488
        %1513 = vst [vmem:[%s206 + $0x8] sm:$0xff] %v1489
        %1514 = vst [vmem:[%s206 + $0x10] sm:$0xff] %v1490
        %1515 = vst [vmem:[%s206 + $0x18] sm:$0xff] %v1491
        %1516 = vst [vmem:[%s206 + $0x20] sm:$0xff] %v1492
        %1517 = vst [vmem:[%s206 + $0x28] sm:$0xff] %v1493
        %1518 = vst [vmem:[%s206 + $0x30] sm:$0xff] %v1494
        %1519 = vst [vmem:[%s206 + $0x38] sm:$0xff] %v1495
        %1520 = vst [vmem:[%s206 + $0x40] sm:$0xff] %v1496
        %1521 = vst [vmem:[%s206 + $0x48] sm:$0xff] %v1497
        %1522 = vst [vmem:[%s206 + $0x50] sm:$0xff] %v1498
        %1523 = vst [vmem:[%s206 + $0x58] sm:$0xff] %v1499
        %1524 = vst [vmem:[%s206 + $0x60] sm:$0xff] %v1500
        %1525 = vst [vmem:[%s206 + $0x68] sm:$0xff] %v1501
        %1526 = vst [vmem:[%s206 + $0x70] sm:$0xff] %v1502
        %1527 = vst [vmem:[%s206 + $0x78] sm:$0xff] %v1503
        %1528 = vst [vmem:[%s206 + $0x80] sm:$0xff] %v1504
        %1529 = vst [vmem:[%s206 + $0x88] sm:$0xff] %v1505
        %1530 = vst [vmem:[%s206 + $0x90] sm:$0xff] %v1506
        %1531 = vst [vmem:[%s206 + $0x98] sm:$0xff] %v1507
        %1532 = vst [vmem:[%s206 + $0xa0] sm:$0xff] %v1508
        %1533 = vst [vmem:[%s206 + $0xa8] sm:$0xff] %v1509
        %1534 = vst [vmem:[%s206 + $0xb0] sm:$0xff] %v1510
        %1535 = vst [vmem:[%s206 + $0xb8] sm:$0xff] %v1511
        %s1536 = sand.u32 %s90, 1
        %s1537 = sand.u32 %s90, 1
        %s1538 = smul.addr %s1537, 192
        %s1539 = scalar_lea.vmem [#allocation3], %s1538
        // Predicated region
        $region56: #{net_forward.5} parent=50 // pred_check
          %p1540 = pneg %p100
        $region57: #{net_forward.5} parent=50 // pred_check_branch
          %1542 = sbr.rel (%p1540) target = $region59
        $region58: #{net_forward.5} parent=50 // pred_region
          %s1543 = smul.u32 3, %s14
          %s1544 = smul.addr %s1543, 8
          %s1545 = scalar_lea.vmem %s3, %s1544
          // Predicated region
          $region60: #{net_forward.5} parent=58 // pred_check
            _
          $region61: #{net_forward.5} parent=58 // pred_check_branch
            %1547 = sbr.rel (0) target = $region63
          $region62: #{net_forward.5} parent=58 // pred_region
            // Predicated region
            $region64: #{net_forward.5} parent=62 // pred_check
              _
            $region65: #{net_forward.5} parent=62 // pred_check_branch
              %1549 = sbr.rel (0) target = $region67
            $region66: #{net_forward.5} parent=62 // pred_region
              loop: start=0, step=1, limit=1
              $region68: #{net_forward.5} parent=66 // loop_pre_header
                _
              $region69: #{net_forward.5} parent=66 // loop_header
                %s1551 = sphi 0, %s1555
                %p1552 = scmp.ge.s32.totalorder %s1551, 1
                %s1556 = sphi %s1539, %s1539
                %s1557 = sphi %s1545, %s1545
              $region70: #{net_forward.5} parent=66 // loop_header_branch
                %1554 = sbr.rel (%p1552) target = $region74
              $region71: #{net_forward.5} parent=66 // loop_body
                %v1558 = vld [vmem:[%s1556] sm:$0xff]
                %1559 = vst [vmem:[%s1557] sm:$0xff] %v1558
                %v1560 = vld [vmem:[%s1556 + $0x8] sm:$0xff]
                %1561 = vst [vmem:[%s1557 + $0x8] sm:$0xff] %v1560
                %v1562 = vld [vmem:[%s1556 + $0x10] sm:$0xff]
                %1563 = vst [vmem:[%s1557 + $0x10] sm:$0xff] %v1562
                %v1564 = vld [vmem:[%s1556 + $0x18] sm:$0xff]
                %1565 = vst [vmem:[%s1557 + $0x48] sm:$0xff] %v1564
                %v1566 = vld [vmem:[%s1556 + $0x20] sm:$0xff]
                %1567 = vst [vmem:[%s1557 + $0x50] sm:$0xff] %v1566
                %v1568 = vld [vmem:[%s1556 + $0x28] sm:$0xff]
                %1569 = vst [vmem:[%s1557 + $0x58] sm:$0xff] %v1568
                %v1570 = vld [vmem:[%s1556 + $0x30] sm:$0xff]
                %1571 = vst [vmem:[%s1557 + $0x90] sm:$0xff] %v1570
                %v1572 = vld [vmem:[%s1556 + $0x38] sm:$0xff]
                %1573 = vst [vmem:[%s1557 + $0x98] sm:$0xff] %v1572
                %v1574 = vld [vmem:[%s1556 + $0x40] sm:$0xff]
                %1575 = vst [vmem:[%s1557 + $0xa0] sm:$0xff] %v1574
                %v1576 = vld [vmem:[%s1556 + $0x48] sm:$0xff]
                %1577 = vst [vmem:[%s1557 + $0xd8] sm:$0xff] %v1576
                %v1578 = vld [vmem:[%s1556 + $0x50] sm:$0xff]
                %1579 = vst [vmem:[%s1557 + $0xe0] sm:$0xff] %v1578
                %v1580 = vld [vmem:[%s1556 + $0x58] sm:$0xff]
                %1581 = vst [vmem:[%s1557 + $0xe8] sm:$0xff] %v1580
                %v1582 = vld [vmem:[%s1556 + $0x60] sm:$0xff]
                %1583 = vst [vmem:[%s1557 + $0x120] sm:$0xff] %v1582
                %v1584 = vld [vmem:[%s1556 + $0x68] sm:$0xff]
                %1585 = vst [vmem:[%s1557 + $0x128] sm:$0xff] %v1584
                %v1586 = vld [vmem:[%s1556 + $0x70] sm:$0xff]
                %1587 = vst [vmem:[%s1557 + $0x130] sm:$0xff] %v1586
                %v1588 = vld [vmem:[%s1556 + $0x78] sm:$0xff]
                %1589 = vst [vmem:[%s1557 + $0x168] sm:$0xff] %v1588
                %v1590 = vld [vmem:[%s1556 + $0x80] sm:$0xff]
                %1591 = vst [vmem:[%s1557 + $0x170] sm:$0xff] %v1590
                %v1592 = vld [vmem:[%s1556 + $0x88] sm:$0xff]
                %1593 = vst [vmem:[%s1557 + $0x178] sm:$0xff] %v1592
                %v1594 = vld [vmem:[%s1556 + $0x90] sm:$0xff]
                %1595 = vst [vmem:[%s1557 + $0x1b0] sm:$0xff] %v1594
                %v1596 = vld [vmem:[%s1556 + $0x98] sm:$0xff]
                %1597 = vst [vmem:[%s1557 + $0x1b8] sm:$0xff] %v1596
                %v1598 = vld [vmem:[%s1556 + $0xa0] sm:$0xff]
                %1599 = vst [vmem:[%s1557 + $0x1c0] sm:$0xff] %v1598
                %v1600 = vld [vmem:[%s1556 + $0xa8] sm:$0xff]
                %1601 = vst [vmem:[%s1557 + $0x1f8] sm:$0xff] %v1600
                %v1602 = vld [vmem:[%s1556 + $0xb0] sm:$0xff]
                %1603 = vst [vmem:[%s1557 + $0x200] sm:$0xff] %v1602
                %v1604 = vld [vmem:[%s1556 + $0xb8] sm:$0xff]
                %1605 = vst [vmem:[%s1557 + $0x208] sm:$0xff] %v1604
              $region72: #{net_forward.5} parent=66 // loop_footer
                %s1555 = sadd.s32 1, %s1551
              $region73: #{net_forward.5} parent=66 // loop_footer_branch
                %1550 = sbr.rel target = $region69
              $region74: #{net_forward.5} parent=66 // loop_exit
                _
            $region67: #{net_forward.5} parent=62 // pred_fallthru
              _
            // Predicated region
            $region75: #{net_forward.5} parent=62 // pred_check
              _
            $region76: #{net_forward.5} parent=62 // pred_check_branch
              %1607 = sbr.rel target = $region78
            $region77: #{net_forward.5} parent=62 // pred_region
              _
            $region78: #{net_forward.5} parent=62 // pred_fallthru
              _
          $region63: #{net_forward.5} parent=58 // pred_fallthru
            _
          %1608 = vnop
        $region59: #{net_forward.5} parent=50 // pred_fallthru
          _
      $region51: #{net_forward.5} parent=5 // pred_fallthru
        _
      %p1609 = scmp.le.s32.totalorder 2, %s9
      // Predicated region
      $region79: #{net_forward.5} parent=5 // pred_check
        %p1610 = pneg %p1609
      $region80: #{net_forward.5} parent=5 // pred_check_branch
        %1612 = sbr.rel (%p1610) target = $region82
      $region81: #{net_forward.5} parent=5 // pred_region
        %s1613 = ssub.s32 %s9, 2
        // Predicated region
        $region83: #{net_forward.5} parent=81 // pred_check
          %p1614 = pneg %p106
        $region84: #{net_forward.5} parent=81 // pred_check_branch
          %1616 = sbr.rel (%p1614) target = $region86
        $region85: #{net_forward.5} parent=81 // pred_region
          %s1617 = sand.u32 %s91, 1
          %s1618 = sand.u32 %s91, 1
          %s1619 = smul.addr %s1618, 192
          %s1620 = scalar_lea.vmem [#allocation3], %s1619
        $region86: #{net_forward.5} parent=81 // pred_fallthru
          _
      $region82: #{net_forward.5} parent=5 // pred_fallthru
        _
    $region6: #{net_forward.5} parent=1 // loop_footer
      %s13 = sadd.s32 1, %s9
    $region7: #{net_forward.5} parent=1 // loop_footer_branch
      %8 = sbr.rel target = $region3
    $region8: #{net_forward.5} parent=1 // loop_exit
      _

// kernel: net_forward.6
$region0: #{net_forward.6}
  #allocation0 [shape = 'u32[]', space=smem, size = 0x4, offset = 0x4, fixed_abs, tag = 'smem constant byte address 0x4 - core index']
  #allocation1 [shape = 'u32[144,128]{1,0:T(1,128)}', space=vmem, size = 0x12000, scoped, tag = 'internal scratch']
  %s0 = inlined_call_operand.vmem [shape: bf16[384,576], index: 0, kind: input, shape index: {}]
  %s1 = inlined_call_operand.vmem [shape: bf16[576,128], index: 1, kind: input, shape index: {}]
  %s2 = inlined_call_operand.vmem [shape: f32[1,128], index: 2, kind: input, shape index: {}]
  %s3 = inlined_call_operand.vmem [shape: f32[1,128], index: 3, kind: input, shape index: {}]
  %s4 = inlined_call_operand.vmem [shape: f32[384,128], index: 4, kind: output, shape index: {}]
  %s5 = sld [smem:[#allocation0]]
  $region49: #{net_forward.6} parent=0
    _
  %s7 = ssub.s32 1, %s5
  %s8 = scalar_select 0, %s7, %s5
  loop: start=0, step=1, limit=5
  $region2: #{net_forward.6} parent=0 // loop_pre_header
    _
  $region3: #{net_forward.6} parent=0 // loop_header
    %s10 = sphi 0, %s14
    %p11 = scmp.ge.s32.totalorder %s10, 5
    %s20 = sphi 0, %s22
    %s23 = sphi 0, %s20
    %s24 = sphi 0, %s23
    %s40 = sphi 0, %s24
    %s44 = sphi 0, %s44
    %s46 = sphi 0, %s44
    %s47 = sphi 0, %s46
    %s61 = sphi 0, %s47
    %s65 = sphi 0, %s65
    %s67 = sphi 0, %s65
    %s68 = sphi 0, %s67
    %s82 = sphi 0, %s68
    %s86 = sphi 0, %s86
    %s88 = sphi 0, %s86
    %s89 = sphi 0, %s88
    %s103 = sphi 0, %s89
    %s109 = sphi 0, %s111
    %s112 = sphi 0, %s109
    %s113 = sphi 0, %s112
    %s129 = sphi 0, %s113
  $region4: #{net_forward.6} parent=0 // loop_header_branch
    %13 = sbr.rel (%p11) target = $region8
  $region5: #{net_forward.6} parent=0 // loop_body
    %s15 = ssub.s32 %s10, 1
    %s16 = ssub.s32 %s10, 2
    %s17 = sadd.s32 %s10, 1
    %s18 = ssub.s32 %s10, %s17
    %p19 = scmp.eq.s32.totalorder %s18, 0
    %s21 = sadd.s32 %s20, 1
    %s22 = scalar_select %p19, %s20, %s21
    %p25 = pneg %p19
    %p26 = scmp.eq.s32.totalorder %s10, 2
    %p27 = por %p25, %p26
    %p28 = scmp.ne.s32.totalorder %s20, %s23
    %p29 = scmp.eq.s32.totalorder %s10, 0
    %p30 = por %p28, %p29
    %p31 = scmp.ne.s32.totalorder %s20, %s23
    %p32 = scmp.eq.s32.totalorder %s15, 2
    %p33 = por %p31, %p32
    %p34 = scmp.ne.s32.totalorder %s23, %s24
    %p35 = scmp.eq.s32.totalorder %s15, 0
    %p36 = por %p34, %p35
    %p37 = scmp.ne.s32.totalorder %s23, %s24
    %p38 = scmp.eq.s32.totalorder %s16, 2
    %p39 = por %p37, %p38
    %p41 = scmp.ne.s32.totalorder %s24, %s40
    %p42 = scmp.eq.s32.totalorder %s16, 0
    %p43 = por %p41, %p42
    %s45 = sadd.s32 %s44, 1
    %p48 = scmp.eq.s32.totalorder %s10, 2
    %p49 = scmp.ne.s32.totalorder %s44, %s46
    %p50 = scmp.eq.s32.totalorder %s10, 0
    %p51 = por %p49, %p50
    %p52 = scmp.ne.s32.totalorder %s44, %s46
    %p53 = scmp.eq.s32.totalorder %s15, 2
    %p54 = por %p52, %p53
    %p55 = scmp.ne.s32.totalorder %s46, %s47
    %p56 = scmp.eq.s32.totalorder %s15, 0
    %p57 = por %p55, %p56
    %p58 = scmp.ne.s32.totalorder %s46, %s47
    %p59 = scmp.eq.s32.totalorder %s16, 2
    %p60 = por %p58, %p59
    %p62 = scmp.ne.s32.totalorder %s47, %s61
    %p63 = scmp.eq.s32.totalorder %s16, 0
    %p64 = por %p62, %p63
    %s66 = sadd.s32 %s65, 1
    %p69 = scmp.eq.s32.totalorder %s10, 2
    %p70 = scmp.ne.s32.totalorder %s65, %s67
    %p71 = scmp.eq.s32.totalorder %s10, 0
    %p72 = por %p70, %p71
    %p73 = scmp.ne.s32.totalorder %s65, %s67
    %p74 = scmp.eq.s32.totalorder %s15, 2
    %p75 = por %p73, %p74
    %p76 = scmp.ne.s32.totalorder %s67, %s68
    %p77 = scmp.eq.s32.totalorder %s15, 0
    %p78 = por %p76, %p77
    %p79 = scmp.ne.s32.totalorder %s67, %s68
    %p80 = scmp.eq.s32.totalorder %s16, 2
    %p81 = por %p79, %p80
    %p83 = scmp.ne.s32.totalorder %s68, %s82
    %p84 = scmp.eq.s32.totalorder %s16, 0
    %p85 = por %p83, %p84
    %s87 = sadd.s32 %s86, 1
    %p90 = scmp.eq.s32.totalorder %s10, 2
    %p91 = scmp.ne.s32.totalorder %s86, %s88
    %p92 = scmp.eq.s32.totalorder %s10, 0
    %p93 = por %p91, %p92
    %p94 = scmp.ne.s32.totalorder %s86, %s88
    %p95 = scmp.eq.s32.totalorder %s15, 2
    %p96 = por %p94, %p95
    %p97 = scmp.ne.s32.totalorder %s88, %s89
    %p98 = scmp.eq.s32.totalorder %s15, 0
    %p99 = por %p97, %p98
    %p100 = scmp.ne.s32.totalorder %s88, %s89
    %p101 = scmp.eq.s32.totalorder %s16, 2
    %p102 = por %p100, %p101
    %p104 = scmp.ne.s32.totalorder %s89, %s103
    %p105 = scmp.eq.s32.totalorder %s16, 0
    %p106 = por %p104, %p105
    %s107 = ssub.s32 %s10, %s17
    %p108 = scmp.eq.s32.totalorder %s107, 0
    %s110 = sadd.s32 %s109, 1
    %s111 = scalar_select %p108, %s109, %s110
    %p114 = pneg %p108
    %p115 = scmp.eq.s32.totalorder %s10, 2
    %p116 = por %p114, %p115
    %p117 = scmp.ne.s32.totalorder %s109, %s112
    %p118 = scmp.eq.s32.totalorder %s10, 0
    %p119 = por %p117, %p118
    %p120 = scmp.ne.s32.totalorder %s109, %s112
    %p121 = scmp.eq.s32.totalorder %s15, 2
    %p122 = por %p120, %p121
    %p123 = scmp.ne.s32.totalorder %s112, %s113
    %p124 = scmp.eq.s32.totalorder %s15, 0
    %p125 = por %p123, %p124
    %p126 = scmp.ne.s32.totalorder %s112, %s113
    %p127 = scmp.eq.s32.totalorder %s16, 2
    %p128 = por %p126, %p127
    %p130 = scmp.ne.s32.totalorder %s113, %s129
    %p131 = scmp.eq.s32.totalorder %s16, 0
    %p132 = por %p130, %p131
    %p133 = scmp.le.s32.totalorder 1, %s10
    %p134 = scmp.lt.s32.totalorder %s10, 4
    %p135 = pnand %p133, %p134
    %p136 = pneg %p135
    // Predicated region
    $region9: #{net_forward.6} parent=5 // pred_check
      _
    $region10: #{net_forward.6} parent=5 // pred_check_branch
      %138 = sbr.rel (%p135) target = $region12
    $region11: #{net_forward.6} parent=5 // pred_region
      %s139 = ssub.s32 %s10, 1
      // Predicated region
      $region13: #{net_forward.6} parent=11 // pred_check
        %p140 = pneg %p57
      $region14: #{net_forward.6} parent=11 // pred_check_branch
        %142 = sbr.rel (%p140) target = $region16
      $region15: #{net_forward.6} parent=11 // pred_region
        _
      $region16: #{net_forward.6} parent=11 // pred_fallthru
        _
      // Predicated region
      $region17: #{net_forward.6} parent=11 // pred_check
        %p143 = pneg %p78
      $region18: #{net_forward.6} parent=11 // pred_check_branch
        %145 = sbr.rel (%p143) target = $region20
      $region19: #{net_forward.6} parent=11 // pred_region
        _
      $region20: #{net_forward.6} parent=11 // pred_fallthru
        _
      // Predicated region
      $region21: #{net_forward.6} parent=11 // pred_check
        %p146 = pneg %p99
      $region22: #{net_forward.6} parent=11 // pred_check_branch
        %148 = sbr.rel (%p146) target = $region24
      $region23: #{net_forward.6} parent=11 // pred_region
        _
      $region24: #{net_forward.6} parent=11 // pred_fallthru
        _
    $region12: #{net_forward.6} parent=5 // pred_fallthru
      _
    %p149 = scmp.lt.s32.totalorder %s10, 3
    // Predicated region
    $region25: #{net_forward.6} parent=5 // pred_check
      %p150 = pneg %p149
    $region26: #{net_forward.6} parent=5 // pred_check_branch
      %152 = sbr.rel (%p150) target = $region28
    $region27: #{net_forward.6} parent=5 // pred_region
      // Predicated region
      $region29: #{net_forward.6} parent=27 // pred_check
        %p153 = pneg %p30
      $region30: #{net_forward.6} parent=27 // pred_check_branch
        %155 = sbr.rel (%p153) target = $region32
      $region31: #{net_forward.6} parent=27 // pred_region
        %s156 = smul.u32 16, %s10
        %p157 = scmp.lt.s32.totalorder %s156, 47
        %s158 = scalar_select %p157, %s156, 47
        %s159 = smul.addr %s158, 5
        %s160 = smul.addr %s159, 4
        %s161 = scalar_lea.vmem %s0, %s160
        %s162 = smul.u32 16, %s10
      $region32: #{net_forward.6} parent=27 // pred_fallthru
        _
    $region28: #{net_forward.6} parent=5 // pred_fallthru
      _
    %p163 = scmp.le.s32.totalorder 1, %s10
    %p164 = scmp.lt.s32.totalorder %s10, 4
    %p165 = pnand %p163, %p164
    %p166 = pneg %p165
    // Predicated region
    $region33: #{net_forward.6} parent=5 // pred_check
      _
    $region34: #{net_forward.6} parent=5 // pred_check_branch
      %168 = sbr.rel (%p165) target = $region36
    $region35: #{net_forward.6} parent=5 // pred_region
      %s169 = ssub.s32 %s10, 1
      %s170 = smul.u32 16, %s15
      %p171 = scmp.lt.s32.totalorder %s170, 47
      %s172 = scalar_select %p171, %s170, 47
      %s173 = smul.addr %s172, 5
      %s174 = smul.addr %s173, 4
      %s175 = scalar_lea.vmem %s0, %s174
      %p176 = pneg %p36
      %p177 = pneg %p33
      %p178 = pneg %p57
      %p179 = pneg %p54
      %p180 = pneg %p78
      %p181 = pneg %p75
      %p182 = pneg %p99
      %p183 = pneg %p96
      %p184 = pneg %p125
      %p185 = pneg %p122
      %s186 = smul.u32 16, %s15
      %p187 = scmp.lt.s32.totalorder %s186, 47
      %s188 = scalar_select %p187, %s186, 47
      %s189 = smul.addr %s188, 8
      %s190 = scalar_lea.vmem %s4, %s189
      %s191 = smul.u32 16, %s15
      %p192 = scmp.lt.s32.totalorder %s191, 47
      %s193 = scalar_select %p192, %s191, 47
      %s194 = smul.addr %s193, 5
      %s195 = smul.addr %s194, 4
      %s196 = scalar_lea.vmem %s0, %s195
      %s197 = smul.u32 16, %s15
      %s198 = smul.u32 16, %s15
      %p199 = scmp.lt.s32.totalorder %s198, 47
      %s200 = scalar_select %p199, %s198, 47
      %s201 = smul.addr %s200, 8
      %s202 = scalar_lea.vmem %s4, %s201
      %s203 = smul.u32 16, %s15
      %v205 = vld [vmem:[%s196] sm:$0xff]
      %v206 = vld [vmem:[%s196 + $0x8] sm:$0xff]
      %v207 = vld [vmem:[%s196 + $0x10] sm:$0xf]
      %v208 = vld [vmem:[%s196 + $0x14] sm:$0xff]
      %v209 = vld [vmem:[%s196 + $0x1c] sm:$0xff]
      %v210 = vld [vmem:[%s196 + $0x24] sm:$0xf]
      %v211 = vld [vmem:[%s196 + $0x28] sm:$0xff]
      %v212 = vld [vmem:[%s196 + $0x30] sm:$0xff]
      %v213 = vld [vmem:[%s196 + $0x38] sm:$0xf]
      %v214 = vld [vmem:[%s196 + $0x3c] sm:$0xff]
      %v215 = vld [vmem:[%s196 + $0x44] sm:$0xff]
      %v216 = vld [vmem:[%s196 + $0x4c] sm:$0xf]
      %v217 = vld [vmem:[%s196 + $0x50] sm:$0xff]
      %v218 = vld [vmem:[%s196 + $0x58] sm:$0xff]
      %v219 = vld [vmem:[%s196 + $0x60] sm:$0xf]
      %v220 = vld [vmem:[%s196 + $0x64] sm:$0xff]
      %v221 = vld [vmem:[%s196 + $0x6c] sm:$0xff]
      %v222 = vld [vmem:[%s196 + $0x74] sm:$0xf]
      %v223 = vld [vmem:[%s196 + $0x78] sm:$0xff]
      %v224 = vld [vmem:[%s196 + $0x80] sm:$0xff]
      %v225 = vld [vmem:[%s196 + $0x88] sm:$0xf]
      %v226 = vld [vmem:[%s196 + $0x8c] sm:$0xff]
      %v227 = vld [vmem:[%s196 + $0x94] sm:$0xff]
      %v228 = vld [vmem:[%s196 + $0x9c] sm:$0xf]
      %v229 = vld [vmem:[%s196 + $0xa0] sm:$0xff]
      %v230 = vld [vmem:[%s196 + $0xa8] sm:$0xff]
      %v231 = vld [vmem:[%s196 + $0xb0] sm:$0xf]
      %v232 = vld [vmem:[%s196 + $0xb4] sm:$0xff]
      %v233 = vld [vmem:[%s196 + $0xbc] sm:$0xff]
      %v234 = vld [vmem:[%s196 + $0xc4] sm:$0xf]
      %v235 = vld [vmem:[%s196 + $0xc8] sm:$0xff]
      %v236 = vld [vmem:[%s196 + $0xd0] sm:$0xff]
      %v237 = vld [vmem:[%s196 + $0xd8] sm:$0xf]
      %v238 = vld [vmem:[%s196 + $0xdc] sm:$0xff]
      %v239 = vld [vmem:[%s196 + $0xe4] sm:$0xff]
      %v240 = vld [vmem:[%s196 + $0xec] sm:$0xf]
      %v241 = vld [vmem:[%s196 + $0xf0] sm:$0xff]
      %v242 = vld [vmem:[%s196 + $0xf8] sm:$0xff]
      %v243 = vld [vmem:[%s196 + $0x100] sm:$0xf]
      %v244 = vld [vmem:[%s196 + $0x104] sm:$0xff]
      %v245 = vld [vmem:[%s196 + $0x10c] sm:$0xff]
      %v246 = vld [vmem:[%s196 + $0x114] sm:$0xf]
      %v247 = vld [vmem:[%s196 + $0x118] sm:$0xff]
      %v248 = vld [vmem:[%s196 + $0x120] sm:$0xff]
      %v249 = vld [vmem:[%s196 + $0x128] sm:$0xf]
      %v250 = vld [vmem:[%s196 + $0x12c] sm:$0xff]
      %v251 = vld [vmem:[%s196 + $0x134] sm:$0xff]
      %v252 = vld [vmem:[%s196 + $0x13c] sm:$0xf]
      %v253 = vld [vmem:[%s1] sm:$0xf]
      %v254 = vld [vmem:[%s1 + $0x4] sm:$0xf]
      %v255 = vld [vmem:[%s1 + $0x8] sm:$0xf]
      %v256 = vld [vmem:[%s1 + $0xc] sm:$0xf]
      %v257 = vld [vmem:[%s1 + $0x10] sm:$0xf]
      %v258 = vld [vmem:[%s1 + $0x14] sm:$0xf]
      %v259 = vld [vmem:[%s1 + $0x18] sm:$0xf]
      %v260 = vld [vmem:[%s1 + $0x1c] sm:$0xf]
      %v261 = vld [vmem:[%s1 + $0x20] sm:$0xf]
      %v262 = vld [vmem:[%s1 + $0x24] sm:$0xf]
      %v263 = vld [vmem:[%s1 + $0x28] sm:$0xf]
      %v264 = vld [vmem:[%s1 + $0x2c] sm:$0xf]
      %v265 = vld [vmem:[%s1 + $0x30] sm:$0xf]
      %v266 = vld [vmem:[%s1 + $0x34] sm:$0xf]
      %v267 = vld [vmem:[%s1 + $0x38] sm:$0xf]
      %v268 = vld [vmem:[%s1 + $0x3c] sm:$0xf]
      %v269 = vld [vmem:[%s1 + $0x40] sm:$0xf]
      %v270 = vld [vmem:[%s1 + $0x44] sm:$0xf]
      %v271 = vld [vmem:[%s1 + $0x48] sm:$0xf]
      %v272 = vld [vmem:[%s1 + $0x4c] sm:$0xf]
      %v273 = vld [vmem:[%s1 + $0x50] sm:$0xf]
      %v274 = vld [vmem:[%s1 + $0x54] sm:$0xf]
      %v275 = vld [vmem:[%s1 + $0x58] sm:$0xf]
      %v276 = vld [vmem:[%s1 + $0x5c] sm:$0xf]
      %v277 = vld [vmem:[%s1 + $0x60] sm:$0xf]
      %v278 = vld [vmem:[%s1 + $0x64] sm:$0xf]
      %v279 = vld [vmem:[%s1 + $0x68] sm:$0xf]
      %v280 = vld [vmem:[%s1 + $0x6c] sm:$0xf]
      %v281 = vld [vmem:[%s1 + $0x70] sm:$0xf]
      %v282 = vld [vmem:[%s1 + $0x74] sm:$0xf]
      %v283 = vld [vmem:[%s1 + $0x78] sm:$0xf]
      %v284 = vld [vmem:[%s1 + $0x7c] sm:$0xf]
      %v285 = vld [vmem:[%s1 + $0x80] sm:$0xf]
      %v286 = vld [vmem:[%s1 + $0x84] sm:$0xf]
      %v287 = vld [vmem:[%s1 + $0x88] sm:$0xf]
      %v288 = vld [vmem:[%s1 + $0x8c] sm:$0xf]
      %v289 = vld [vmem:[%s1 + $0x90] sm:$0xf]
      %v290 = vld [vmem:[%s1 + $0x94] sm:$0xf]
      %v291 = vld [vmem:[%s1 + $0x98] sm:$0xf]
      %v292 = vld [vmem:[%s1 + $0x9c] sm:$0xf]
      %v293 = vld [vmem:[%s1 + $0xa0] sm:$0xf]
      %v294 = vld [vmem:[%s1 + $0xa4] sm:$0xf]
      %v295 = vld [vmem:[%s1 + $0xa8] sm:$0xf]
      %v296 = vld [vmem:[%s1 + $0xac] sm:$0xf]
      %v297 = vld [vmem:[%s1 + $0xb0] sm:$0xf]
      %v298 = vld [vmem:[%s1 + $0xb4] sm:$0xf]
      %v299 = vld [vmem:[%s1 + $0xb8] sm:$0xf]
      %v300 = vld [vmem:[%s1 + $0xbc] sm:$0xf]
      %v301 = vld [vmem:[%s1 + $0xc0] sm:$0xf]
      %v302 = vld [vmem:[%s1 + $0xc4] sm:$0xf]
      %v303 = vld [vmem:[%s1 + $0xc8] sm:$0xf]
      %v304 = vld [vmem:[%s1 + $0xcc] sm:$0xf]
      %v305 = vld [vmem:[%s1 + $0xd0] sm:$0xf]
      %v306 = vld [vmem:[%s1 + $0xd4] sm:$0xf]
      %v307 = vld [vmem:[%s1 + $0xd8] sm:$0xf]
      %v308 = vld [vmem:[%s1 + $0xdc] sm:$0xf]
      %v309 = vld [vmem:[%s1 + $0xe0] sm:$0xf]
      %v310 = vld [vmem:[%s1 + $0xe4] sm:$0xf]
      %v311 = vld [vmem:[%s1 + $0xe8] sm:$0xf]
      %v312 = vld [vmem:[%s1 + $0xec] sm:$0xf]
      %v313 = vld [vmem:[%s1 + $0xf0] sm:$0xf]
      %v314 = vld [vmem:[%s1 + $0xf4] sm:$0xf]
      %v315 = vld [vmem:[%s1 + $0xf8] sm:$0xf]
      %v316 = vld [vmem:[%s1 + $0xfc] sm:$0xf]
      %v317 = vld [vmem:[%s1 + $0x100] sm:$0xf]
      %v318 = vld [vmem:[%s1 + $0x104] sm:$0xf]
      %v319 = vld [vmem:[%s1 + $0x108] sm:$0xf]
      %v320 = vld [vmem:[%s1 + $0x10c] sm:$0xf]
      %v321 = vld [vmem:[%s1 + $0x110] sm:$0xf]
      %v322 = vld [vmem:[%s1 + $0x114] sm:$0xf]
      %v323 = vld [vmem:[%s1 + $0x118] sm:$0xf]
      %v324 = vld [vmem:[%s1 + $0x11c] sm:$0xf]
      %v373 = vunpack.c.l.b16 %v205
      %v374 = vunpack.c.h.b16 %v205
      %v375 = vunpack.c.l.b16 %v206
      %v376 = vunpack.c.h.b16 %v206
      %v377 = vunpack.c.l.b16 %v207
      %v378 = vunpack.c.l.b16 %v208
      %v379 = vunpack.c.h.b16 %v208
      %v380 = vunpack.c.l.b16 %v209
      %v381 = vunpack.c.h.b16 %v209
      %v382 = vunpack.c.l.b16 %v210
      %v383 = vunpack.c.l.b16 %v211
      %v384 = vunpack.c.h.b16 %v211
      %v385 = vunpack.c.l.b16 %v212
      %v386 = vunpack.c.h.b16 %v212
      %v387 = vunpack.c.l.b16 %v213
      %v388 = vunpack.c.l.b16 %v214
      %v389 = vunpack.c.h.b16 %v214
      %v390 = vunpack.c.l.b16 %v215
      %v391 = vunpack.c.h.b16 %v215
      %v392 = vunpack.c.l.b16 %v216
      %v393 = vunpack.c.l.b16 %v217
      %v394 = vunpack.c.h.b16 %v217
      %v395 = vunpack.c.l.b16 %v218
      %v396 = vunpack.c.h.b16 %v218
      %v397 = vunpack.c.l.b16 %v219
      %v398 = vunpack.c.l.b16 %v220
      %v399 = vunpack.c.h.b16 %v220
      %v400 = vunpack.c.l.b16 %v221
      %v401 = vunpack.c.h.b16 %v221
      %v402 = vunpack.c.l.b16 %v222
      %v403 = vunpack.c.l.b16 %v223
      %v404 = vunpack.c.h.b16 %v223
      %v405 = vunpack.c.l.b16 %v224
      %v406 = vunpack.c.h.b16 %v224
      %v407 = vunpack.c.l.b16 %v225
      %v408 = vunpack.c.l.b16 %v226
      %v409 = vunpack.c.h.b16 %v226
      %v410 = vunpack.c.l.b16 %v227
      %v411 = vunpack.c.h.b16 %v227
      %v412 = vunpack.c.l.b16 %v228
      %v413 = vunpack.c.l.b16 %v229
      %v414 = vunpack.c.h.b16 %v229
      %v415 = vunpack.c.l.b16 %v230
      %v416 = vunpack.c.h.b16 %v230
      %v417 = vunpack.c.l.b16 %v231
      %v418 = vunpack.c.l.b16 %v232
      %v419 = vunpack.c.h.b16 %v232
      %v420 = vunpack.c.l.b16 %v233
      %v421 = vunpack.c.h.b16 %v233
      %v422 = vunpack.c.l.b16 %v234
      %v423 = vunpack.c.l.b16 %v235
      %v424 = vunpack.c.h.b16 %v235
      %v425 = vunpack.c.l.b16 %v236
      %v426 = vunpack.c.h.b16 %v236
      %v427 = vunpack.c.l.b16 %v237
      %v428 = vunpack.c.l.b16 %v238
      %v429 = vunpack.c.h.b16 %v238
      %v430 = vunpack.c.l.b16 %v239
      %v431 = vunpack.c.h.b16 %v239
      %v432 = vunpack.c.l.b16 %v240
      %v433 = vunpack.c.l.b16 %v241
      %v434 = vunpack.c.h.b16 %v241
      %v435 = vunpack.c.l.b16 %v242
      %v436 = vunpack.c.h.b16 %v242
      %v437 = vunpack.c.l.b16 %v243
      %v438 = vunpack.c.l.b16 %v244
      %v439 = vunpack.c.h.b16 %v244
      %v440 = vunpack.c.l.b16 %v245
      %v441 = vunpack.c.h.b16 %v245
      %v442 = vunpack.c.l.b16 %v246
      %v443 = vunpack.c.l.b16 %v247
      %v444 = vunpack.c.h.b16 %v247
      %v445 = vunpack.c.l.b16 %v248
      %v446 = vunpack.c.h.b16 %v248
      %v447 = vunpack.c.l.b16 %v249
      %v448 = vunpack.c.l.b16 %v250
      %v449 = vunpack.c.h.b16 %v250
      %v450 = vunpack.c.l.b16 %v251
      %v451 = vunpack.c.h.b16 %v251
      %v452 = vunpack.c.l.b16 %v252
      %v453 = vpack.c.b16 %v378, %v373
      %v454 = vpack.c.b16 %v379, %v374
      %v455 = vpack.c.b16 %v380, %v375
      %v456 = vpack.c.b16 %v381, %v376
      %v457 = vpack.c.b16 %v382, %v377
      %v458 = vpack.c.b16 %v388, %v383
      %v459 = vpack.c.b16 %v389, %v384
      %v460 = vpack.c.b16 %v390, %v385
      %v461 = vpack.c.b16 %v391, %v386
      %v462 = vpack.c.b16 %v392, %v387
      %v463 = vpack.c.b16 %v398, %v393
      %v464 = vpack.c.b16 %v399, %v394
      %v465 = vpack.c.b16 %v400, %v395
      %v466 = vpack.c.b16 %v401, %v396
      %v467 = vpack.c.b16 %v402, %v397
      %v468 = vpack.c.b16 %v408, %v403
      %v469 = vpack.c.b16 %v409, %v404
      %v470 = vpack.c.b16 %v410, %v405
      %v471 = vpack.c.b16 %v411, %v406
      %v472 = vpack.c.b16 %v412, %v407
      %v473 = vpack.c.b16 %v418, %v413
      %v474 = vpack.c.b16 %v419, %v414
      %v475 = vpack.c.b16 %v420, %v415
      %v476 = vpack.c.b16 %v421, %v416
      %v477 = vpack.c.b16 %v422, %v417
      %v478 = vpack.c.b16 %v428, %v423
      %v479 = vpack.c.b16 %v429, %v424
      %v480 = vpack.c.b16 %v430, %v425
      %v481 = vpack.c.b16 %v431, %v426
      %v482 = vpack.c.b16 %v432, %v427
      %v483 = vpack.c.b16 %v438, %v433
      %v484 = vpack.c.b16 %v439, %v434
      %v485 = vpack.c.b16 %v440, %v435
      %v486 = vpack.c.b16 %v441, %v436
      %v487 = vpack.c.b16 %v442, %v437
      %v488 = vpack.c.b16 %v448, %v443
      %v489 = vpack.c.b16 %v449, %v444
      %v490 = vpack.c.b16 %v450, %v445
      %v491 = vpack.c.b16 %v451, %v446
      %v492 = vpack.c.b16 %v452, %v447
      %v597 = vunpack.c.l.b16 %v253
      %v598 = vunpack.c.l.b16 %v254
      %v599 = vunpack.c.l.b16 %v255
      %v600 = vunpack.c.l.b16 %v256
      %v601 = vunpack.c.l.b16 %v257
      %v602 = vunpack.c.l.b16 %v258
      %v603 = vunpack.c.l.b16 %v259
      %v604 = vunpack.c.l.b16 %v260
      %v605 = vunpack.c.l.b16 %v261
      %v606 = vunpack.c.l.b16 %v262
      %v607 = vunpack.c.l.b16 %v263
      %v608 = vunpack.c.l.b16 %v264
      %v609 = vunpack.c.l.b16 %v265
      %v610 = vunpack.c.l.b16 %v266
      %v611 = vunpack.c.l.b16 %v267
      %v612 = vunpack.c.l.b16 %v268
      %v613 = vunpack.c.l.b16 %v269
      %v614 = vunpack.c.l.b16 %v270
      %v615 = vunpack.c.l.b16 %v271
      %v616 = vunpack.c.l.b16 %v272
      %v617 = vunpack.c.l.b16 %v273
      %v618 = vunpack.c.l.b16 %v274
      %v619 = vunpack.c.l.b16 %v275
      %v620 = vunpack.c.l.b16 %v276
      %v621 = vunpack.c.l.b16 %v277
      %v622 = vunpack.c.l.b16 %v278
      %v623 = vunpack.c.l.b16 %v279
      %v624 = vunpack.c.l.b16 %v280
      %v625 = vunpack.c.l.b16 %v281
      %v626 = vunpack.c.l.b16 %v282
      %v627 = vunpack.c.l.b16 %v283
      %v628 = vunpack.c.l.b16 %v284
      %v629 = vunpack.c.l.b16 %v285
      %v630 = vunpack.c.l.b16 %v286
      %v631 = vunpack.c.l.b16 %v287
      %v632 = vunpack.c.l.b16 %v288
      %v633 = vunpack.c.l.b16 %v289
      %v634 = vunpack.c.l.b16 %v290
      %v635 = vunpack.c.l.b16 %v291
      %v636 = vunpack.c.l.b16 %v292
      %v637 = vunpack.c.l.b16 %v293
      %v638 = vunpack.c.l.b16 %v294
      %v639 = vunpack.c.l.b16 %v295
      %v640 = vunpack.c.l.b16 %v296
      %v641 = vunpack.c.l.b16 %v297
      %v642 = vunpack.c.l.b16 %v298
      %v643 = vunpack.c.l.b16 %v299
      %v644 = vunpack.c.l.b16 %v300
      %v645 = vunpack.c.l.b16 %v301
      %v646 = vunpack.c.l.b16 %v302
      %v647 = vunpack.c.l.b16 %v303
      %v648 = vunpack.c.l.b16 %v304
      %v649 = vunpack.c.l.b16 %v305
      %v650 = vunpack.c.l.b16 %v306
      %v651 = vunpack.c.l.b16 %v307
      %v652 = vunpack.c.l.b16 %v308
      %v653 = vunpack.c.l.b16 %v309
      %v654 = vunpack.c.l.b16 %v310
      %v655 = vunpack.c.l.b16 %v311
      %v656 = vunpack.c.l.b16 %v312
      %v657 = vunpack.c.l.b16 %v313
      %v658 = vunpack.c.l.b16 %v314
      %v659 = vunpack.c.l.b16 %v315
      %v660 = vunpack.c.l.b16 %v316
      %v661 = vunpack.c.l.b16 %v317
      %v662 = vunpack.c.l.b16 %v318
      %v663 = vunpack.c.l.b16 %v319
      %v664 = vunpack.c.l.b16 %v320
      %v665 = vunpack.c.l.b16 %v321
      %v666 = vunpack.c.l.b16 %v322
      %v667 = vunpack.c.l.b16 %v323
      %v668 = vunpack.c.l.b16 %v324
      %v669 = vpack.c.b16 %v598, %v597
      %v670 = vpack.c.b16 %v600, %v599
      %v671 = vpack.c.b16 %v602, %v601
      %v672 = vpack.c.b16 %v604, %v603
      %v673 = vpack.c.b16 %v606, %v605
      %v674 = vpack.c.b16 %v608, %v607
      %v675 = vpack.c.b16 %v610, %v609
      %v676 = vpack.c.b16 %v612, %v611
      %v677 = vpack.c.b16 %v614, %v613
      %v678 = vpack.c.b16 %v616, %v615
      %v679 = vpack.c.b16 %v618, %v617
      %v680 = vpack.c.b16 %v620, %v619
      %v681 = vpack.c.b16 %v622, %v621
      %v682 = vpack.c.b16 %v624, %v623
      %v683 = vpack.c.b16 %v626, %v625
      %v684 = vpack.c.b16 %v628, %v627
      %v685 = vpack.c.b16 %v630, %v629
      %v686 = vpack.c.b16 %v632, %v631
      %v687 = vpack.c.b16 %v634, %v633
      %v688 = vpack.c.b16 %v636, %v635
      %v689 = vpack.c.b16 %v638, %v637
      %v690 = vpack.c.b16 %v640, %v639
      %v691 = vpack.c.b16 %v642, %v641
      %v692 = vpack.c.b16 %v644, %v643
      %v693 = vpack.c.b16 %v646, %v645
      %v694 = vpack.c.b16 %v648, %v647
      %v695 = vpack.c.b16 %v650, %v649
      %v696 = vpack.c.b16 %v652, %v651
      %v697 = vpack.c.b16 %v654, %v653
      %v698 = vpack.c.b16 %v656, %v655
      %v699 = vpack.c.b16 %v658, %v657
      %v700 = vpack.c.b16 %v660, %v659
      %v701 = vpack.c.b16 %v662, %v661
      %v702 = vpack.c.b16 %v664, %v663
      %v703 = vpack.c.b16 %v666, %v665
      %v704 = vpack.c.b16 %v668, %v667
      %vm741 = vcmask 523264
      %v743 = vsel %vm741, %v457, 0
      %v746 = vsel %vm741, %v462, 0
      %v749 = vsel %vm741, %v467, 0
      %v752 = vsel %vm741, %v472, 0
      %v755 = vsel %vm741, %v477, 0
      %v758 = vsel %vm741, %v482, 0
      %v761 = vsel %vm741, %v487, 0
      %v764 = vsel %vm741, %v492, 0
      %766 = vmatprep.subr.bf16.mxu0 0
      %767 = vmatpush1.bf16.msra.mxu0 %v676
      %768 = vmatprep.subr.bf16.mxu0 0
      %769 = vmatpush1.bf16.msra.mxu0 %v675
      %770 = vmatprep.subr.bf16.mxu0 0
      %771 = vmatpush1.bf16.msra.mxu0 %v674
      %772 = vmatprep.subr.bf16.mxu0 0
      %773 = vmatpush1.bf16.msra.mxu0 %v673
      %774 = vmatprep.subr.bf16.mxu0 0
      %775 = vmatpush1.bf16.msra.mxu0 %v672
      %776 = vmatprep.subr.bf16.mxu0 0
      %777 = vmatpush1.bf16.msra.mxu0 %v671
      %778 = vmatprep.subr.bf16.mxu0 0
      %779 = vmatpush1.bf16.msra.mxu0 %v670
      %780 = vmatprep.subr.bf16.mxu0 0
      %781 = vmatpush1.bf16.msra.mxu0 %v669
      %782 = vmatprep.subr.bf16.mxu0 0
      %783 = vmatpush2.bf16.msra.mxu0 %v684
      %784 = vmatprep.subr.bf16.mxu0 0
      %785 = vmatpush2.bf16.msra.mxu0 %v683
      %786 = vmatprep.subr.bf16.mxu0 0
      %787 = vmatpush2.bf16.msra.mxu0 %v682
      %788 = vmatprep.subr.bf16.mxu0 0
      %789 = vmatpush2.bf16.msra.mxu0 %v681
      %790 = vmatprep.subr.bf16.mxu0 0
      %791 = vmatpush2.bf16.msra.mxu0 %v680
      %792 = vmatprep.subr.bf16.mxu0 0
      %793 = vmatpush2.bf16.msra.mxu0 %v679
      %794 = vmatprep.subr.bf16.mxu0 0
      %795 = vmatpush2.bf16.msra.mxu0 %v678
      %796 = vmatprep.subr.bf16.mxu0 0
      %797 = vmatpush2.bf16.msra.mxu0 %v677
      %798 = vmatprep.mubr.bf16.mxu0 %v454
      %799 = vmatmul.mubr.bf16.gmra.mxu0 %v453
      %v800 = vpop.f32.mrf.mxu0
      %v801 = vadd.f32 0.0, %v800
      %v802 = vpop.f32.mrf.mxu0
      %v803 = vpop.f32.mrf.mxu0
      %v804 = vadd.f32 0.0, %v803
      %v805 = vpop.f32.mrf.mxu0
      %806 = vmatprep.mubr.bf16.mxu0 %v459
      %807 = vmatmul.mubr.bf16.gmra.mxu0 %v458
      %v808 = vpop.f32.mrf.mxu0
      %v809 = vadd.f32 0.0, %v808
      %v810 = vpop.f32.mrf.mxu0
      %v811 = vpop.f32.mrf.mxu0
      %v812 = vadd.f32 0.0, %v811
      %v813 = vpop.f32.mrf.mxu0
      %814 = vmatprep.mubr.bf16.mxu0 %v464
      %815 = vmatmul.mubr.bf16.gmra.mxu0 %v463
      %v816 = vpop.f32.mrf.mxu0
      %v817 = vadd.f32 0.0, %v816
      %v818 = vpop.f32.mrf.mxu0
      %v819 = vpop.f32.mrf.mxu0
      %v820 = vadd.f32 0.0, %v819
      %v821 = vpop.f32.mrf.mxu0
      %822 = vmatprep.mubr.bf16.mxu0 %v469
      %823 = vmatmul.mubr.bf16.gmra.mxu0 %v468
      %v824 = vpop.f32.mrf.mxu0
      %v825 = vadd.f32 0.0, %v824
      %v826 = vpop.f32.mrf.mxu0
      %v827 = vpop.f32.mrf.mxu0
      %v828 = vadd.f32 0.0, %v827
      %v829 = vpop.f32.mrf.mxu0
      %830 = vmatprep.mubr.bf16.mxu0 %v474
      %831 = vmatmul.mubr.bf16.gmra.mxu0 %v473
      %v832 = vpop.f32.mrf.mxu0
      %v833 = vadd.f32 0.0, %v832
      %v834 = vpop.f32.mrf.mxu0
      %v835 = vpop.f32.mrf.mxu0
      %v836 = vadd.f32 0.0, %v835
      %v837 = vpop.f32.mrf.mxu0
      %838 = vmatprep.mubr.bf16.mxu0 %v479
      %839 = vmatmul.mubr.bf16.gmra.mxu0 %v478
      %v840 = vpop.f32.mrf.mxu0
      %v841 = vadd.f32 0.0, %v840
      %v842 = vpop.f32.mrf.mxu0
      %v843 = vpop.f32.mrf.mxu0
      %v844 = vadd.f32 0.0, %v843
      %v845 = vpop.f32.mrf.mxu0
      %846 = vmatprep.mubr.bf16.mxu0 %v484
      %847 = vmatmul.mubr.bf16.gmra.mxu0 %v483
      %v848 = vpop.f32.mrf.mxu0
      %v849 = vadd.f32 0.0, %v848
      %v850 = vpop.f32.mrf.mxu0
      %v851 = vpop.f32.mrf.mxu0
      %v852 = vadd.f32 0.0, %v851
      %v853 = vpop.f32.mrf.mxu0
      %854 = vmatprep.mubr.bf16.mxu0 %v489
      %855 = vmatmul.mubr.bf16.gmra.mxu0 %v488
      %v856 = vpop.f32.mrf.mxu0
      %v857 = vadd.f32 0.0, %v856
      %v858 = vpop.f32.mrf.mxu0
      %v859 = vpop.f32.mrf.mxu0
      %v860 = vadd.f32 0.0, %v859
      %v861 = vpop.f32.mrf.mxu0
      %862 = vdwg.mxu0
      %863 = vmatprep.subr.bf16.mxu0 0
      %864 = vmatpush1.bf16.msra.mxu0 %v692
      %865 = vmatprep.subr.bf16.mxu0 0
      %866 = vmatpush1.bf16.msra.mxu0 %v691
      %867 = vmatprep.subr.bf16.mxu0 0
      %868 = vmatpush1.bf16.msra.mxu0 %v690
      %869 = vmatprep.subr.bf16.mxu0 0
      %870 = vmatpush1.bf16.msra.mxu0 %v689
      %871 = vmatprep.subr.bf16.mxu0 0
      %872 = vmatpush1.bf16.msra.mxu0 %v688
      %873 = vmatprep.subr.bf16.mxu0 0
      %874 = vmatpush1.bf16.msra.mxu0 %v687
      %875 = vmatprep.subr.bf16.mxu0 0
      %876 = vmatpush1.bf16.msra.mxu0 %v686
      %877 = vmatprep.subr.bf16.mxu0 0
      %878 = vmatpush1.bf16.msra.mxu0 %v685
      %879 = vmatprep.subr.bf16.mxu0 0
      %880 = vmatpush2.bf16.msra.mxu0 %v700
      %881 = vmatprep.subr.bf16.mxu0 0
      %882 = vmatpush2.bf16.msra.mxu0 %v699
      %883 = vmatprep.subr.bf16.mxu0 0
      %884 = vmatpush2.bf16.msra.mxu0 %v698
      %885 = vmatprep.subr.bf16.mxu0 0
      %886 = vmatpush2.bf16.msra.mxu0 %v697
      %887 = vmatprep.subr.bf16.mxu0 0
      %888 = vmatpush2.bf16.msra.mxu0 %v696
      %889 = vmatprep.subr.bf16.mxu0 0
      %890 = vmatpush2.bf16.msra.mxu0 %v695
      %891 = vmatprep.subr.bf16.mxu0 0
      %892 = vmatpush2.bf16.msra.mxu0 %v694
      %893 = vmatprep.subr.bf16.mxu0 0
      %894 = vmatpush2.bf16.msra.mxu0 %v693
      %895 = vmatprep.mubr.bf16.mxu0 %v456
      %896 = vmatmul.mubr.bf16.gmra.mxu0 %v455
      %v897 = vpop.f32.mrf.mxu0
      %v898 = vadd.f32 %v801, %v897
      %v899 = vpop.f32.mrf.mxu0
      %v900 = vpop.f32.mrf.mxu0
      %v901 = vadd.f32 %v804, %v900
      %v902 = vpop.f32.mrf.mxu0
      %903 = vmatprep.mubr.bf16.mxu0 %v461
      %904 = vmatmul.mubr.bf16.gmra.mxu0 %v460
      %v905 = vpop.f32.mrf.mxu0
      %v906 = vadd.f32 %v809, %v905
      %v907 = vpop.f32.mrf.mxu0
      %v908 = vpop.f32.mrf.mxu0
      %v909 = vadd.f32 %v812, %v908
      %v910 = vpop.f32.mrf.mxu0
      %911 = vmatprep.mubr.bf16.mxu0 %v466
      %912 = vmatmul.mubr.bf16.gmra.mxu0 %v465
      %v913 = vpop.f32.mrf.mxu0
      %v914 = vadd.f32 %v817, %v913
      %v915 = vpop.f32.mrf.mxu0
      %v916 = vpop.f32.mrf.mxu0
      %v917 = vadd.f32 %v820, %v916
      %v918 = vpop.f32.mrf.mxu0
      %919 = vmatprep.mubr.bf16.mxu0 %v471
      %920 = vmatmul.mubr.bf16.gmra.mxu0 %v470
      %v921 = vpop.f32.mrf.mxu0
      %v922 = vadd.f32 %v825, %v921
      %v923 = vpop.f32.mrf.mxu0
      %v924 = vpop.f32.mrf.mxu0
      %v925 = vadd.f32 %v828, %v924
      %v926 = vpop.f32.mrf.mxu0
      %927 = vmatprep.mubr.bf16.mxu0 %v476
      %928 = vmatmul.mubr.bf16.gmra.mxu0 %v475
      %v929 = vpop.f32.mrf.mxu0
      %v930 = vadd.f32 %v833, %v929
      %v931 = vpop.f32.mrf.mxu0
      %v932 = vpop.f32.mrf.mxu0
      %v933 = vadd.f32 %v836, %v932
      %v934 = vpop.f32.mrf.mxu0
      %935 = vmatprep.mubr.bf16.mxu0 %v481
      %936 = vmatmul.mubr.bf16.gmra.mxu0 %v480
      %v937 = vpop.f32.mrf.mxu0
      %v938 = vadd.f32 %v841, %v937
      %v939 = vpop.f32.mrf.mxu0
      %v940 = vpop.f32.mrf.mxu0
      %v941 = vadd.f32 %v844, %v940
      %v942 = vpop.f32.mrf.mxu0
      %943 = vmatprep.mubr.bf16.mxu0 %v486
      %944 = vmatmul.mubr.bf16.gmra.mxu0 %v485
      %v945 = vpop.f32.mrf.mxu0
      %v946 = vadd.f32 %v849, %v945
      %v947 = vpop.f32.mrf.mxu0
      %v948 = vpop.f32.mrf.mxu0
      %v949 = vadd.f32 %v852, %v948
      %v950 = vpop.f32.mrf.mxu0
      %951 = vmatprep.mubr.bf16.mxu0 %v491
      %952 = vmatmul.mubr.bf16.gmra.mxu0 %v490
      %v953 = vpop.f32.mrf.mxu0
      %v954 = vadd.f32 %v857, %v953
      %v955 = vpop.f32.mrf.mxu0
      %v956 = vpop.f32.mrf.mxu0
      %v957 = vadd.f32 %v860, %v956
      %v958 = vpop.f32.mrf.mxu0
      %959 = vdwg.mxu0
      %960 = vmatprep.subr.bf16.mxu0 0
      %961 = vmatpush1.bf16.msra.mxu0 0
      %962 = vmatprep.subr.bf16.mxu0 0
      %963 = vmatpush1.bf16.msra.mxu0 0
      %964 = vmatprep.subr.bf16.mxu0 0
      %965 = vmatpush1.bf16.msra.mxu0 0
      %966 = vmatprep.subr.bf16.mxu0 0
      %967 = vmatpush1.bf16.msra.mxu0 0
      %968 = vmatprep.subr.bf16.mxu0 0
      %969 = vmatpush1.bf16.msra.mxu0 %v704
      %970 = vmatprep.subr.bf16.mxu0 0
      %971 = vmatpush1.bf16.msra.mxu0 %v703
      %972 = vmatprep.subr.bf16.mxu0 0
      %973 = vmatpush1.bf16.msra.mxu0 %v702
      %974 = vmatprep.subr.bf16.mxu0 0
      %975 = vmatpush1.bf16.msra.mxu0 %v701
      %976 = vmatprep.subr.bf16.mxu0 0
      %977 = vmatpush2.bf16.msra.mxu0 0
      %978 = vmatprep.subr.bf16.mxu0 0
      %979 = vmatpush2.bf16.msra.mxu0 0
      %980 = vmatprep.subr.bf16.mxu0 0
      %981 = vmatpush2.bf16.msra.mxu0 0
      %982 = vmatprep.subr.bf16.mxu0 0
      %983 = vmatpush2.bf16.msra.mxu0 0
      %984 = vmatprep.subr.bf16.mxu0 0
      %985 = vmatpush2.bf16.msra.mxu0 0
      %986 = vmatprep.subr.bf16.mxu0 0
      %987 = vmatpush2.bf16.msra.mxu0 0
      %988 = vmatprep.subr.bf16.mxu0 0
      %989 = vmatpush2.bf16.msra.mxu0 0
      %990 = vmatprep.subr.bf16.mxu0 0
      %991 = vmatpush2.bf16.msra.mxu0 0
      %992 = vmatprep.mubr.bf16.mxu0 0
      %993 = vmatmul.mubr.bf16.gmra.mxu0 %v743
      %v994 = vpop.f32.mrf.mxu0
      %v995 = vadd.f32 %v898, %v994
      %v996 = vpop.f32.mrf.mxu0
      %v997 = vpop.f32.mrf.mxu0
      %v998 = vadd.f32 %v901, %v997
      %v999 = vpop.f32.mrf.mxu0
      %1000 = vmatprep.mubr.bf16.mxu0 0
      %1001 = vmatmul.mubr.bf16.gmra.mxu0 %v746
      %v1002 = vpop.f32.mrf.mxu0
      %v1003 = vadd.f32 %v906, %v1002
      %v1004 = vpop.f32.mrf.mxu0
      %v1005 = vpop.f32.mrf.mxu0
      %v1006 = vadd.f32 %v909, %v1005
      %v1007 = vpop.f32.mrf.mxu0
      %1008 = vmatprep.mubr.bf16.mxu0 0
      %1009 = vmatmul.mubr.bf16.gmra.mxu0 %v749
      %v1010 = vpop.f32.mrf.mxu0
      %v1011 = vadd.f32 %v914, %v1010
      %v1012 = vpop.f32.mrf.mxu0
      %v1013 = vpop.f32.mrf.mxu0
      %v1014 = vadd.f32 %v917, %v1013
      %v1015 = vpop.f32.mrf.mxu0
      %1016 = vmatprep.mubr.bf16.mxu0 0
      %1017 = vmatmul.mubr.bf16.gmra.mxu0 %v752
      %v1018 = vpop.f32.mrf.mxu0
      %v1019 = vadd.f32 %v922, %v1018
      %v1020 = vpop.f32.mrf.mxu0
      %v1021 = vpop.f32.mrf.mxu0
      %v1022 = vadd.f32 %v925, %v1021
      %v1023 = vpop.f32.mrf.mxu0
      %1024 = vmatprep.mubr.bf16.mxu0 0
      %1025 = vmatmul.mubr.bf16.gmra.mxu0 %v755
      %v1026 = vpop.f32.mrf.mxu0
      %v1027 = vadd.f32 %v930, %v1026
      %v1028 = vpop.f32.mrf.mxu0
      %v1029 = vpop.f32.mrf.mxu0
      %v1030 = vadd.f32 %v933, %v1029
      %v1031 = vpop.f32.mrf.mxu0
      %1032 = vmatprep.mubr.bf16.mxu0 0
      %1033 = vmatmul.mubr.bf16.gmra.mxu0 %v758
      %v1034 = vpop.f32.mrf.mxu0
      %v1035 = vadd.f32 %v938, %v1034
      %v1036 = vpop.f32.mrf.mxu0
      %v1037 = vpop.f32.mrf.mxu0
      %v1038 = vadd.f32 %v941, %v1037
      %v1039 = vpop.f32.mrf.mxu0
      %1040 = vmatprep.mubr.bf16.mxu0 0
      %1041 = vmatmul.mubr.bf16.gmra.mxu0 %v761
      %v1042 = vpop.f32.mrf.mxu0
      %v1043 = vadd.f32 %v946, %v1042
      %v1044 = vpop.f32.mrf.mxu0
      %v1045 = vpop.f32.mrf.mxu0
      %v1046 = vadd.f32 %v949, %v1045
      %v1047 = vpop.f32.mrf.mxu0
      %1048 = vmatprep.mubr.bf16.mxu0 0
      %1049 = vmatmul.mubr.bf16.gmra.mxu0 %v764
      %v1050 = vpop.f32.mrf.mxu0
      %v1051 = vadd.f32 %v954, %v1050
      %v1052 = vpop.f32.mrf.mxu0
      %v1053 = vpop.f32.mrf.mxu0
      %v1054 = vadd.f32 %v957, %v1053
      %v1055 = vpop.f32.mrf.mxu0
      %1056 = vdwg.mxu0
      %v1057 = vld [vmem:[%s2] sm:$0x1]
      %v1059 = vlaneseq
      %v1060 = vshrl.u32 %v1059, 7
      %v1061 = vsub.s32 0, %v1060
      %v1062 = vrot.slane %v1057, %v1061
      %v1064 = vmul.f32 %v995, %v1062
      %v1065 = vmul.f32 %v998, %v1062
      %v1066 = vmul.f32 %v1003, %v1062
      %v1067 = vmul.f32 %v1006, %v1062
      %v1068 = vmul.f32 %v1011, %v1062
      %v1069 = vmul.f32 %v1014, %v1062
      %v1070 = vmul.f32 %v1019, %v1062
      %v1071 = vmul.f32 %v1022, %v1062
      %v1072 = vmul.f32 %v1027, %v1062
      %v1073 = vmul.f32 %v1030, %v1062
      %v1074 = vmul.f32 %v1035, %v1062
      %v1075 = vmul.f32 %v1038, %v1062
      %v1076 = vmul.f32 %v1043, %v1062
      %v1077 = vmul.f32 %v1046, %v1062
      %v1078 = vmul.f32 %v1051, %v1062
      %v1079 = vmul.f32 %v1054, %v1062
      %v1080 = vld [vmem:[%s3] sm:$0x1]
      %v1082 = vlaneseq
      %v1083 = vshrl.u32 %v1082, 7
      %v1084 = vsub.s32 0, %v1083
      %v1085 = vrot.slane %v1080, %v1084
      %v1087 = vadd.f32 %v1064, %v1085
      %v1088 = vadd.f32 %v1065, %v1085
      %v1089 = vadd.f32 %v1066, %v1085
      %v1090 = vadd.f32 %v1067, %v1085
      %v1091 = vadd.f32 %v1068, %v1085
      %v1092 = vadd.f32 %v1069, %v1085
      %v1093 = vadd.f32 %v1070, %v1085
      %v1094 = vadd.f32 %v1071, %v1085
      %v1095 = vadd.f32 %v1072, %v1085
      %v1096 = vadd.f32 %v1073, %v1085
      %v1097 = vadd.f32 %v1074, %v1085
      %v1098 = vadd.f32 %v1075, %v1085
      %v1099 = vadd.f32 %v1076, %v1085
      %v1100 = vadd.f32 %v1077, %v1085
      %v1101 = vadd.f32 %v1078, %v1085
      %v1102 = vadd.f32 %v1079, %v1085
      %v1103 = vmax.f32 %v1087, 0.0
      %v1104 = vmax.f32 %v1088, 0.0
      %v1105 = vmax.f32 %v1089, 0.0
      %v1106 = vmax.f32 %v1090, 0.0
      %v1107 = vmax.f32 %v1091, 0.0
      %v1108 = vmax.f32 %v1092, 0.0
      %v1109 = vmax.f32 %v1093, 0.0
      %v1110 = vmax.f32 %v1094, 0.0
      %v1111 = vmax.f32 %v1095, 0.0
      %v1112 = vmax.f32 %v1096, 0.0
      %v1113 = vmax.f32 %v1097, 0.0
      %v1114 = vmax.f32 %v1098, 0.0
      %v1115 = vmax.f32 %v1099, 0.0
      %v1116 = vmax.f32 %v1100, 0.0
      %v1117 = vmax.f32 %v1101, 0.0
      %v1118 = vmax.f32 %v1102, 0.0
      %1119 = vst [vmem:[%s202] sm:$0xff] %v1103
      %1120 = vst [vmem:[%s202 + $0x8] sm:$0xff] %v1104
      %1121 = vst [vmem:[%s202 + $0x10] sm:$0xff] %v1105
      %1122 = vst [vmem:[%s202 + $0x18] sm:$0xff] %v1106
      %1123 = vst [vmem:[%s202 + $0x20] sm:$0xff] %v1107
      %1124 = vst [vmem:[%s202 + $0x28] sm:$0xff] %v1108
      %1125 = vst [vmem:[%s202 + $0x30] sm:$0xff] %v1109
      %1126 = vst [vmem:[%s202 + $0x38] sm:$0xff] %v1110
      %1127 = vst [vmem:[%s202 + $0x40] sm:$0xff] %v1111
      %1128 = vst [vmem:[%s202 + $0x48] sm:$0xff] %v1112
      %1129 = vst [vmem:[%s202 + $0x50] sm:$0xff] %v1113
      %1130 = vst [vmem:[%s202 + $0x58] sm:$0xff] %v1114
      %1131 = vst [vmem:[%s202 + $0x60] sm:$0xff] %v1115
      %1132 = vst [vmem:[%s202 + $0x68] sm:$0xff] %v1116
      %1133 = vst [vmem:[%s202 + $0x70] sm:$0xff] %v1117
      %1134 = vst [vmem:[%s202 + $0x78] sm:$0xff] %v1118
      %s1135 = smul.u32 16, %s15
      %p1136 = scmp.lt.s32.totalorder %s1135, 47
      %s1137 = scalar_select %p1136, %s1135, 47
      %s1138 = smul.addr %s1137, 8
      %s1139 = scalar_lea.vmem %s4, %s1138
      // Predicated region
      $region37: #{net_forward.6} parent=35 // pred_check
        %p1140 = pneg %p122
      $region38: #{net_forward.6} parent=35 // pred_check_branch
        %1142 = sbr.rel (%p1140) target = $region40
      $region39: #{net_forward.6} parent=35 // pred_region
        %s1143 = smul.u32 16, %s15
      $region40: #{net_forward.6} parent=35 // pred_fallthru
        _
    $region36: #{net_forward.6} parent=5 // pred_fallthru
      _
    %p1144 = scmp.le.s32.totalorder 2, %s10
    // Predicated region
    $region41: #{net_forward.6} parent=5 // pred_check
      %p1145 = pneg %p1144
    $region42: #{net_forward.6} parent=5 // pred_check_branch
      %1147 = sbr.rel (%p1145) target = $region44
    $region43: #{net_forward.6} parent=5 // pred_region
      %s1148 = ssub.s32 %s10, 2
      // Predicated region
      $region45: #{net_forward.6} parent=43 // pred_check
        %p1149 = pneg %p128
      $region46: #{net_forward.6} parent=43 // pred_check_branch
        %1151 = sbr.rel (%p1149) target = $region48
      $region47: #{net_forward.6} parent=43 // pred_region
        %s1152 = smul.u32 16, %s16
        %p1153 = scmp.lt.s32.totalorder %s1152, 47
        %s1154 = scalar_select %p1153, %s1152, 47
        %s1155 = smul.addr %s1154, 8
        %s1156 = scalar_lea.vmem %s4, %s1155
      $region48: #{net_forward.6} parent=43 // pred_fallthru
        _
    $region44: #{net_forward.6} parent=5 // pred_fallthru
      _
  $region6: #{net_forward.6} parent=0 // loop_footer
    %s14 = sadd.s32 1, %s10
  $region7: #{net_forward.6} parent=0 // loop_footer_branch
    %9 = sbr.rel target = $region3
  $region8: #{net_forward.6} parent=0 // loop_exit
    _

// kernel: net_forward.7
$region0: #{net_forward.7}
  #allocation0 [shape = 'u32[]', space=smem, size = 0x4, offset = 0x4, fixed_abs, tag = 'smem constant byte address 0x4 - core index']
  #allocation1 [shape = 'u32[144,128]{1,0:T(1,128)}', space=vmem, size = 0x12000, scoped, tag = 'internal scratch']
  %s0 = inlined_call_operand.vmem [shape: bf16[72,1152], index: 0, kind: input, shape index: {}]
  %s1 = inlined_call_operand.vmem [shape: bf16[1152,128], index: 1, kind: input, shape index: {}]
  %s2 = inlined_call_operand.vmem [shape: f32[1,128], index: 2, kind: input, shape index: {}]
  %s3 = inlined_call_operand.vmem [shape: f32[1,128], index: 3, kind: input, shape index: {}]
  %s4 = inlined_call_operand.vmem [shape: f32[72,128], index: 4, kind: output, shape index: {}]
  %s5 = sld [smem:[#allocation0]]
  $region26: #{net_forward.7} parent=0
    _
  %s7 = ssub.s32 1, %s5
  %s8 = scalar_select 0, %s7, %s5
  // Predicated region
  $region2: #{net_forward.7} parent=0 // pred_check
    _
  $region3: #{net_forward.7} parent=0 // pred_check_branch
    %10 = sbr.rel (0) target = $region5
  $region4: #{net_forward.7} parent=0 // pred_region
    _
  $region5: #{net_forward.7} parent=0 // pred_fallthru
    _
  // Predicated region
  $region6: #{net_forward.7} parent=0 // pred_check
    _
  $region7: #{net_forward.7} parent=0 // pred_check_branch
    %12 = sbr.rel (0) target = $region9
  $region8: #{net_forward.7} parent=0 // pred_region
    _
  $region9: #{net_forward.7} parent=0 // pred_fallthru
    _
  // Predicated region
  $region10: #{net_forward.7} parent=0 // pred_check
    _
  $region11: #{net_forward.7} parent=0 // pred_check_branch
    %14 = sbr.rel (0) target = $region13
  $region12: #{net_forward.7} parent=0 // pred_region
    _
  $region13: #{net_forward.7} parent=0 // pred_fallthru
    _
  // Predicated region
  $region14: #{net_forward.7} parent=0 // pred_check
    _
  $region15: #{net_forward.7} parent=0 // pred_check_branch
    %16 = sbr.rel (0) target = $region17
  $region16: #{net_forward.7} parent=0 // pred_region
    _
  $region17: #{net_forward.7} parent=0 // pred_fallthru
    _
  %v18 = vld [vmem:[%s0] sm:$0xff]
  %v19 = vld [vmem:[%s0 + $0x8] sm:$0xff]
  %v20 = vld [vmem:[%s0 + $0x10] sm:$0xff]
  %v21 = vld [vmem:[%s0 + $0x18] sm:$0xff]
  %v22 = vld [vmem:[%s0 + $0x20] sm:$0xf]
  %v23 = vld [vmem:[%s0 + $0x24] sm:$0xff]
  %v24 = vld [vmem:[%s0 + $0x2c] sm:$0xff]
  %v25 = vld [vmem:[%s0 + $0x34] sm:$0xff]
  %v26 = vld [vmem:[%s0 + $0x3c] sm:$0xff]
  %v27 = vld [vmem:[%s0 + $0x44] sm:$0xf]
  %v28 = vld [vmem:[%s0 + $0x48] sm:$0xff]
  %v29 = vld [vmem:[%s0 + $0x50] sm:$0xff]
  %v30 = vld [vmem:[%s0 + $0x58] sm:$0xff]
  %v31 = vld [vmem:[%s0 + $0x60] sm:$0xff]
  %v32 = vld [vmem:[%s0 + $0x68] sm:$0xf]
  %v33 = vld [vmem:[%s0 + $0x6c] sm:$0xff]
  %v34 = vld [vmem:[%s0 + $0x74] sm:$0xff]
  %v35 = vld [vmem:[%s0 + $0x7c] sm:$0xff]
  %v36 = vld [vmem:[%s0 + $0x84] sm:$0xff]
  %v37 = vld [vmem:[%s0 + $0x8c] sm:$0xf]
  %v38 = vld [vmem:[%s0 + $0x90] sm:$0xff]
  %v39 = vld [vmem:[%s0 + $0x98] sm:$0xff]
  %v40 = vld [vmem:[%s0 + $0xa0] sm:$0xff]
  %v41 = vld [vmem:[%s0 + $0xa8] sm:$0xff]
  %v42 = vld [vmem:[%s0 + $0xb0] sm:$0xf]
  %v43 = vld [vmem:[%s0 + $0xb4] sm:$0xff]
  %v44 = vld [vmem:[%s0 + $0xbc] sm:$0xff]
  %v45 = vld [vmem:[%s0 + $0xc4] sm:$0xff]
  %v46 = vld [vmem:[%s0 + $0xcc] sm:$0xff]
  %v47 = vld [vmem:[%s0 + $0xd4] sm:$0xf]
  %v48 = vld [vmem:[%s0 + $0xd8] sm:$0xff]
  %v49 = vld [vmem:[%s0 + $0xe0] sm:$0xff]
  %v50 = vld [vmem:[%s0 + $0xe8] sm:$0xff]
  %v51 = vld [vmem:[%s0 + $0xf0] sm:$0xff]
  %v52 = vld [vmem:[%s0 + $0xf8] sm:$0xf]
  %v53 = vld [vmem:[%s0 + $0xfc] sm:$0xff]
  %v54 = vld [vmem:[%s0 + $0x104] sm:$0xff]
  %v55 = vld [vmem:[%s0 + $0x10c] sm:$0xff]
  %v56 = vld [vmem:[%s0 + $0x114] sm:$0xff]
  %v57 = vld [vmem:[%s0 + $0x11c] sm:$0xf]
  %v58 = vld [vmem:[%s0 + $0x120] sm:$0xff]
  %v59 = vld [vmem:[%s0 + $0x128] sm:$0xff]
  %v60 = vld [vmem:[%s0 + $0x130] sm:$0xff]
  %v61 = vld [vmem:[%s0 + $0x138] sm:$0xff]
  %v62 = vld [vmem:[%s0 + $0x140] sm:$0xf]
  %v63 = vld [vmem:[%s1] sm:$0xf]
  %v64 = vld [vmem:[%s1 + $0x4] sm:$0xf]
  %v65 = vld [vmem:[%s1 + $0x8] sm:$0xf]
  %v66 = vld [vmem:[%s1 + $0xc] sm:$0xf]
  %v67 = vld [vmem:[%s1 + $0x10] sm:$0xf]
  %v68 = vld [vmem:[%s1 + $0x14] sm:$0xf]
  %v69 = vld [vmem:[%s1 + $0x18] sm:$0xf]
  %v70 = vld [vmem:[%s1 + $0x1c] sm:$0xf]
  %v71 = vld [vmem:[%s1 + $0x20] sm:$0xf]
  %v72 = vld [vmem:[%s1 + $0x24] sm:$0xf]
  %v73 = vld [vmem:[%s1 + $0x28] sm:$0xf]
  %v74 = vld [vmem:[%s1 + $0x2c] sm:$0xf]
  %v75 = vld [vmem:[%s1 + $0x30] sm:$0xf]
  %v76 = vld [vmem:[%s1 + $0x34] sm:$0xf]
  %v77 = vld [vmem:[%s1 + $0x38] sm:$0xf]
  %v78 = vld [vmem:[%s1 + $0x3c] sm:$0xf]
  %v79 = vld [vmem:[%s1 + $0x40] sm:$0xf]
  %v80 = vld [vmem:[%s1 + $0x44] sm:$0xf]
  %v81 = vld [vmem:[%s1 + $0x48] sm:$0xf]
  %v82 = vld [vmem:[%s1 + $0x4c] sm:$0xf]
  %v83 = vld [vmem:[%s1 + $0x50] sm:$0xf]
  %v84 = vld [vmem:[%s1 + $0x54] sm:$0xf]
  %v85 = vld [vmem:[%s1 + $0x58] sm:$0xf]
  %v86 = vld [vmem:[%s1 + $0x5c] sm:$0xf]
  %v87 = vld [vmem:[%s1 + $0x60] sm:$0xf]
  %v88 = vld [vmem:[%s1 + $0x64] sm:$0xf]
  %v89 = vld [vmem:[%s1 + $0x68] sm:$0xf]
  %v90 = vld [vmem:[%s1 + $0x6c] sm:$0xf]
  %v91 = vld [vmem:[%s1 + $0x70] sm:$0xf]
  %v92 = vld [vmem:[%s1 + $0x74] sm:$0xf]
  %v93 = vld [vmem:[%s1 + $0x78] sm:$0xf]
  %v94 = vld [vmem:[%s1 + $0x7c] sm:$0xf]
  %v95 = vld [vmem:[%s1 + $0x80] sm:$0xf]
  %v96 = vld [vmem:[%s1 + $0x84] sm:$0xf]
  %v97 = vld [vmem:[%s1 + $0x88] sm:$0xf]
  %v98 = vld [vmem:[%s1 + $0x8c] sm:$0xf]
  %v99 = vld [vmem:[%s1 + $0x90] sm:$0xf]
  %v100 = vld [vmem:[%s1 + $0x94] sm:$0xf]
  %v101 = vld [vmem:[%s1 + $0x98] sm:$0xf]
  %v102 = vld [vmem:[%s1 + $0x9c] sm:$0xf]
  %v103 = vld [vmem:[%s1 + $0xa0] sm:$0xf]
  %v104 = vld [vmem:[%s1 + $0xa4] sm:$0xf]
  %v105 = vld [vmem:[%s1 + $0xa8] sm:$0xf]
  %v106 = vld [vmem:[%s1 + $0xac] sm:$0xf]
  %v107 = vld [vmem:[%s1 + $0xb0] sm:$0xf]
  %v108 = vld [vmem:[%s1 + $0xb4] sm:$0xf]
  %v109 = vld [vmem:[%s1 + $0xb8] sm:$0xf]
  %v110 = vld [vmem:[%s1 + $0xbc] sm:$0xf]
  %v111 = vld [vmem:[%s1 + $0xc0] sm:$0xf]
  %v112 = vld [vmem:[%s1 + $0xc4] sm:$0xf]
  %v113 = vld [vmem:[%s1 + $0xc8] sm:$0xf]
  %v114 = vld [vmem:[%s1 + $0xcc] sm:$0xf]
  %v115 = vld [vmem:[%s1 + $0xd0] sm:$0xf]
  %v116 = vld [vmem:[%s1 + $0xd4] sm:$0xf]
  %v117 = vld [vmem:[%s1 + $0xd8] sm:$0xf]
  %v118 = vld [vmem:[%s1 + $0xdc] sm:$0xf]
  %v119 = vld [vmem:[%s1 + $0xe0] sm:$0xf]
  %v120 = vld [vmem:[%s1 + $0xe4] sm:$0xf]
  %v121 = vld [vmem:[%s1 + $0xe8] sm:$0xf]
  %v122 = vld [vmem:[%s1 + $0xec] sm:$0xf]
  %v123 = vld [vmem:[%s1 + $0xf0] sm:$0xf]
  %v124 = vld [vmem:[%s1 + $0xf4] sm:$0xf]
  %v125 = vld [vmem:[%s1 + $0xf8] sm:$0xf]
  %v126 = vld [vmem:[%s1 + $0xfc] sm:$0xf]
  %v127 = vld [vmem:[%s1 + $0x100] sm:$0xf]
  %v128 = vld [vmem:[%s1 + $0x104] sm:$0xf]
  %v129 = vld [vmem:[%s1 + $0x108] sm:$0xf]
  %v130 = vld [vmem:[%s1 + $0x10c] sm:$0xf]
  %v131 = vld [vmem:[%s1 + $0x110] sm:$0xf]
  %v132 = vld [vmem:[%s1 + $0x114] sm:$0xf]
  %v133 = vld [vmem:[%s1 + $0x118] sm:$0xf]
  %v134 = vld [vmem:[%s1 + $0x11c] sm:$0xf]
  %v135 = vld [vmem:[%s1 + $0x120] sm:$0xf]
  %v136 = vld [vmem:[%s1 + $0x124] sm:$0xf]
  %v137 = vld [vmem:[%s1 + $0x128] sm:$0xf]
  %v138 = vld [vmem:[%s1 + $0x12c] sm:$0xf]
  %v139 = vld [vmem:[%s1 + $0x130] sm:$0xf]
  %v140 = vld [vmem:[%s1 + $0x134] sm:$0xf]
  %v141 = vld [vmem:[%s1 + $0x138] sm:$0xf]
  %v142 = vld [vmem:[%s1 + $0x13c] sm:$0xf]
  %v143 = vld [vmem:[%s1 + $0x140] sm:$0xf]
  %v144 = vld [vmem:[%s1 + $0x144] sm:$0xf]
  %v145 = vld [vmem:[%s1 + $0x148] sm:$0xf]
  %v146 = vld [vmem:[%s1 + $0x14c] sm:$0xf]
  %v147 = vld [vmem:[%s1 + $0x150] sm:$0xf]
  %v148 = vld [vmem:[%s1 + $0x154] sm:$0xf]
  %v149 = vld [vmem:[%s1 + $0x158] sm:$0xf]
  %v150 = vld [vmem:[%s1 + $0x15c] sm:$0xf]
  %v151 = vld [vmem:[%s1 + $0x160] sm:$0xf]
  %v152 = vld [vmem:[%s1 + $0x164] sm:$0xf]
  %v153 = vld [vmem:[%s1 + $0x168] sm:$0xf]
  %v154 = vld [vmem:[%s1 + $0x16c] sm:$0xf]
  %v155 = vld [vmem:[%s1 + $0x170] sm:$0xf]
  %v156 = vld [vmem:[%s1 + $0x174] sm:$0xf]
  %v157 = vld [vmem:[%s1 + $0x178] sm:$0xf]
  %v158 = vld [vmem:[%s1 + $0x17c] sm:$0xf]
  %v159 = vld [vmem:[%s1 + $0x180] sm:$0xf]
  %v160 = vld [vmem:[%s1 + $0x184] sm:$0xf]
  %v161 = vld [vmem:[%s1 + $0x188] sm:$0xf]
  %v162 = vld [vmem:[%s1 + $0x18c] sm:$0xf]
  %v163 = vld [vmem:[%s1 + $0x190] sm:$0xf]
  %v164 = vld [vmem:[%s1 + $0x194] sm:$0xf]
  %v165 = vld [vmem:[%s1 + $0x198] sm:$0xf]
  %v166 = vld [vmem:[%s1 + $0x19c] sm:$0xf]
  %v167 = vld [vmem:[%s1 + $0x1a0] sm:$0xf]
  %v168 = vld [vmem:[%s1 + $0x1a4] sm:$0xf]
  %v169 = vld [vmem:[%s1 + $0x1a8] sm:$0xf]
  %v170 = vld [vmem:[%s1 + $0x1ac] sm:$0xf]
  %v171 = vld [vmem:[%s1 + $0x1b0] sm:$0xf]
  %v172 = vld [vmem:[%s1 + $0x1b4] sm:$0xf]
  %v173 = vld [vmem:[%s1 + $0x1b8] sm:$0xf]
  %v174 = vld [vmem:[%s1 + $0x1bc] sm:$0xf]
  %v175 = vld [vmem:[%s1 + $0x1c0] sm:$0xf]
  %v176 = vld [vmem:[%s1 + $0x1c4] sm:$0xf]
  %v177 = vld [vmem:[%s1 + $0x1c8] sm:$0xf]
  %v178 = vld [vmem:[%s1 + $0x1cc] sm:$0xf]
  %v179 = vld [vmem:[%s1 + $0x1d0] sm:$0xf]
  %v180 = vld [vmem:[%s1 + $0x1d4] sm:$0xf]
  %v181 = vld [vmem:[%s1 + $0x1d8] sm:$0xf]
  %v182 = vld [vmem:[%s1 + $0x1dc] sm:$0xf]
  %v183 = vld [vmem:[%s1 + $0x1e0] sm:$0xf]
  %v184 = vld [vmem:[%s1 + $0x1e4] sm:$0xf]
  %v185 = vld [vmem:[%s1 + $0x1e8] sm:$0xf]
  %v186 = vld [vmem:[%s1 + $0x1ec] sm:$0xf]
  %v187 = vld [vmem:[%s1 + $0x1f0] sm:$0xf]
  %v188 = vld [vmem:[%s1 + $0x1f4] sm:$0xf]
  %v189 = vld [vmem:[%s1 + $0x1f8] sm:$0xf]
  %v190 = vld [vmem:[%s1 + $0x1fc] sm:$0xf]
  %v191 = vld [vmem:[%s1 + $0x200] sm:$0xf]
  %v192 = vld [vmem:[%s1 + $0x204] sm:$0xf]
  %v193 = vld [vmem:[%s1 + $0x208] sm:$0xf]
  %v194 = vld [vmem:[%s1 + $0x20c] sm:$0xf]
  %v195 = vld [vmem:[%s1 + $0x210] sm:$0xf]
  %v196 = vld [vmem:[%s1 + $0x214] sm:$0xf]
  %v197 = vld [vmem:[%s1 + $0x218] sm:$0xf]
  %v198 = vld [vmem:[%s1 + $0x21c] sm:$0xf]
  %v199 = vld [vmem:[%s1 + $0x220] sm:$0xf]
  %v200 = vld [vmem:[%s1 + $0x224] sm:$0xf]
  %v201 = vld [vmem:[%s1 + $0x228] sm:$0xf]
  %v202 = vld [vmem:[%s1 + $0x22c] sm:$0xf]
  %v203 = vld [vmem:[%s1 + $0x230] sm:$0xf]
  %v204 = vld [vmem:[%s1 + $0x234] sm:$0xf]
  %v205 = vld [vmem:[%s1 + $0x238] sm:$0xf]
  %v206 = vld [vmem:[%s1 + $0x23c] sm:$0xf]
  %v252 = vunpack.c.l.b16 %v18
  %v253 = vunpack.c.h.b16 %v18
  %v254 = vunpack.c.l.b16 %v19
  %v255 = vunpack.c.h.b16 %v19
  %v256 = vunpack.c.l.b16 %v20
  %v257 = vunpack.c.h.b16 %v20
  %v258 = vunpack.c.l.b16 %v21
  %v259 = vunpack.c.h.b16 %v21
  %v260 = vunpack.c.l.b16 %v22
  %v261 = vunpack.c.l.b16 %v23
  %v262 = vunpack.c.h.b16 %v23
  %v263 = vunpack.c.l.b16 %v24
  %v264 = vunpack.c.h.b16 %v24
  %v265 = vunpack.c.l.b16 %v25
  %v266 = vunpack.c.h.b16 %v25
  %v267 = vunpack.c.l.b16 %v26
  %v268 = vunpack.c.h.b16 %v26
  %v269 = vunpack.c.l.b16 %v27
  %v270 = vunpack.c.l.b16 %v28
  %v271 = vunpack.c.h.b16 %v28
  %v272 = vunpack.c.l.b16 %v29
  %v273 = vunpack.c.h.b16 %v29
  %v274 = vunpack.c.l.b16 %v30
  %v275 = vunpack.c.h.b16 %v30
  %v276 = vunpack.c.l.b16 %v31
  %v277 = vunpack.c.h.b16 %v31
  %v278 = vunpack.c.l.b16 %v32
  %v279 = vunpack.c.l.b16 %v33
  %v280 = vunpack.c.h.b16 %v33
  %v281 = vunpack.c.l.b16 %v34
  %v282 = vunpack.c.h.b16 %v34
  %v283 = vunpack.c.l.b16 %v35
  %v284 = vunpack.c.h.b16 %v35
  %v285 = vunpack.c.l.b16 %v36
  %v286 = vunpack.c.h.b16 %v36
  %v287 = vunpack.c.l.b16 %v37
  %v288 = vunpack.c.l.b16 %v38
  %v289 = vunpack.c.h.b16 %v38
  %v290 = vunpack.c.l.b16 %v39
  %v291 = vunpack.c.h.b16 %v39
  %v292 = vunpack.c.l.b16 %v40
  %v293 = vunpack.c.h.b16 %v40
  %v294 = vunpack.c.l.b16 %v41
  %v295 = vunpack.c.h.b16 %v41
  %v296 = vunpack.c.l.b16 %v42
  %v297 = vunpack.c.l.b16 %v43
  %v298 = vunpack.c.h.b16 %v43
  %v299 = vunpack.c.l.b16 %v44
  %v300 = vunpack.c.h.b16 %v44
  %v301 = vunpack.c.l.b16 %v45
  %v302 = vunpack.c.h.b16 %v45
  %v303 = vunpack.c.l.b16 %v46
  %v304 = vunpack.c.h.b16 %v46
  %v305 = vunpack.c.l.b16 %v47
  %v306 = vunpack.c.l.b16 %v48
  %v307 = vunpack.c.h.b16 %v48
  %v308 = vunpack.c.l.b16 %v49
  %v309 = vunpack.c.h.b16 %v49
  %v310 = vunpack.c.l.b16 %v50
  %v311 = vunpack.c.h.b16 %v50
  %v312 = vunpack.c.l.b16 %v51
  %v313 = vunpack.c.h.b16 %v51
  %v314 = vunpack.c.l.b16 %v52
  %v315 = vunpack.c.l.b16 %v53
  %v316 = vunpack.c.h.b16 %v53
  %v317 = vunpack.c.l.b16 %v54
  %v318 = vunpack.c.h.b16 %v54
  %v319 = vunpack.c.l.b16 %v55
  %v320 = vunpack.c.h.b16 %v55
  %v321 = vunpack.c.l.b16 %v56
  %v322 = vunpack.c.h.b16 %v56
  %v323 = vunpack.c.l.b16 %v57
  %v324 = vunpack.c.l.b16 %v58
  %v325 = vunpack.c.h.b16 %v58
  %v326 = vunpack.c.l.b16 %v59
  %v327 = vunpack.c.h.b16 %v59
  %v328 = vunpack.c.l.b16 %v60
  %v329 = vunpack.c.h.b16 %v60
  %v330 = vunpack.c.l.b16 %v61
  %v331 = vunpack.c.h.b16 %v61
  %v332 = vunpack.c.l.b16 %v62
  %v333 = vpack.c.b16 %v261, %v252
  %v334 = vpack.c.b16 %v262, %v253
  %v335 = vpack.c.b16 %v263, %v254
  %v336 = vpack.c.b16 %v264, %v255
  %v337 = vpack.c.b16 %v265, %v256
  %v338 = vpack.c.b16 %v266, %v257
  %v339 = vpack.c.b16 %v267, %v258
  %v340 = vpack.c.b16 %v268, %v259
  %v341 = vpack.c.b16 %v269, %v260
  %v342 = vpack.c.b16 %v279, %v270
  %v343 = vpack.c.b16 %v280, %v271
  %v344 = vpack.c.b16 %v281, %v272
  %v345 = vpack.c.b16 %v282, %v273
  %v346 = vpack.c.b16 %v283, %v274
  %v347 = vpack.c.b16 %v284, %v275
  %v348 = vpack.c.b16 %v285, %v276
  %v349 = vpack.c.b16 %v286, %v277
  %v350 = vpack.c.b16 %v287, %v278
  %v351 = vpack.c.b16 %v297, %v288
  %v352 = vpack.c.b16 %v298, %v289
  %v353 = vpack.c.b16 %v299, %v290
  %v354 = vpack.c.b16 %v300, %v291
  %v355 = vpack.c.b16 %v301, %v292
  %v356 = vpack.c.b16 %v302, %v293
  %v357 = vpack.c.b16 %v303, %v294
  %v358 = vpack.c.b16 %v304, %v295
  %v359 = vpack.c.b16 %v305, %v296
  %v360 = vpack.c.b16 %v315, %v306
  %v361 = vpack.c.b16 %v316, %v307
  %v362 = vpack.c.b16 %v317, %v308
  %v363 = vpack.c.b16 %v318, %v309
  %v364 = vpack.c.b16 %v319, %v310
  %v365 = vpack.c.b16 %v320, %v311
  %v366 = vpack.c.b16 %v321, %v312
  %v367 = vpack.c.b16 %v322, %v313
  %v368 = vpack.c.b16 %v323, %v314
  %v369 = vpack.c.b16 %v324, %v324
  %v370 = vpack.c.b16 %v325, %v325
  %v371 = vpack.c.b16 %v326, %v326
  %v372 = vpack.c.b16 %v327, %v327
  %v373 = vpack.c.b16 %v328, %v328
  %v374 = vpack.c.b16 %v329, %v329
  %v375 = vpack.c.b16 %v330, %v330
  %v376 = vpack.c.b16 %v331, %v331
  %v377 = vpack.c.b16 %v332, %v332
  %v567 = vunpack.c.l.b16 %v63
  %v568 = vunpack.c.l.b16 %v64
  %v569 = vunpack.c.l.b16 %v65
  %v570 = vunpack.c.l.b16 %v66
  %v571 = vunpack.c.l.b16 %v67
  %v572 = vunpack.c.l.b16 %v68
  %v573 = vunpack.c.l.b16 %v69
  %v574 = vunpack.c.l.b16 %v70
  %v575 = vunpack.c.l.b16 %v71
  %v576 = vunpack.c.l.b16 %v72
  %v577 = vunpack.c.l.b16 %v73
  %v578 = vunpack.c.l.b16 %v74
  %v579 = vunpack.c.l.b16 %v75
  %v580 = vunpack.c.l.b16 %v76
  %v581 = vunpack.c.l.b16 %v77
  %v582 = vunpack.c.l.b16 %v78
  %v583 = vunpack.c.l.b16 %v79
  %v584 = vunpack.c.l.b16 %v80
  %v585 = vunpack.c.l.b16 %v81
  %v586 = vunpack.c.l.b16 %v82
  %v587 = vunpack.c.l.b16 %v83
  %v588 = vunpack.c.l.b16 %v84
  %v589 = vunpack.c.l.b16 %v85
  %v590 = vunpack.c.l.b16 %v86
  %v591 = vunpack.c.l.b16 %v87
  %v592 = vunpack.c.l.b16 %v88
  %v593 = vunpack.c.l.b16 %v89
  %v594 = vunpack.c.l.b16 %v90
  %v595 = vunpack.c.l.b16 %v91
  %v596 = vunpack.c.l.b16 %v92
  %v597 = vunpack.c.l.b16 %v93
  %v598 = vunpack.c.l.b16 %v94
  %v599 = vunpack.c.l.b16 %v95
  %v600 = vunpack.c.l.b16 %v96
  %v601 = vunpack.c.l.b16 %v97
  %v602 = vunpack.c.l.b16 %v98
  %v603 = vunpack.c.l.b16 %v99
  %v604 = vunpack.c.l.b16 %v100
  %v605 = vunpack.c.l.b16 %v101
  %v606 = vunpack.c.l.b16 %v102
  %v607 = vunpack.c.l.b16 %v103
  %v608 = vunpack.c.l.b16 %v104
  %v609 = vunpack.c.l.b16 %v105
  %v610 = vunpack.c.l.b16 %v106
  %v611 = vunpack.c.l.b16 %v107
  %v612 = vunpack.c.l.b16 %v108
  %v613 = vunpack.c.l.b16 %v109
  %v614 = vunpack.c.l.b16 %v110
  %v615 = vunpack.c.l.b16 %v111
  %v616 = vunpack.c.l.b16 %v112
  %v617 = vunpack.c.l.b16 %v113
  %v618 = vunpack.c.l.b16 %v114
  %v619 = vunpack.c.l.b16 %v115
  %v620 = vunpack.c.l.b16 %v116
  %v621 = vunpack.c.l.b16 %v117
  %v622 = vunpack.c.l.b16 %v118
  %v623 = vunpack.c.l.b16 %v119
  %v624 = vunpack.c.l.b16 %v120
  %v625 = vunpack.c.l.b16 %v121
  %v626 = vunpack.c.l.b16 %v122
  %v627 = vunpack.c.l.b16 %v123
  %v628 = vunpack.c.l.b16 %v124
  %v629 = vunpack.c.l.b16 %v125
  %v630 = vunpack.c.l.b16 %v126
  %v631 = vunpack.c.l.b16 %v127
  %v632 = vunpack.c.l.b16 %v128
  %v633 = vunpack.c.l.b16 %v129
  %v634 = vunpack.c.l.b16 %v130
  %v635 = vunpack.c.l.b16 %v131
  %v636 = vunpack.c.l.b16 %v132
  %v637 = vunpack.c.l.b16 %v133
  %v638 = vunpack.c.l.b16 %v134
  %v639 = vunpack.c.l.b16 %v135
  %v640 = vunpack.c.l.b16 %v136
  %v641 = vunpack.c.l.b16 %v137
  %v642 = vunpack.c.l.b16 %v138
  %v643 = vunpack.c.l.b16 %v139
  %v644 = vunpack.c.l.b16 %v140
  %v645 = vunpack.c.l.b16 %v141
  %v646 = vunpack.c.l.b16 %v142
  %v647 = vunpack.c.l.b16 %v143
  %v648 = vunpack.c.l.b16 %v144
  %v649 = vunpack.c.l.b16 %v145
  %v650 = vunpack.c.l.b16 %v146
  %v651 = vunpack.c.l.b16 %v147
  %v652 = vunpack.c.l.b16 %v148
  %v653 = vunpack.c.l.b16 %v149
  %v654 = vunpack.c.l.b16 %v150
  %v655 = vunpack.c.l.b16 %v151
  %v656 = vunpack.c.l.b16 %v152
  %v657 = vunpack.c.l.b16 %v153
  %v658 = vunpack.c.l.b16 %v154
  %v659 = vunpack.c.l.b16 %v155
  %v660 = vunpack.c.l.b16 %v156
  %v661 = vunpack.c.l.b16 %v157
  %v662 = vunpack.c.l.b16 %v158
  %v663 = vunpack.c.l.b16 %v159
  %v664 = vunpack.c.l.b16 %v160
  %v665 = vunpack.c.l.b16 %v161
  %v666 = vunpack.c.l.b16 %v162
  %v667 = vunpack.c.l.b16 %v163
  %v668 = vunpack.c.l.b16 %v164
  %v669 = vunpack.c.l.b16 %v165
  %v670 = vunpack.c.l.b16 %v166
  %v671 = vunpack.c.l.b16 %v167
  %v672 = vunpack.c.l.b16 %v168
  %v673 = vunpack.c.l.b16 %v169
  %v674 = vunpack.c.l.b16 %v170
  %v675 = vunpack.c.l.b16 %v171
  %v676 = vunpack.c.l.b16 %v172
  %v677 = vunpack.c.l.b16 %v173
  %v678 = vunpack.c.l.b16 %v174
  %v679 = vunpack.c.l.b16 %v175
  %v680 = vunpack.c.l.b16 %v176
  %v681 = vunpack.c.l.b16 %v177
  %v682 = vunpack.c.l.b16 %v178
  %v683 = vunpack.c.l.b16 %v179
  %v684 = vunpack.c.l.b16 %v180
  %v685 = vunpack.c.l.b16 %v181
  %v686 = vunpack.c.l.b16 %v182
  %v687 = vunpack.c.l.b16 %v183
  %v688 = vunpack.c.l.b16 %v184
  %v689 = vunpack.c.l.b16 %v185
  %v690 = vunpack.c.l.b16 %v186
  %v691 = vunpack.c.l.b16 %v187
  %v692 = vunpack.c.l.b16 %v188
  %v693 = vunpack.c.l.b16 %v189
  %v694 = vunpack.c.l.b16 %v190
  %v695 = vunpack.c.l.b16 %v191
  %v696 = vunpack.c.l.b16 %v192
  %v697 = vunpack.c.l.b16 %v193
  %v698 = vunpack.c.l.b16 %v194
  %v699 = vunpack.c.l.b16 %v195
  %v700 = vunpack.c.l.b16 %v196
  %v701 = vunpack.c.l.b16 %v197
  %v702 = vunpack.c.l.b16 %v198
  %v703 = vunpack.c.l.b16 %v199
  %v704 = vunpack.c.l.b16 %v200
  %v705 = vunpack.c.l.b16 %v201
  %v706 = vunpack.c.l.b16 %v202
  %v707 = vunpack.c.l.b16 %v203
  %v708 = vunpack.c.l.b16 %v204
  %v709 = vunpack.c.l.b16 %v205
  %v710 = vunpack.c.l.b16 %v206
  %v711 = vpack.c.b16 %v568, %v567
  %v712 = vpack.c.b16 %v570, %v569
  %v713 = vpack.c.b16 %v572, %v571
  %v714 = vpack.c.b16 %v574, %v573
  %v715 = vpack.c.b16 %v576, %v575
  %v716 = vpack.c.b16 %v578, %v577
  %v717 = vpack.c.b16 %v580, %v579
  %v718 = vpack.c.b16 %v582, %v581
  %v719 = vpack.c.b16 %v584, %v583
  %v720 = vpack.c.b16 %v586, %v585
  %v721 = vpack.c.b16 %v588, %v587
  %v722 = vpack.c.b16 %v590, %v589
  %v723 = vpack.c.b16 %v592, %v591
  %v724 = vpack.c.b16 %v594, %v593
  %v725 = vpack.c.b16 %v596, %v595
  %v726 = vpack.c.b16 %v598, %v597
  %v727 = vpack.c.b16 %v600, %v599
  %v728 = vpack.c.b16 %v602, %v601
  %v729 = vpack.c.b16 %v604, %v603
  %v730 = vpack.c.b16 %v606, %v605
  %v731 = vpack.c.b16 %v608, %v607
  %v732 = vpack.c.b16 %v610, %v609
  %v733 = vpack.c.b16 %v612, %v611
  %v734 = vpack.c.b16 %v614, %v613
  %v735 = vpack.c.b16 %v616, %v615
  %v736 = vpack.c.b16 %v618, %v617
  %v737 = vpack.c.b16 %v620, %v619
  %v738 = vpack.c.b16 %v622, %v621
  %v739 = vpack.c.b16 %v624, %v623
  %v740 = vpack.c.b16 %v626, %v625
  %v741 = vpack.c.b16 %v628, %v627
  %v742 = vpack.c.b16 %v630, %v629
  %v743 = vpack.c.b16 %v632, %v631
  %v744 = vpack.c.b16 %v634, %v633
  %v745 = vpack.c.b16 %v636, %v635
  %v746 = vpack.c.b16 %v638, %v637
  %v747 = vpack.c.b16 %v640, %v639
  %v748 = vpack.c.b16 %v642, %v641
  %v749 = vpack.c.b16 %v644, %v643
  %v750 = vpack.c.b16 %v646, %v645
  %v751 = vpack.c.b16 %v648, %v647
  %v752 = vpack.c.b16 %v650, %v649
  %v753 = vpack.c.b16 %v652, %v651
  %v754 = vpack.c.b16 %v654, %v653
  %v755 = vpack.c.b16 %v656, %v655
  %v756 = vpack.c.b16 %v658, %v657
  %v757 = vpack.c.b16 %v660, %v659
  %v758 = vpack.c.b16 %v662, %v661
  %v759 = vpack.c.b16 %v664, %v663
  %v760 = vpack.c.b16 %v666, %v665
  %v761 = vpack.c.b16 %v668, %v667
  %v762 = vpack.c.b16 %v670, %v669
  %v763 = vpack.c.b16 %v672, %v671
  %v764 = vpack.c.b16 %v674, %v673
  %v765 = vpack.c.b16 %v676, %v675
  %v766 = vpack.c.b16 %v678, %v677
  %v767 = vpack.c.b16 %v680, %v679
  %v768 = vpack.c.b16 %v682, %v681
  %v769 = vpack.c.b16 %v684, %v683
  %v770 = vpack.c.b16 %v686, %v685
  %v771 = vpack.c.b16 %v688, %v687
  %v772 = vpack.c.b16 %v690, %v689
  %v773 = vpack.c.b16 %v692, %v691
  %v774 = vpack.c.b16 %v694, %v693
  %v775 = vpack.c.b16 %v696, %v695
  %v776 = vpack.c.b16 %v698, %v697
  %v777 = vpack.c.b16 %v700, %v699
  %v778 = vpack.c.b16 %v702, %v701
  %v779 = vpack.c.b16 %v704, %v703
  %v780 = vpack.c.b16 %v706, %v705
  %v781 = vpack.c.b16 %v708, %v707
  %v782 = vpack.c.b16 %v710, %v709
  %855 = vmatprep.subr.bf16.mxu0 0
  %856 = vmatpush1.bf16.msra.mxu0 %v718
  %857 = vmatprep.subr.bf16.mxu0 0
  %858 = vmatpush1.bf16.msra.mxu0 %v717
  %859 = vmatprep.subr.bf16.mxu0 0
  %860 = vmatpush1.bf16.msra.mxu0 %v716
  %861 = vmatprep.subr.bf16.mxu0 0
  %862 = vmatpush1.bf16.msra.mxu0 %v715
  %863 = vmatprep.subr.bf16.mxu0 0
  %864 = vmatpush1.bf16.msra.mxu0 %v714
  %865 = vmatprep.subr.bf16.mxu0 0
  %866 = vmatpush1.bf16.msra.mxu0 %v713
  %867 = vmatprep.subr.bf16.mxu0 0
  %868 = vmatpush1.bf16.msra.mxu0 %v712
  %869 = vmatprep.subr.bf16.mxu0 0
  %870 = vmatpush1.bf16.msra.mxu0 %v711
  %871 = vmatprep.subr.bf16.mxu0 0
  %872 = vmatpush2.bf16.msra.mxu0 %v726
  %873 = vmatprep.subr.bf16.mxu0 0
  %874 = vmatpush2.bf16.msra.mxu0 %v725
  %875 = vmatprep.subr.bf16.mxu0 0
  %876 = vmatpush2.bf16.msra.mxu0 %v724
  %877 = vmatprep.subr.bf16.mxu0 0
  %878 = vmatpush2.bf16.msra.mxu0 %v723
  %879 = vmatprep.subr.bf16.mxu0 0
  %880 = vmatpush2.bf16.msra.mxu0 %v722
  %881 = vmatprep.subr.bf16.mxu0 0
  %882 = vmatpush2.bf16.msra.mxu0 %v721
  %883 = vmatprep.subr.bf16.mxu0 0
  %884 = vmatpush2.bf16.msra.mxu0 %v720
  %885 = vmatprep.subr.bf16.mxu0 0
  %886 = vmatpush2.bf16.msra.mxu0 %v719
  %887 = vmatprep.mubr.bf16.mxu0 %v334
  %888 = vmatmul.mubr.bf16.gmra.mxu0 %v333
  %v889 = vpop.f32.mrf.mxu0
  %v890 = vadd.f32 0.0, %v889
  %v891 = vpop.f32.mrf.mxu0
  %v892 = vpop.f32.mrf.mxu0
  %v893 = vadd.f32 0.0, %v892
  %v894 = vpop.f32.mrf.mxu0
  %895 = vmatprep.mubr.bf16.mxu0 %v343
  %896 = vmatmul.mubr.bf16.gmra.mxu0 %v342
  %v897 = vpop.f32.mrf.mxu0
  %v898 = vadd.f32 0.0, %v897
  %v899 = vpop.f32.mrf.mxu0
  %v900 = vpop.f32.mrf.mxu0
  %v901 = vadd.f32 0.0, %v900
  %v902 = vpop.f32.mrf.mxu0
  %903 = vmatprep.mubr.bf16.mxu0 %v352
  %904 = vmatmul.mubr.bf16.gmra.mxu0 %v351
  %v905 = vpop.f32.mrf.mxu0
  %v906 = vadd.f32 0.0, %v905
  %v907 = vpop.f32.mrf.mxu0
  %v908 = vpop.f32.mrf.mxu0
  %v909 = vadd.f32 0.0, %v908
  %v910 = vpop.f32.mrf.mxu0
  %911 = vmatprep.mubr.bf16.mxu0 %v361
  %912 = vmatmul.mubr.bf16.gmra.mxu0 %v360
  %v913 = vpop.f32.mrf.mxu0
  %v914 = vadd.f32 0.0, %v913
  %v915 = vpop.f32.mrf.mxu0
  %v916 = vpop.f32.mrf.mxu0
  %v917 = vadd.f32 0.0, %v916
  %v918 = vpop.f32.mrf.mxu0
  %919 = vmatprep.mubr.bf16.mxu0 %v370
  %920 = vmatmul.mubr.bf16.gmra.mxu0 %v369
  %v921 = vpop.f32.mrf.mxu0
  %v922 = vadd.f32 0.0, %v921
  %v923 = vpop.f32.mrf.mxu0
  %v924 = vpop.f32.mrf.mxu0
  %v925 = vpop.f32.mrf.mxu0
  %926 = vdwg.mxu0
  %927 = vmatprep.subr.bf16.mxu0 0
  %928 = vmatpush1.bf16.msra.mxu0 %v734
  %929 = vmatprep.subr.bf16.mxu0 0
  %930 = vmatpush1.bf16.msra.mxu0 %v733
  %931 = vmatprep.subr.bf16.mxu0 0
  %932 = vmatpush1.bf16.msra.mxu0 %v732
  %933 = vmatprep.subr.bf16.mxu0 0
  %934 = vmatpush1.bf16.msra.mxu0 %v731
  %935 = vmatprep.subr.bf16.mxu0 0
  %936 = vmatpush1.bf16.msra.mxu0 %v730
  %937 = vmatprep.subr.bf16.mxu0 0
  %938 = vmatpush1.bf16.msra.mxu0 %v729
  %939 = vmatprep.subr.bf16.mxu0 0
  %940 = vmatpush1.bf16.msra.mxu0 %v728
  %941 = vmatprep.subr.bf16.mxu0 0
  %942 = vmatpush1.bf16.msra.mxu0 %v727
  %943 = vmatprep.subr.bf16.mxu0 0
  %944 = vmatpush2.bf16.msra.mxu0 %v742
  %945 = vmatprep.subr.bf16.mxu0 0
  %946 = vmatpush2.bf16.msra.mxu0 %v741
  %947 = vmatprep.subr.bf16.mxu0 0
  %948 = vmatpush2.bf16.msra.mxu0 %v740
  %949 = vmatprep.subr.bf16.mxu0 0
  %950 = vmatpush2.bf16.msra.mxu0 %v739
  %951 = vmatprep.subr.bf16.mxu0 0
  %952 = vmatpush2.bf16.msra.mxu0 %v738
  %953 = vmatprep.subr.bf16.mxu0 0
  %954 = vmatpush2.bf16.msra.mxu0 %v737
  %955 = vmatprep.subr.bf16.mxu0 0
  %956 = vmatpush2.bf16.msra.mxu0 %v736
  %957 = vmatprep.subr.bf16.mxu0 0
  %958 = vmatpush2.bf16.msra.mxu0 %v735
  %959 = vmatprep.mubr.bf16.mxu0 %v336
  %960 = vmatmul.mubr.bf16.gmra.mxu0 %v335
  %v961 = vpop.f32.mrf.mxu0
  %v962 = vadd.f32 %v890, %v961
  %v963 = vpop.f32.mrf.mxu0
  %v964 = vpop.f32.mrf.mxu0
  %v965 = vadd.f32 %v893, %v964
  %v966 = vpop.f32.mrf.mxu0
  %967 = vmatprep.mubr.bf16.mxu0 %v345
  %968 = vmatmul.mubr.bf16.gmra.mxu0 %v344
  %v969 = vpop.f32.mrf.mxu0
  %v970 = vadd.f32 %v898, %v969
  %v971 = vpop.f32.mrf.mxu0
  %v972 = vpop.f32.mrf.mxu0
  %v973 = vadd.f32 %v901, %v972
  %v974 = vpop.f32.mrf.mxu0
  %975 = vmatprep.mubr.bf16.mxu0 %v354
  %976 = vmatmul.mubr.bf16.gmra.mxu0 %v353
  %v977 = vpop.f32.mrf.mxu0
  %v978 = vadd.f32 %v906, %v977
  %v979 = vpop.f32.mrf.mxu0
  %v980 = vpop.f32.mrf.mxu0
  %v981 = vadd.f32 %v909, %v980
  %v982 = vpop.f32.mrf.mxu0
  %983 = vmatprep.mubr.bf16.mxu0 %v363
  %984 = vmatmul.mubr.bf16.gmra.mxu0 %v362
  %v985 = vpop.f32.mrf.mxu0
  %v986 = vadd.f32 %v914, %v985
  %v987 = vpop.f32.mrf.mxu0
  %v988 = vpop.f32.mrf.mxu0
  %v989 = vadd.f32 %v917, %v988
  %v990 = vpop.f32.mrf.mxu0
  %991 = vmatprep.mubr.bf16.mxu0 %v372
  %992 = vmatmul.mubr.bf16.gmra.mxu0 %v371
  %v993 = vpop.f32.mrf.mxu0
  %v994 = vadd.f32 %v922, %v993
  %v995 = vpop.f32.mrf.mxu0
  %v996 = vpop.f32.mrf.mxu0
  %v997 = vpop.f32.mrf.mxu0
  %998 = vdwg.mxu0
  %999 = vmatprep.subr.bf16.mxu0 0
  %1000 = vmatpush1.bf16.msra.mxu0 %v750
  %1001 = vmatprep.subr.bf16.mxu0 0
  %1002 = vmatpush1.bf16.msra.mxu0 %v749
  %1003 = vmatprep.subr.bf16.mxu0 0
  %1004 = vmatpush1.bf16.msra.mxu0 %v748
  %1005 = vmatprep.subr.bf16.mxu0 0
  %1006 = vmatpush1.bf16.msra.mxu0 %v747
  %1007 = vmatprep.subr.bf16.mxu0 0
  %1008 = vmatpush1.bf16.msra.mxu0 %v746
  %1009 = vmatprep.subr.bf16.mxu0 0
  %1010 = vmatpush1.bf16.msra.mxu0 %v745
  %1011 = vmatprep.subr.bf16.mxu0 0
  %1012 = vmatpush1.bf16.msra.mxu0 %v744
  %1013 = vmatprep.subr.bf16.mxu0 0
  %1014 = vmatpush1.bf16.msra.mxu0 %v743
  %1015 = vmatprep.subr.bf16.mxu0 0
  %1016 = vmatpush2.bf16.msra.mxu0 %v758
  %1017 = vmatprep.subr.bf16.mxu0 0
  %1018 = vmatpush2.bf16.msra.mxu0 %v757
  %1019 = vmatprep.subr.bf16.mxu0 0
  %1020 = vmatpush2.bf16.msra.mxu0 %v756
  %1021 = vmatprep.subr.bf16.mxu0 0
  %1022 = vmatpush2.bf16.msra.mxu0 %v755
  %1023 = vmatprep.subr.bf16.mxu0 0
  %1024 = vmatpush2.bf16.msra.mxu0 %v754
  %1025 = vmatprep.subr.bf16.mxu0 0
  %1026 = vmatpush2.bf16.msra.mxu0 %v753
  %1027 = vmatprep.subr.bf16.mxu0 0
  %1028 = vmatpush2.bf16.msra.mxu0 %v752
  %1029 = vmatprep.subr.bf16.mxu0 0
  %1030 = vmatpush2.bf16.msra.mxu0 %v751
  %1031 = vmatprep.mubr.bf16.mxu0 %v338
  %1032 = vmatmul.mubr.bf16.gmra.mxu0 %v337
  %v1033 = vpop.f32.mrf.mxu0
  %v1034 = vadd.f32 %v962, %v1033
  %v1035 = vpop.f32.mrf.mxu0
  %v1036 = vpop.f32.mrf.mxu0
  %v1037 = vadd.f32 %v965, %v1036
  %v1038 = vpop.f32.mrf.mxu0
  %1039 = vmatprep.mubr.bf16.mxu0 %v347
  %1040 = vmatmul.mubr.bf16.gmra.mxu0 %v346
  %v1041 = vpop.f32.mrf.mxu0
  %v1042 = vadd.f32 %v970, %v1041
  %v1043 = vpop.f32.mrf.mxu0
  %v1044 = vpop.f32.mrf.mxu0
  %v1045 = vadd.f32 %v973, %v1044
  %v1046 = vpop.f32.mrf.mxu0
  %1047 = vmatprep.mubr.bf16.mxu0 %v356
  %1048 = vmatmul.mubr.bf16.gmra.mxu0 %v355
  %v1049 = vpop.f32.mrf.mxu0
  %v1050 = vadd.f32 %v978, %v1049
  %v1051 = vpop.f32.mrf.mxu0
  %v1052 = vpop.f32.mrf.mxu0
  %v1053 = vadd.f32 %v981, %v1052
  %v1054 = vpop.f32.mrf.mxu0
  %1055 = vmatprep.mubr.bf16.mxu0 %v365
  %1056 = vmatmul.mubr.bf16.gmra.mxu0 %v364
  %v1057 = vpop.f32.mrf.mxu0
  %v1058 = vadd.f32 %v986, %v1057
  %v1059 = vpop.f32.mrf.mxu0
  %v1060 = vpop.f32.mrf.mxu0
  %v1061 = vadd.f32 %v989, %v1060
  %v1062 = vpop.f32.mrf.mxu0
  %1063 = vmatprep.mubr.bf16.mxu0 %v374
  %1064 = vmatmul.mubr.bf16.gmra.mxu0 %v373
  %v1065 = vpop.f32.mrf.mxu0
  %v1066 = vadd.f32 %v994, %v1065
  %v1067 = vpop.f32.mrf.mxu0
  %v1068 = vpop.f32.mrf.mxu0
  %v1069 = vpop.f32.mrf.mxu0
  %1070 = vdwg.mxu0
  %1071 = vmatprep.subr.bf16.mxu0 0
  %1072 = vmatpush1.bf16.msra.mxu0 %v766
  %1073 = vmatprep.subr.bf16.mxu0 0
  %1074 = vmatpush1.bf16.msra.mxu0 %v765
  %1075 = vmatprep.subr.bf16.mxu0 0
  %1076 = vmatpush1.bf16.msra.mxu0 %v764
  %1077 = vmatprep.subr.bf16.mxu0 0
  %1078 = vmatpush1.bf16.msra.mxu0 %v763
  %1079 = vmatprep.subr.bf16.mxu0 0
  %1080 = vmatpush1.bf16.msra.mxu0 %v762
  %1081 = vmatprep.subr.bf16.mxu0 0
  %1082 = vmatpush1.bf16.msra.mxu0 %v761
  %1083 = vmatprep.subr.bf16.mxu0 0
  %1084 = vmatpush1.bf16.msra.mxu0 %v760
  %1085 = vmatprep.subr.bf16.mxu0 0
  %1086 = vmatpush1.bf16.msra.mxu0 %v759
  %1087 = vmatprep.subr.bf16.mxu0 0
  %1088 = vmatpush2.bf16.msra.mxu0 %v774
  %1089 = vmatprep.subr.bf16.mxu0 0
  %1090 = vmatpush2.bf16.msra.mxu0 %v773
  %1091 = vmatprep.subr.bf16.mxu0 0
  %1092 = vmatpush2.bf16.msra.mxu0 %v772
  %1093 = vmatprep.subr.bf16.mxu0 0
  %1094 = vmatpush2.bf16.msra.mxu0 %v771
  %1095 = vmatprep.subr.bf16.mxu0 0
  %1096 = vmatpush2.bf16.msra.mxu0 %v770
  %1097 = vmatprep.subr.bf16.mxu0 0
  %1098 = vmatpush2.bf16.msra.mxu0 %v769
  %1099 = vmatprep.subr.bf16.mxu0 0
  %1100 = vmatpush2.bf16.msra.mxu0 %v768
  %1101 = vmatprep.subr.bf16.mxu0 0
  %1102 = vmatpush2.bf16.msra.mxu0 %v767
  %1103 = vmatprep.mubr.bf16.mxu0 %v340
  %1104 = vmatmul.mubr.bf16.gmra.mxu0 %v339
  %v1105 = vpop.f32.mrf.mxu0
  %v1106 = vadd.f32 %v1034, %v1105
  %v1107 = vpop.f32.mrf.mxu0
  %v1108 = vpop.f32.mrf.mxu0
  %v1109 = vadd.f32 %v1037, %v1108
  %v1110 = vpop.f32.mrf.mxu0
  %1111 = vmatprep.mubr.bf16.mxu0 %v349
  %1112 = vmatmul.mubr.bf16.gmra.mxu0 %v348
  %v1113 = vpop.f32.mrf.mxu0
  %v1114 = vadd.f32 %v1042, %v1113
  %v1115 = vpop.f32.mrf.mxu0
  %v1116 = vpop.f32.mrf.mxu0
  %v1117 = vadd.f32 %v1045, %v1116
  %v1118 = vpop.f32.mrf.mxu0
  %1119 = vmatprep.mubr.bf16.mxu0 %v358
  %1120 = vmatmul.mubr.bf16.gmra.mxu0 %v357
  %v1121 = vpop.f32.mrf.mxu0
  %v1122 = vadd.f32 %v1050, %v1121
  %v1123 = vpop.f32.mrf.mxu0
  %v1124 = vpop.f32.mrf.mxu0
  %v1125 = vadd.f32 %v1053, %v1124
  %v1126 = vpop.f32.mrf.mxu0
  %1127 = vmatprep.mubr.bf16.mxu0 %v367
  %1128 = vmatmul.mubr.bf16.gmra.mxu0 %v366
  %v1129 = vpop.f32.mrf.mxu0
  %v1130 = vadd.f32 %v1058, %v1129
  %v1131 = vpop.f32.mrf.mxu0
  %v1132 = vpop.f32.mrf.mxu0
  %v1133 = vadd.f32 %v1061, %v1132
  %v1134 = vpop.f32.mrf.mxu0
  %1135 = vmatprep.mubr.bf16.mxu0 %v376
  %1136 = vmatmul.mubr.bf16.gmra.mxu0 %v375
  %v1137 = vpop.f32.mrf.mxu0
  %v1138 = vadd.f32 %v1066, %v1137
  %v1139 = vpop.f32.mrf.mxu0
  %v1140 = vpop.f32.mrf.mxu0
  %v1141 = vpop.f32.mrf.mxu0
  %1142 = vdwg.mxu0
  %1143 = vmatprep.subr.bf16.mxu0 0
  %1144 = vmatpush1.bf16.msra.mxu0 %v782
  %1145 = vmatprep.subr.bf16.mxu0 0
  %1146 = vmatpush1.bf16.msra.mxu0 %v781
  %1147 = vmatprep.subr.bf16.mxu0 0
  %1148 = vmatpush1.bf16.msra.mxu0 %v780
  %1149 = vmatprep.subr.bf16.mxu0 0
  %1150 = vmatpush1.bf16.msra.mxu0 %v779
  %1151 = vmatprep.subr.bf16.mxu0 0
  %1152 = vmatpush1.bf16.msra.mxu0 %v778
  %1153 = vmatprep.subr.bf16.mxu0 0
  %1154 = vmatpush1.bf16.msra.mxu0 %v777
  %1155 = vmatprep.subr.bf16.mxu0 0
  %1156 = vmatpush1.bf16.msra.mxu0 %v776
  %1157 = vmatprep.subr.bf16.mxu0 0
  %1158 = vmatpush1.bf16.msra.mxu0 %v775
  %1159 = vmatprep.subr.bf16.mxu0 0
  %1160 = vmatpush2.bf16.msra.mxu0 0
  %1161 = vmatprep.subr.bf16.mxu0 0
  %1162 = vmatpush2.bf16.msra.mxu0 0
  %1163 = vmatprep.subr.bf16.mxu0 0
  %1164 = vmatpush2.bf16.msra.mxu0 0
  %1165 = vmatprep.subr.bf16.mxu0 0
  %1166 = vmatpush2.bf16.msra.mxu0 0
  %1167 = vmatprep.subr.bf16.mxu0 0
  %1168 = vmatpush2.bf16.msra.mxu0 0
  %1169 = vmatprep.subr.bf16.mxu0 0
  %1170 = vmatpush2.bf16.msra.mxu0 0
  %1171 = vmatprep.subr.bf16.mxu0 0
  %1172 = vmatpush2.bf16.msra.mxu0 0
  %1173 = vmatprep.subr.bf16.mxu0 0
  %1174 = vmatpush2.bf16.msra.mxu0 0
  %1175 = vmatprep.mubr.bf16.mxu0 0
  %1176 = vmatmul.mubr.bf16.gmra.mxu0 %v341
  %v1177 = vpop.f32.mrf.mxu0
  %v1178 = vadd.f32 %v1106, %v1177
  %v1179 = vpop.f32.mrf.mxu0
  %v1180 = vpop.f32.mrf.mxu0
  %v1181 = vadd.f32 %v1109, %v1180
  %v1182 = vpop.f32.mrf.mxu0
  %1183 = vmatprep.mubr.bf16.mxu0 0
  %1184 = vmatmul.mubr.bf16.gmra.mxu0 %v350
  %v1185 = vpop.f32.mrf.mxu0
  %v1186 = vadd.f32 %v1114, %v1185
  %v1187 = vpop.f32.mrf.mxu0
  %v1188 = vpop.f32.mrf.mxu0
  %v1189 = vadd.f32 %v1117, %v1188
  %v1190 = vpop.f32.mrf.mxu0
  %1191 = vmatprep.mubr.bf16.mxu0 0
  %1192 = vmatmul.mubr.bf16.gmra.mxu0 %v359
  %v1193 = vpop.f32.mrf.mxu0
  %v1194 = vadd.f32 %v1122, %v1193
  %v1195 = vpop.f32.mrf.mxu0
  %v1196 = vpop.f32.mrf.mxu0
  %v1197 = vadd.f32 %v1125, %v1196
  %v1198 = vpop.f32.mrf.mxu0
  %1199 = vmatprep.mubr.bf16.mxu0 0
  %1200 = vmatmul.mubr.bf16.gmra.mxu0 %v368
  %v1201 = vpop.f32.mrf.mxu0
  %v1202 = vadd.f32 %v1130, %v1201
  %v1203 = vpop.f32.mrf.mxu0
  %v1204 = vpop.f32.mrf.mxu0
  %v1205 = vadd.f32 %v1133, %v1204
  %v1206 = vpop.f32.mrf.mxu0
  %1207 = vmatprep.mubr.bf16.mxu0 0
  %1208 = vmatmul.mubr.bf16.gmra.mxu0 %v377
  %v1209 = vpop.f32.mrf.mxu0
  %v1210 = vadd.f32 %v1138, %v1209
  %v1211 = vpop.f32.mrf.mxu0
  %v1212 = vpop.f32.mrf.mxu0
  %v1213 = vpop.f32.mrf.mxu0
  %1214 = vdwg.mxu0
  %v1215 = vld [vmem:[%s2] sm:$0x1]
  %v1217 = vlaneseq
  %v1218 = vshrl.u32 %v1217, 7
  %v1219 = vsub.s32 0, %v1218
  %v1220 = vrot.slane %v1215, %v1219
  %v1222 = vmul.f32 %v1178, %v1220
  %v1223 = vmul.f32 %v1181, %v1220
  %v1224 = vmul.f32 %v1186, %v1220
  %v1225 = vmul.f32 %v1189, %v1220
  %v1226 = vmul.f32 %v1194, %v1220
  %v1227 = vmul.f32 %v1197, %v1220
  %v1228 = vmul.f32 %v1202, %v1220
  %v1229 = vmul.f32 %v1205, %v1220
  %v1230 = vmul.f32 %v1210, %v1220
  %v1231 = vld [vmem:[%s3] sm:$0x1]
  %v1233 = vlaneseq
  %v1234 = vshrl.u32 %v1233, 7
  %v1235 = vsub.s32 0, %v1234
  %v1236 = vrot.slane %v1231, %v1235
  %v1238 = vadd.f32 %v1222, %v1236
  %v1239 = vadd.f32 %v1223, %v1236
  %v1240 = vadd.f32 %v1224, %v1236
  %v1241 = vadd.f32 %v1225, %v1236
  %v1242 = vadd.f32 %v1226, %v1236
  %v1243 = vadd.f32 %v1227, %v1236
  %v1244 = vadd.f32 %v1228, %v1236
  %v1245 = vadd.f32 %v1229, %v1236
  %v1246 = vadd.f32 %v1230, %v1236
  %v1247 = vmax.f32 %v1238, 0.0
  %v1248 = vmax.f32 %v1239, 0.0
  %v1249 = vmax.f32 %v1240, 0.0
  %v1250 = vmax.f32 %v1241, 0.0
  %v1251 = vmax.f32 %v1242, 0.0
  %v1252 = vmax.f32 %v1243, 0.0
  %v1253 = vmax.f32 %v1244, 0.0
  %v1254 = vmax.f32 %v1245, 0.0
  %v1255 = vmax.f32 %v1246, 0.0
  %1256 = vst [vmem:[%s4] sm:$0xff] %v1247
  %1257 = vst [vmem:[%s4 + $0x8] sm:$0xff] %v1248
  %1258 = vst [vmem:[%s4 + $0x10] sm:$0xff] %v1249
  %1259 = vst [vmem:[%s4 + $0x18] sm:$0xff] %v1250
  %1260 = vst [vmem:[%s4 + $0x20] sm:$0xff] %v1251
  %1261 = vst [vmem:[%s4 + $0x28] sm:$0xff] %v1252
  %1262 = vst [vmem:[%s4 + $0x30] sm:$0xff] %v1253
  %1263 = vst [vmem:[%s4 + $0x38] sm:$0xff] %v1254
  %1264 = vst [vmem:[%s4 + $0x40] sm:$0xff] %v1255
  // Predicated region
  $region18: #{net_forward.7} parent=0 // pred_check
    _
  $region19: #{net_forward.7} parent=0 // pred_check_branch
    %1266 = sbr.rel (0) target = $region21
  $region20: #{net_forward.7} parent=0 // pred_region
    _
  $region21: #{net_forward.7} parent=0 // pred_fallthru
    _
  // Predicated region
  $region22: #{net_forward.7} parent=0 // pred_check
    _
  $region23: #{net_forward.7} parent=0 // pred_check_branch
    %1268 = sbr.rel (0) target = $region25
  $region24: #{net_forward.7} parent=0 // pred_region
    _
  $region25: #{net_forward.7} parent=0 // pred_fallthru
    _

// kernel: net_forward.9
$region0: #{net_forward.9}
  #allocation0 [shape = 'u32[]', space=smem, size = 0x4, offset = 0x4, fixed_abs, tag = 'smem constant byte address 0x4 - core index']
  #allocation1 [shape = 'u32[144,128]{1,0:T(1,128)}', space=vmem, size = 0x12000, scoped, tag = 'internal scratch']
  %s0 = inlined_call_operand.vmem [shape: f32[2,128], index: 0, kind: input, shape index: {}]
  %s1 = inlined_call_operand.vmem [shape: f32[128,128], index: 1, kind: input, shape index: {}]
  %s2 = inlined_call_operand.vmem [shape: f32[1,128], index: 2, kind: input, shape index: {}]
  %s3 = inlined_call_operand.vmem [shape: f32[1,128], index: 3, kind: input, shape index: {}]
  %s4 = inlined_call_operand.vmem [shape: f32[128,128], index: 4, kind: input, shape index: {}]
  %s5 = inlined_call_operand.vmem [shape: f32[1,128], index: 5, kind: input, shape index: {}]
  %s6 = inlined_call_operand.hbm [shape: f32[2,128], index: 6, kind: output, shape index: {}]
  %s7 = sld [smem:[#allocation0]]
  $region34: #{net_forward.9} parent=0
    _
  %s9 = ssub.s32 1, %s7
  %s10 = scalar_select 0, %s9, %s7
  $region1: #{net_forward.9} parent=0
    #allocation2 [shape = 'u8[1024]{0}', space=vmem, size = 0x400, scoped, tag = 'output window, operand 0, single buffered']
    #allocation3 [shape = 's32[1]{0}', space=sflag, size = 0x4, scoped, tag = 'scoped memory for net_forward.9']
    %11 = vsyncpa [#allocation3], 0
    // Predicated region
    $region2: #{net_forward.9} parent=1 // pred_check
      _
    $region3: #{net_forward.9} parent=1 // pred_check_branch
      %13 = sbr.rel (0) target = $region5
    $region4: #{net_forward.9} parent=1 // pred_region
      _
    $region5: #{net_forward.9} parent=1 // pred_fallthru
      _
    // Predicated region
    $region6: #{net_forward.9} parent=1 // pred_check
      _
    $region7: #{net_forward.9} parent=1 // pred_check_branch
      %15 = sbr.rel (0) target = $region9
    $region8: #{net_forward.9} parent=1 // pred_region
      _
    $region9: #{net_forward.9} parent=1 // pred_fallthru
      _
    // Predicated region
    $region10: #{net_forward.9} parent=1 // pred_check
      _
    $region11: #{net_forward.9} parent=1 // pred_check_branch
      %17 = sbr.rel (0) target = $region13
    $region12: #{net_forward.9} parent=1 // pred_region
      _
    $region13: #{net_forward.9} parent=1 // pred_fallthru
      _
    // Predicated region
    $region14: #{net_forward.9} parent=1 // pred_check
      _
    $region15: #{net_forward.9} parent=1 // pred_check_branch
      %19 = sbr.rel (0) target = $region17
    $region16: #{net_forward.9} parent=1 // pred_region
      _
    $region17: #{net_forward.9} parent=1 // pred_fallthru
      _
    // Predicated region
    $region18: #{net_forward.9} parent=1 // pred_check
      _
    $region19: #{net_forward.9} parent=1 // pred_check_branch
      %21 = sbr.rel (0) target = $region21
    $region20: #{net_forward.9} parent=1 // pred_region
      _
    $region21: #{net_forward.9} parent=1 // pred_fallthru
      _
    // Predicated region
    $region22: #{net_forward.9} parent=1 // pred_check
      _
    $region23: #{net_forward.9} parent=1 // pred_check_branch
      %23 = sbr.rel (0) target = $region25
    $region24: #{net_forward.9} parent=1 // pred_region
      _
    $region25: #{net_forward.9} parent=1 // pred_fallthru
      _
    %v24 = vld [vmem:[%s0] sm:$0x3]
    %v25 = vld [vmem:[%s1] sm:$0xff]
    %v26 = vld [vmem:[%s1 + $0x8] sm:$0xff]
    %v27 = vld [vmem:[%s1 + $0x10] sm:$0xff]
    %v28 = vld [vmem:[%s1 + $0x18] sm:$0xff]
    %v29 = vld [vmem:[%s1 + $0x20] sm:$0xff]
    %v30 = vld [vmem:[%s1 + $0x28] sm:$0xff]
    %v31 = vld [vmem:[%s1 + $0x30] sm:$0xff]
    %v32 = vld [vmem:[%s1 + $0x38] sm:$0xff]
    %v33 = vld [vmem:[%s1 + $0x40] sm:$0xff]
    %v34 = vld [vmem:[%s1 + $0x48] sm:$0xff]
    %v35 = vld [vmem:[%s1 + $0x50] sm:$0xff]
    %v36 = vld [vmem:[%s1 + $0x58] sm:$0xff]
    %v37 = vld [vmem:[%s1 + $0x60] sm:$0xff]
    %v38 = vld [vmem:[%s1 + $0x68] sm:$0xff]
    %v39 = vld [vmem:[%s1 + $0x70] sm:$0xff]
    %v40 = vld [vmem:[%s1 + $0x78] sm:$0xff]
    %41 = vmatprep.subr.mxu0 0.0
    %42 = vmatpush1.msra.mxu0 %v40
    %43 = vmatprep.subr.mxu0 0.0
    %44 = vmatpush1.msra.mxu0 %v39
    %45 = vmatprep.subr.mxu0 0.0
    %46 = vmatpush1.msra.mxu0 %v38
    %47 = vmatprep.subr.mxu0 0.0
    %48 = vmatpush1.msra.mxu0 %v37
    %49 = vmatprep.subr.mxu0 0.0
    %50 = vmatpush1.msra.mxu0 %v36
    %51 = vmatprep.subr.mxu0 0.0
    %52 = vmatpush1.msra.mxu0 %v35
    %53 = vmatprep.subr.mxu0 0.0
    %54 = vmatpush1.msra.mxu0 %v34
    %55 = vmatprep.subr.mxu0 0.0
    %56 = vmatpush1.msra.mxu0 %v33
    %57 = vmatprep.subr.mxu0 0.0
    %58 = vmatpush1.msra.mxu0 %v32
    %59 = vmatprep.subr.mxu0 0.0
    %60 = vmatpush1.msra.mxu0 %v31
    %61 = vmatprep.subr.mxu0 0.0
    %62 = vmatpush1.msra.mxu0 %v30
    %63 = vmatprep.subr.mxu0 0.0
    %64 = vmatpush1.msra.mxu0 %v29
    %65 = vmatprep.subr.mxu0 0.0
    %66 = vmatpush1.msra.mxu0 %v28
    %67 = vmatprep.subr.mxu0 0.0
    %68 = vmatpush1.msra.mxu0 %v27
    %69 = vmatprep.subr.mxu0 0.0
    %70 = vmatpush1.msra.mxu0 %v26
    %71 = vmatprep.subr.mxu0 0.0
    %72 = vmatpush1.msra.mxu0 %v25
    %73 = vmatprep.subr.mxu0 0.0
    %74 = vmatpush2.msra.mxu0 0.0
    %75 = vmatprep.subr.mxu0 0.0
    %76 = vmatpush2.msra.mxu0 0.0
    %77 = vmatprep.subr.mxu0 0.0
    %78 = vmatpush2.msra.mxu0 0.0
    %79 = vmatprep.subr.mxu0 0.0
    %80 = vmatpush2.msra.mxu0 0.0
    %81 = vmatprep.subr.mxu0 0.0
    %82 = vmatpush2.msra.mxu0 0.0
    %83 = vmatprep.subr.mxu0 0.0
    %84 = vmatpush2.msra.mxu0 0.0
    %85 = vmatprep.subr.mxu0 0.0
    %86 = vmatpush2.msra.mxu0 0.0
    %87 = vmatprep.subr.mxu0 0.0
    %88 = vmatpush2.msra.mxu0 0.0
    %89 = vmatprep.subr.mxu0 0.0
    %90 = vmatpush2.msra.mxu0 0.0
    %91 = vmatprep.subr.mxu0 0.0
    %92 = vmatpush2.msra.mxu0 0.0
    %93 = vmatprep.subr.mxu0 0.0
    %94 = vmatpush2.msra.mxu0 0.0
    %95 = vmatprep.subr.mxu0 0.0
    %96 = vmatpush2.msra.mxu0 0.0
    %97 = vmatprep.subr.mxu0 0.0
    %98 = vmatpush2.msra.mxu0 0.0
    %99 = vmatprep.subr.mxu0 0.0
    %100 = vmatpush2.msra.mxu0 0.0
    %101 = vmatprep.subr.mxu0 0.0
    %102 = vmatpush2.msra.mxu0 0.0
    %103 = vmatprep.subr.mxu0 0.0
    %104 = vmatpush2.msra.mxu0 0.0
    %105 = vmatprep.mubr.f32.mxu0 0.0
    %106 = vmatmul.mubr.f32.gmra.mxu0 %v24
    %v107 = vpop.f32.mrf.mxu0
    %v108 = vadd.f32 0.0, %v107
    %v109 = vpop.f32.mrf.mxu0
    %110 = vdwg.mxu0
    %v111 = vld [vmem:[%s2] sm:$0x1]
    %v113 = vlaneseq
    %v114 = vshrl.u32 %v113, 7
    %v115 = vsub.s32 0, %v114
    %v116 = vrot.slane %v111, %v115
    %v118 = vmul.f32 %v108, %v116
    %v119 = vld [vmem:[%s3] sm:$0x1]
    %v121 = vlaneseq
    %v122 = vshrl.u32 %v121, 7
    %v123 = vsub.s32 0, %v122
    %v124 = vrot.slane %v119, %v123
    %v126 = vadd.f32 %v118, %v124
    %v127 = vmax.f32 %v126, 0.0
    %v128 = vld [vmem:[%s4] sm:$0xff]
    %v129 = vld [vmem:[%s4 + $0x8] sm:$0xff]
    %v130 = vld [vmem:[%s4 + $0x10] sm:$0xff]
    %v131 = vld [vmem:[%s4 + $0x18] sm:$0xff]
    %v132 = vld [vmem:[%s4 + $0x20] sm:$0xff]
    %v133 = vld [vmem:[%s4 + $0x28] sm:$0xff]
    %v134 = vld [vmem:[%s4 + $0x30] sm:$0xff]
    %v135 = vld [vmem:[%s4 + $0x38] sm:$0xff]
    %v136 = vld [vmem:[%s4 + $0x40] sm:$0xff]
    %v137 = vld [vmem:[%s4 + $0x48] sm:$0xff]
    %v138 = vld [vmem:[%s4 + $0x50] sm:$0xff]
    %v139 = vld [vmem:[%s4 + $0x58] sm:$0xff]
    %v140 = vld [vmem:[%s4 + $0x60] sm:$0xff]
    %v141 = vld [vmem:[%s4 + $0x68] sm:$0xff]
    %v142 = vld [vmem:[%s4 + $0x70] sm:$0xff]
    %v143 = vld [vmem:[%s4 + $0x78] sm:$0xff]
    %v144 = vld [vmem:[%s5] sm:$0x1]
    %v146 = vlaneseq
    %v147 = vshrl.u32 %v146, 7
    %v148 = vsub.s32 0, %v147
    %v149 = vrot.slane %v144, %v148
    %151 = vmatprep.subr.mxu0 0.0
    %152 = vmatpush1.msra.mxu0 %v143
    %153 = vmatprep.subr.mxu0 0.0
    %154 = vmatpush1.msra.mxu0 %v142
    %155 = vmatprep.subr.mxu0 0.0
    %156 = vmatpush1.msra.mxu0 %v141
    %157 = vmatprep.subr.mxu0 0.0
    %158 = vmatpush1.msra.mxu0 %v140
    %159 = vmatprep.subr.mxu0 0.0
    %160 = vmatpush1.msra.mxu0 %v139
    %161 = vmatprep.subr.mxu0 0.0
    %162 = vmatpush1.msra.mxu0 %v138
    %163 = vmatprep.subr.mxu0 0.0
    %164 = vmatpush1.msra.mxu0 %v137
    %165 = vmatprep.subr.mxu0 0.0
    %166 = vmatpush1.msra.mxu0 %v136
    %167 = vmatprep.subr.mxu0 0.0
    %168 = vmatpush1.msra.mxu0 %v135
    %169 = vmatprep.subr.mxu0 0.0
    %170 = vmatpush1.msra.mxu0 %v134
    %171 = vmatprep.subr.mxu0 0.0
    %172 = vmatpush1.msra.mxu0 %v133
    %173 = vmatprep.subr.mxu0 0.0
    %174 = vmatpush1.msra.mxu0 %v132
    %175 = vmatprep.subr.mxu0 0.0
    %176 = vmatpush1.msra.mxu0 %v131
    %177 = vmatprep.subr.mxu0 0.0
    %178 = vmatpush1.msra.mxu0 %v130
    %179 = vmatprep.subr.mxu0 0.0
    %180 = vmatpush1.msra.mxu0 %v129
    %181 = vmatprep.subr.mxu0 0.0
    %182 = vmatpush1.msra.mxu0 %v128
    %183 = vmatprep.subr.mxu0 0.0
    %184 = vmatpush2.msra.mxu0 0.0
    %185 = vmatprep.subr.mxu0 0.0
    %186 = vmatpush2.msra.mxu0 0.0
    %187 = vmatprep.subr.mxu0 0.0
    %188 = vmatpush2.msra.mxu0 0.0
    %189 = vmatprep.subr.mxu0 0.0
    %190 = vmatpush2.msra.mxu0 0.0
    %191 = vmatprep.subr.mxu0 0.0
    %192 = vmatpush2.msra.mxu0 0.0
    %193 = vmatprep.subr.mxu0 0.0
    %194 = vmatpush2.msra.mxu0 0.0
    %195 = vmatprep.subr.mxu0 0.0
    %196 = vmatpush2.msra.mxu0 0.0
    %197 = vmatprep.subr.mxu0 0.0
    %198 = vmatpush2.msra.mxu0 0.0
    %199 = vmatprep.subr.mxu0 0.0
    %200 = vmatpush2.msra.mxu0 0.0
    %201 = vmatprep.subr.mxu0 0.0
    %202 = vmatpush2.msra.mxu0 0.0
    %203 = vmatprep.subr.mxu0 0.0
    %204 = vmatpush2.msra.mxu0 0.0
    %205 = vmatprep.subr.mxu0 0.0
    %206 = vmatpush2.msra.mxu0 0.0
    %207 = vmatprep.subr.mxu0 0.0
    %208 = vmatpush2.msra.mxu0 0.0
    %209 = vmatprep.subr.mxu0 0.0
    %210 = vmatpush2.msra.mxu0 0.0
    %211 = vmatprep.subr.mxu0 0.0
    %212 = vmatpush2.msra.mxu0 0.0
    %213 = vmatprep.subr.mxu0 0.0
    %214 = vmatpush2.msra.mxu0 0.0
    %215 = vmatprep.mubr.f32.mxu0 0.0
    %216 = vmatmul.mubr.f32.gmra.mxu0 %v127
    %v217 = vpop.f32.mrf.mxu0
    %v218 = vadd.f32 %v149, %v217
    %v219 = vpop.f32.mrf.mxu0
    %220 = vdwg.mxu0
    %221 = vst [vmem:[#allocation2] sm:$0x3] %v218
    // Predicated region
    $region26: #{net_forward.9} parent=1 // pred_check
      _
    $region27: #{net_forward.9} parent=1 // pred_check_branch
      %223 = sbr.rel (0) target = $region29
    $region28: #{net_forward.9} parent=1 // pred_region
      %s225 = ssub.s32 32, 32
      %226 = vsyncadd [#allocation3], %s225
      %s228 = sshll.u32 [#allocation2], 4
      %s229 = int_to_ptr.vmem [resolvable:$true] %s228
      %231 = dma.vmem_to_hbm [thread:$0]  %s229, 32, %s6, [#allocation3]
    $region29: #{net_forward.9} parent=1 // pred_fallthru
      _
    // Predicated region
    $region30: #{net_forward.9} parent=1 // pred_check
      _
    $region31: #{net_forward.9} parent=1 // pred_check_branch
      %233 = sbr.rel (0) target = $region33
    $region32: #{net_forward.9} parent=1 // pred_region
      %234 = dma.done [#allocation3], 32
    $region33: #{net_forward.9} parent=1 // pred_fallthru
      _
    %235 = vsyncpa [#allocation3], 1

// kernel: net_forward.8
$region0: #{net_forward.8}
  #allocation0 [shape = 'u32[]', space=smem, size = 0x4, offset = 0x4, fixed_abs, tag = 'smem constant byte address 0x4 - core index']
  #allocation1 [shape = 'u32[144,128]{1,0:T(1,128)}', space=vmem, size = 0x12000, scoped, tag = 'internal scratch']
  %s0 = inlined_call_operand.vmem [shape: bf16[32,1152], index: 0, kind: input, shape index: {}]
  %s1 = inlined_call_operand.vmem [shape: bf16[1152,128], index: 1, kind: input, shape index: {}]
  %s2 = inlined_call_operand.vmem [shape: f32[1,128], index: 2, kind: input, shape index: {}]
  %s3 = inlined_call_operand.vmem [shape: f32[1,128], index: 3, kind: input, shape index: {}]
  %s4 = inlined_call_operand.vmem [shape: f32[32,128], index: 4, kind: output, shape index: {}]
  %s5 = sld [smem:[#allocation0]]
  $region26: #{net_forward.8} parent=0
    _
  %s7 = ssub.s32 1, %s5
  %s8 = scalar_select 0, %s7, %s5
  // Predicated region
  $region2: #{net_forward.8} parent=0 // pred_check
    _
  $region3: #{net_forward.8} parent=0 // pred_check_branch
    %10 = sbr.rel (0) target = $region5
  $region4: #{net_forward.8} parent=0 // pred_region
    _
  $region5: #{net_forward.8} parent=0 // pred_fallthru
    _
  // Predicated region
  $region6: #{net_forward.8} parent=0 // pred_check
    _
  $region7: #{net_forward.8} parent=0 // pred_check_branch
    %12 = sbr.rel (0) target = $region9
  $region8: #{net_forward.8} parent=0 // pred_region
    _
  $region9: #{net_forward.8} parent=0 // pred_fallthru
    _
  // Predicated region
  $region10: #{net_forward.8} parent=0 // pred_check
    _
  $region11: #{net_forward.8} parent=0 // pred_check_branch
    %14 = sbr.rel (0) target = $region13
  $region12: #{net_forward.8} parent=0 // pred_region
    _
  $region13: #{net_forward.8} parent=0 // pred_fallthru
    _
  // Predicated region
  $region14: #{net_forward.8} parent=0 // pred_check
    _
  $region15: #{net_forward.8} parent=0 // pred_check_branch
    %16 = sbr.rel (0) target = $region17
  $region16: #{net_forward.8} parent=0 // pred_region
    _
  $region17: #{net_forward.8} parent=0 // pred_fallthru
    _
  %v18 = vld [vmem:[%s0] sm:$0xff]
  %v19 = vld [vmem:[%s0 + $0x8] sm:$0xff]
  %v20 = vld [vmem:[%s0 + $0x10] sm:$0xff]
  %v21 = vld [vmem:[%s0 + $0x18] sm:$0xff]
  %v22 = vld [vmem:[%s0 + $0x20] sm:$0xf]
  %v23 = vld [vmem:[%s0 + $0x24] sm:$0xff]
  %v24 = vld [vmem:[%s0 + $0x2c] sm:$0xff]
  %v25 = vld [vmem:[%s0 + $0x34] sm:$0xff]
  %v26 = vld [vmem:[%s0 + $0x3c] sm:$0xff]
  %v27 = vld [vmem:[%s0 + $0x44] sm:$0xf]
  %v28 = vld [vmem:[%s0 + $0x48] sm:$0xff]
  %v29 = vld [vmem:[%s0 + $0x50] sm:$0xff]
  %v30 = vld [vmem:[%s0 + $0x58] sm:$0xff]
  %v31 = vld [vmem:[%s0 + $0x60] sm:$0xff]
  %v32 = vld [vmem:[%s0 + $0x68] sm:$0xf]
  %v33 = vld [vmem:[%s0 + $0x6c] sm:$0xff]
  %v34 = vld [vmem:[%s0 + $0x74] sm:$0xff]
  %v35 = vld [vmem:[%s0 + $0x7c] sm:$0xff]
  %v36 = vld [vmem:[%s0 + $0x84] sm:$0xff]
  %v37 = vld [vmem:[%s0 + $0x8c] sm:$0xf]
  %v38 = vld [vmem:[%s1] sm:$0xf]
  %v39 = vld [vmem:[%s1 + $0x4] sm:$0xf]
  %v40 = vld [vmem:[%s1 + $0x8] sm:$0xf]
  %v41 = vld [vmem:[%s1 + $0xc] sm:$0xf]
  %v42 = vld [vmem:[%s1 + $0x10] sm:$0xf]
  %v43 = vld [vmem:[%s1 + $0x14] sm:$0xf]
  %v44 = vld [vmem:[%s1 + $0x18] sm:$0xf]
  %v45 = vld [vmem:[%s1 + $0x1c] sm:$0xf]
  %v46 = vld [vmem:[%s1 + $0x20] sm:$0xf]
  %v47 = vld [vmem:[%s1 + $0x24] sm:$0xf]
  %v48 = vld [vmem:[%s1 + $0x28] sm:$0xf]
  %v49 = vld [vmem:[%s1 + $0x2c] sm:$0xf]
  %v50 = vld [vmem:[%s1 + $0x30] sm:$0xf]
  %v51 = vld [vmem:[%s1 + $0x34] sm:$0xf]
  %v52 = vld [vmem:[%s1 + $0x38] sm:$0xf]
  %v53 = vld [vmem:[%s1 + $0x3c] sm:$0xf]
  %v54 = vld [vmem:[%s1 + $0x40] sm:$0xf]
  %v55 = vld [vmem:[%s1 + $0x44] sm:$0xf]
  %v56 = vld [vmem:[%s1 + $0x48] sm:$0xf]
  %v57 = vld [vmem:[%s1 + $0x4c] sm:$0xf]
  %v58 = vld [vmem:[%s1 + $0x50] sm:$0xf]
  %v59 = vld [vmem:[%s1 + $0x54] sm:$0xf]
  %v60 = vld [vmem:[%s1 + $0x58] sm:$0xf]
  %v61 = vld [vmem:[%s1 + $0x5c] sm:$0xf]
  %v62 = vld [vmem:[%s1 + $0x60] sm:$0xf]
  %v63 = vld [vmem:[%s1 + $0x64] sm:$0xf]
  %v64 = vld [vmem:[%s1 + $0x68] sm:$0xf]
  %v65 = vld [vmem:[%s1 + $0x6c] sm:$0xf]
  %v66 = vld [vmem:[%s1 + $0x70] sm:$0xf]
  %v67 = vld [vmem:[%s1 + $0x74] sm:$0xf]
  %v68 = vld [vmem:[%s1 + $0x78] sm:$0xf]
  %v69 = vld [vmem:[%s1 + $0x7c] sm:$0xf]
  %v70 = vld [vmem:[%s1 + $0x80] sm:$0xf]
  %v71 = vld [vmem:[%s1 + $0x84] sm:$0xf]
  %v72 = vld [vmem:[%s1 + $0x88] sm:$0xf]
  %v73 = vld [vmem:[%s1 + $0x8c] sm:$0xf]
  %v74 = vld [vmem:[%s1 + $0x90] sm:$0xf]
  %v75 = vld [vmem:[%s1 + $0x94] sm:$0xf]
  %v76 = vld [vmem:[%s1 + $0x98] sm:$0xf]
  %v77 = vld [vmem:[%s1 + $0x9c] sm:$0xf]
  %v78 = vld [vmem:[%s1 + $0xa0] sm:$0xf]
  %v79 = vld [vmem:[%s1 + $0xa4] sm:$0xf]
  %v80 = vld [vmem:[%s1 + $0xa8] sm:$0xf]
  %v81 = vld [vmem:[%s1 + $0xac] sm:$0xf]
  %v82 = vld [vmem:[%s1 + $0xb0] sm:$0xf]
  %v83 = vld [vmem:[%s1 + $0xb4] sm:$0xf]
  %v84 = vld [vmem:[%s1 + $0xb8] sm:$0xf]
  %v85 = vld [vmem:[%s1 + $0xbc] sm:$0xf]
  %v86 = vld [vmem:[%s1 + $0xc0] sm:$0xf]
  %v87 = vld [vmem:[%s1 + $0xc4] sm:$0xf]
  %v88 = vld [vmem:[%s1 + $0xc8] sm:$0xf]
  %v89 = vld [vmem:[%s1 + $0xcc] sm:$0xf]
  %v90 = vld [vmem:[%s1 + $0xd0] sm:$0xf]
  %v91 = vld [vmem:[%s1 + $0xd4] sm:$0xf]
  %v92 = vld [vmem:[%s1 + $0xd8] sm:$0xf]
  %v93 = vld [vmem:[%s1 + $0xdc] sm:$0xf]
  %v94 = vld [vmem:[%s1 + $0xe0] sm:$0xf]
  %v95 = vld [vmem:[%s1 + $0xe4] sm:$0xf]
  %v96 = vld [vmem:[%s1 + $0xe8] sm:$0xf]
  %v97 = vld [vmem:[%s1 + $0xec] sm:$0xf]
  %v98 = vld [vmem:[%s1 + $0xf0] sm:$0xf]
  %v99 = vld [vmem:[%s1 + $0xf4] sm:$0xf]
  %v100 = vld [vmem:[%s1 + $0xf8] sm:$0xf]
  %v101 = vld [vmem:[%s1 + $0xfc] sm:$0xf]
  %v102 = vld [vmem:[%s1 + $0x100] sm:$0xf]
  %v103 = vld [vmem:[%s1 + $0x104] sm:$0xf]
  %v104 = vld [vmem:[%s1 + $0x108] sm:$0xf]
  %v105 = vld [vmem:[%s1 + $0x10c] sm:$0xf]
  %v106 = vld [vmem:[%s1 + $0x110] sm:$0xf]
  %v107 = vld [vmem:[%s1 + $0x114] sm:$0xf]
  %v108 = vld [vmem:[%s1 + $0x118] sm:$0xf]
  %v109 = vld [vmem:[%s1 + $0x11c] sm:$0xf]
  %v110 = vld [vmem:[%s1 + $0x120] sm:$0xf]
  %v111 = vld [vmem:[%s1 + $0x124] sm:$0xf]
  %v112 = vld [vmem:[%s1 + $0x128] sm:$0xf]
  %v113 = vld [vmem:[%s1 + $0x12c] sm:$0xf]
  %v114 = vld [vmem:[%s1 + $0x130] sm:$0xf]
  %v115 = vld [vmem:[%s1 + $0x134] sm:$0xf]
  %v116 = vld [vmem:[%s1 + $0x138] sm:$0xf]
  %v117 = vld [vmem:[%s1 + $0x13c] sm:$0xf]
  %v118 = vld [vmem:[%s1 + $0x140] sm:$0xf]
  %v119 = vld [vmem:[%s1 + $0x144] sm:$0xf]
  %v120 = vld [vmem:[%s1 + $0x148] sm:$0xf]
  %v121 = vld [vmem:[%s1 + $0x14c] sm:$0xf]
  %v122 = vld [vmem:[%s1 + $0x150] sm:$0xf]
  %v123 = vld [vmem:[%s1 + $0x154] sm:$0xf]
  %v124 = vld [vmem:[%s1 + $0x158] sm:$0xf]
  %v125 = vld [vmem:[%s1 + $0x15c] sm:$0xf]
  %v126 = vld [vmem:[%s1 + $0x160] sm:$0xf]
  %v127 = vld [vmem:[%s1 + $0x164] sm:$0xf]
  %v128 = vld [vmem:[%s1 + $0x168] sm:$0xf]
  %v129 = vld [vmem:[%s1 + $0x16c] sm:$0xf]
  %v130 = vld [vmem:[%s1 + $0x170] sm:$0xf]
  %v131 = vld [vmem:[%s1 + $0x174] sm:$0xf]
  %v132 = vld [vmem:[%s1 + $0x178] sm:$0xf]
  %v133 = vld [vmem:[%s1 + $0x17c] sm:$0xf]
  %v134 = vld [vmem:[%s1 + $0x180] sm:$0xf]
  %v135 = vld [vmem:[%s1 + $0x184] sm:$0xf]
  %v136 = vld [vmem:[%s1 + $0x188] sm:$0xf]
  %v137 = vld [vmem:[%s1 + $0x18c] sm:$0xf]
  %v138 = vld [vmem:[%s1 + $0x190] sm:$0xf]
  %v139 = vld [vmem:[%s1 + $0x194] sm:$0xf]
  %v140 = vld [vmem:[%s1 + $0x198] sm:$0xf]
  %v141 = vld [vmem:[%s1 + $0x19c] sm:$0xf]
  %v142 = vld [vmem:[%s1 + $0x1a0] sm:$0xf]
  %v143 = vld [vmem:[%s1 + $0x1a4] sm:$0xf]
  %v144 = vld [vmem:[%s1 + $0x1a8] sm:$0xf]
  %v145 = vld [vmem:[%s1 + $0x1ac] sm:$0xf]
  %v146 = vld [vmem:[%s1 + $0x1b0] sm:$0xf]
  %v147 = vld [vmem:[%s1 + $0x1b4] sm:$0xf]
  %v148 = vld [vmem:[%s1 + $0x1b8] sm:$0xf]
  %v149 = vld [vmem:[%s1 + $0x1bc] sm:$0xf]
  %v150 = vld [vmem:[%s1 + $0x1c0] sm:$0xf]
  %v151 = vld [vmem:[%s1 + $0x1c4] sm:$0xf]
  %v152 = vld [vmem:[%s1 + $0x1c8] sm:$0xf]
  %v153 = vld [vmem:[%s1 + $0x1cc] sm:$0xf]
  %v154 = vld [vmem:[%s1 + $0x1d0] sm:$0xf]
  %v155 = vld [vmem:[%s1 + $0x1d4] sm:$0xf]
  %v156 = vld [vmem:[%s1 + $0x1d8] sm:$0xf]
  %v157 = vld [vmem:[%s1 + $0x1dc] sm:$0xf]
  %v158 = vld [vmem:[%s1 + $0x1e0] sm:$0xf]
  %v159 = vld [vmem:[%s1 + $0x1e4] sm:$0xf]
  %v160 = vld [vmem:[%s1 + $0x1e8] sm:$0xf]
  %v161 = vld [vmem:[%s1 + $0x1ec] sm:$0xf]
  %v162 = vld [vmem:[%s1 + $0x1f0] sm:$0xf]
  %v163 = vld [vmem:[%s1 + $0x1f4] sm:$0xf]
  %v164 = vld [vmem:[%s1 + $0x1f8] sm:$0xf]
  %v165 = vld [vmem:[%s1 + $0x1fc] sm:$0xf]
  %v166 = vld [vmem:[%s1 + $0x200] sm:$0xf]
  %v167 = vld [vmem:[%s1 + $0x204] sm:$0xf]
  %v168 = vld [vmem:[%s1 + $0x208] sm:$0xf]
  %v169 = vld [vmem:[%s1 + $0x20c] sm:$0xf]
  %v170 = vld [vmem:[%s1 + $0x210] sm:$0xf]
  %v171 = vld [vmem:[%s1 + $0x214] sm:$0xf]
  %v172 = vld [vmem:[%s1 + $0x218] sm:$0xf]
  %v173 = vld [vmem:[%s1 + $0x21c] sm:$0xf]
  %v174 = vld [vmem:[%s1 + $0x220] sm:$0xf]
  %v175 = vld [vmem:[%s1 + $0x224] sm:$0xf]
  %v176 = vld [vmem:[%s1 + $0x228] sm:$0xf]
  %v177 = vld [vmem:[%s1 + $0x22c] sm:$0xf]
  %v178 = vld [vmem:[%s1 + $0x230] sm:$0xf]
  %v179 = vld [vmem:[%s1 + $0x234] sm:$0xf]
  %v180 = vld [vmem:[%s1 + $0x238] sm:$0xf]
  %v181 = vld [vmem:[%s1 + $0x23c] sm:$0xf]
  %v202 = vunpack.c.l.b16 %v18
  %v203 = vunpack.c.h.b16 %v18
  %v204 = vunpack.c.l.b16 %v19
  %v205 = vunpack.c.h.b16 %v19
  %v206 = vunpack.c.l.b16 %v20
  %v207 = vunpack.c.h.b16 %v20
  %v208 = vunpack.c.l.b16 %v21
  %v209 = vunpack.c.h.b16 %v21
  %v210 = vunpack.c.l.b16 %v22
  %v211 = vunpack.c.l.b16 %v23
  %v212 = vunpack.c.h.b16 %v23
  %v213 = vunpack.c.l.b16 %v24
  %v214 = vunpack.c.h.b16 %v24
  %v215 = vunpack.c.l.b16 %v25
  %v216 = vunpack.c.h.b16 %v25
  %v217 = vunpack.c.l.b16 %v26
  %v218 = vunpack.c.h.b16 %v26
  %v219 = vunpack.c.l.b16 %v27
  %v220 = vunpack.c.l.b16 %v28
  %v221 = vunpack.c.h.b16 %v28
  %v222 = vunpack.c.l.b16 %v29
  %v223 = vunpack.c.h.b16 %v29
  %v224 = vunpack.c.l.b16 %v30
  %v225 = vunpack.c.h.b16 %v30
  %v226 = vunpack.c.l.b16 %v31
  %v227 = vunpack.c.h.b16 %v31
  %v228 = vunpack.c.l.b16 %v32
  %v229 = vunpack.c.l.b16 %v33
  %v230 = vunpack.c.h.b16 %v33
  %v231 = vunpack.c.l.b16 %v34
  %v232 = vunpack.c.h.b16 %v34
  %v233 = vunpack.c.l.b16 %v35
  %v234 = vunpack.c.h.b16 %v35
  %v235 = vunpack.c.l.b16 %v36
  %v236 = vunpack.c.h.b16 %v36
  %v237 = vunpack.c.l.b16 %v37
  %v238 = vpack.c.b16 %v211, %v202
  %v239 = vpack.c.b16 %v212, %v203
  %v240 = vpack.c.b16 %v213, %v204
  %v241 = vpack.c.b16 %v214, %v205
  %v242 = vpack.c.b16 %v215, %v206
  %v243 = vpack.c.b16 %v216, %v207
  %v244 = vpack.c.b16 %v217, %v208
  %v245 = vpack.c.b16 %v218, %v209
  %v246 = vpack.c.b16 %v219, %v210
  %v247 = vpack.c.b16 %v229, %v220
  %v248 = vpack.c.b16 %v230, %v221
  %v249 = vpack.c.b16 %v231, %v222
  %v250 = vpack.c.b16 %v232, %v223
  %v251 = vpack.c.b16 %v233, %v224
  %v252 = vpack.c.b16 %v234, %v225
  %v253 = vpack.c.b16 %v235, %v226
  %v254 = vpack.c.b16 %v236, %v227
  %v255 = vpack.c.b16 %v237, %v228
  %v418 = vunpack.c.l.b16 %v38
  %v419 = vunpack.c.l.b16 %v39
  %v420 = vunpack.c.l.b16 %v40
  %v421 = vunpack.c.l.b16 %v41
  %v422 = vunpack.c.l.b16 %v42
  %v423 = vunpack.c.l.b16 %v43
  %v424 = vunpack.c.l.b16 %v44
  %v425 = vunpack.c.l.b16 %v45
  %v426 = vunpack.c.l.b16 %v46
  %v427 = vunpack.c.l.b16 %v47
  %v428 = vunpack.c.l.b16 %v48
  %v429 = vunpack.c.l.b16 %v49
  %v430 = vunpack.c.l.b16 %v50
  %v431 = vunpack.c.l.b16 %v51
  %v432 = vunpack.c.l.b16 %v52
  %v433 = vunpack.c.l.b16 %v53
  %v434 = vunpack.c.l.b16 %v54
  %v435 = vunpack.c.l.b16 %v55
  %v436 = vunpack.c.l.b16 %v56
  %v437 = vunpack.c.l.b16 %v57
  %v438 = vunpack.c.l.b16 %v58
  %v439 = vunpack.c.l.b16 %v59
  %v440 = vunpack.c.l.b16 %v60
  %v441 = vunpack.c.l.b16 %v61
  %v442 = vunpack.c.l.b16 %v62
  %v443 = vunpack.c.l.b16 %v63
  %v444 = vunpack.c.l.b16 %v64
  %v445 = vunpack.c.l.b16 %v65
  %v446 = vunpack.c.l.b16 %v66
  %v447 = vunpack.c.l.b16 %v67
  %v448 = vunpack.c.l.b16 %v68
  %v449 = vunpack.c.l.b16 %v69
  %v450 = vunpack.c.l.b16 %v70
  %v451 = vunpack.c.l.b16 %v71
  %v452 = vunpack.c.l.b16 %v72
  %v453 = vunpack.c.l.b16 %v73
  %v454 = vunpack.c.l.b16 %v74
  %v455 = vunpack.c.l.b16 %v75
  %v456 = vunpack.c.l.b16 %v76
  %v457 = vunpack.c.l.b16 %v77
  %v458 = vunpack.c.l.b16 %v78
  %v459 = vunpack.c.l.b16 %v79
  %v460 = vunpack.c.l.b16 %v80
  %v461 = vunpack.c.l.b16 %v81
  %v462 = vunpack.c.l.b16 %v82
  %v463 = vunpack.c.l.b16 %v83
  %v464 = vunpack.c.l.b16 %v84
  %v465 = vunpack.c.l.b16 %v85
  %v466 = vunpack.c.l.b16 %v86
  %v467 = vunpack.c.l.b16 %v87
  %v468 = vunpack.c.l.b16 %v88
  %v469 = vunpack.c.l.b16 %v89
  %v470 = vunpack.c.l.b16 %v90
  %v471 = vunpack.c.l.b16 %v91
  %v472 = vunpack.c.l.b16 %v92
  %v473 = vunpack.c.l.b16 %v93
  %v474 = vunpack.c.l.b16 %v94
  %v475 = vunpack.c.l.b16 %v95
  %v476 = vunpack.c.l.b16 %v96
  %v477 = vunpack.c.l.b16 %v97
  %v478 = vunpack.c.l.b16 %v98
  %v479 = vunpack.c.l.b16 %v99
  %v480 = vunpack.c.l.b16 %v100
  %v481 = vunpack.c.l.b16 %v101
  %v482 = vunpack.c.l.b16 %v102
  %v483 = vunpack.c.l.b16 %v103
  %v484 = vunpack.c.l.b16 %v104
  %v485 = vunpack.c.l.b16 %v105
  %v486 = vunpack.c.l.b16 %v106
  %v487 = vunpack.c.l.b16 %v107
  %v488 = vunpack.c.l.b16 %v108
  %v489 = vunpack.c.l.b16 %v109
  %v490 = vunpack.c.l.b16 %v110
  %v491 = vunpack.c.l.b16 %v111
  %v492 = vunpack.c.l.b16 %v112
  %v493 = vunpack.c.l.b16 %v113
  %v494 = vunpack.c.l.b16 %v114
  %v495 = vunpack.c.l.b16 %v115
  %v496 = vunpack.c.l.b16 %v116
  %v497 = vunpack.c.l.b16 %v117
  %v498 = vunpack.c.l.b16 %v118
  %v499 = vunpack.c.l.b16 %v119
  %v500 = vunpack.c.l.b16 %v120
  %v501 = vunpack.c.l.b16 %v121
  %v502 = vunpack.c.l.b16 %v122
  %v503 = vunpack.c.l.b16 %v123
  %v504 = vunpack.c.l.b16 %v124
  %v505 = vunpack.c.l.b16 %v125
  %v506 = vunpack.c.l.b16 %v126
  %v507 = vunpack.c.l.b16 %v127
  %v508 = vunpack.c.l.b16 %v128
  %v509 = vunpack.c.l.b16 %v129
  %v510 = vunpack.c.l.b16 %v130
  %v511 = vunpack.c.l.b16 %v131
  %v512 = vunpack.c.l.b16 %v132
  %v513 = vunpack.c.l.b16 %v133
  %v514 = vunpack.c.l.b16 %v134
  %v515 = vunpack.c.l.b16 %v135
  %v516 = vunpack.c.l.b16 %v136
  %v517 = vunpack.c.l.b16 %v137
  %v518 = vunpack.c.l.b16 %v138
  %v519 = vunpack.c.l.b16 %v139
  %v520 = vunpack.c.l.b16 %v140
  %v521 = vunpack.c.l.b16 %v141
  %v522 = vunpack.c.l.b16 %v142
  %v523 = vunpack.c.l.b16 %v143
  %v524 = vunpack.c.l.b16 %v144
  %v525 = vunpack.c.l.b16 %v145
  %v526 = vunpack.c.l.b16 %v146
  %v527 = vunpack.c.l.b16 %v147
  %v528 = vunpack.c.l.b16 %v148
  %v529 = vunpack.c.l.b16 %v149
  %v530 = vunpack.c.l.b16 %v150
  %v531 = vunpack.c.l.b16 %v151
  %v532 = vunpack.c.l.b16 %v152
  %v533 = vunpack.c.l.b16 %v153
  %v534 = vunpack.c.l.b16 %v154
  %v535 = vunpack.c.l.b16 %v155
  %v536 = vunpack.c.l.b16 %v156
  %v537 = vunpack.c.l.b16 %v157
  %v538 = vunpack.c.l.b16 %v158
  %v539 = vunpack.c.l.b16 %v159
  %v540 = vunpack.c.l.b16 %v160
  %v541 = vunpack.c.l.b16 %v161
  %v542 = vunpack.c.l.b16 %v162
  %v543 = vunpack.c.l.b16 %v163
  %v544 = vunpack.c.l.b16 %v164
  %v545 = vunpack.c.l.b16 %v165
  %v546 = vunpack.c.l.b16 %v166
  %v547 = vunpack.c.l.b16 %v167
  %v548 = vunpack.c.l.b16 %v168
  %v549 = vunpack.c.l.b16 %v169
  %v550 = vunpack.c.l.b16 %v170
  %v551 = vunpack.c.l.b16 %v171
  %v552 = vunpack.c.l.b16 %v172
  %v553 = vunpack.c.l.b16 %v173
  %v554 = vunpack.c.l.b16 %v174
  %v555 = vunpack.c.l.b16 %v175
  %v556 = vunpack.c.l.b16 %v176
  %v557 = vunpack.c.l.b16 %v177
  %v558 = vunpack.c.l.b16 %v178
  %v559 = vunpack.c.l.b16 %v179
  %v560 = vunpack.c.l.b16 %v180
  %v561 = vunpack.c.l.b16 %v181
  %v562 = vpack.c.b16 %v419, %v418
  %v563 = vpack.c.b16 %v421, %v420
  %v564 = vpack.c.b16 %v423, %v422
  %v565 = vpack.c.b16 %v425, %v424
  %v566 = vpack.c.b16 %v427, %v426
  %v567 = vpack.c.b16 %v429, %v428
  %v568 = vpack.c.b16 %v431, %v430
  %v569 = vpack.c.b16 %v433, %v432
  %v570 = vpack.c.b16 %v435, %v434
  %v571 = vpack.c.b16 %v437, %v436
  %v572 = vpack.c.b16 %v439, %v438
  %v573 = vpack.c.b16 %v441, %v440
  %v574 = vpack.c.b16 %v443, %v442
  %v575 = vpack.c.b16 %v445, %v444
  %v576 = vpack.c.b16 %v447, %v446
  %v577 = vpack.c.b16 %v449, %v448
  %v578 = vpack.c.b16 %v451, %v450
  %v579 = vpack.c.b16 %v453, %v452
  %v580 = vpack.c.b16 %v455, %v454
  %v581 = vpack.c.b16 %v457, %v456
  %v582 = vpack.c.b16 %v459, %v458
  %v583 = vpack.c.b16 %v461, %v460
  %v584 = vpack.c.b16 %v463, %v462
  %v585 = vpack.c.b16 %v465, %v464
  %v586 = vpack.c.b16 %v467, %v466
  %v587 = vpack.c.b16 %v469, %v468
  %v588 = vpack.c.b16 %v471, %v470
  %v589 = vpack.c.b16 %v473, %v472
  %v590 = vpack.c.b16 %v475, %v474
  %v591 = vpack.c.b16 %v477, %v476
  %v592 = vpack.c.b16 %v479, %v478
  %v593 = vpack.c.b16 %v481, %v480
  %v594 = vpack.c.b16 %v483, %v482
  %v595 = vpack.c.b16 %v485, %v484
  %v596 = vpack.c.b16 %v487, %v486
  %v597 = vpack.c.b16 %v489, %v488
  %v598 = vpack.c.b16 %v491, %v490
  %v599 = vpack.c.b16 %v493, %v492
  %v600 = vpack.c.b16 %v495, %v494
  %v601 = vpack.c.b16 %v497, %v496
  %v602 = vpack.c.b16 %v499, %v498
  %v603 = vpack.c.b16 %v501, %v500
  %v604 = vpack.c.b16 %v503, %v502
  %v605 = vpack.c.b16 %v505, %v504
  %v606 = vpack.c.b16 %v507, %v506
  %v607 = vpack.c.b16 %v509, %v508
  %v608 = vpack.c.b16 %v511, %v510
  %v609 = vpack.c.b16 %v513, %v512
  %v610 = vpack.c.b16 %v515, %v514
  %v611 = vpack.c.b16 %v517, %v516
  %v612 = vpack.c.b16 %v519, %v518
  %v613 = vpack.c.b16 %v521, %v520
  %v614 = vpack.c.b16 %v523, %v522
  %v615 = vpack.c.b16 %v525, %v524
  %v616 = vpack.c.b16 %v527, %v526
  %v617 = vpack.c.b16 %v529, %v528
  %v618 = vpack.c.b16 %v531, %v530
  %v619 = vpack.c.b16 %v533, %v532
  %v620 = vpack.c.b16 %v535, %v534
  %v621 = vpack.c.b16 %v537, %v536
  %v622 = vpack.c.b16 %v539, %v538
  %v623 = vpack.c.b16 %v541, %v540
  %v624 = vpack.c.b16 %v543, %v542
  %v625 = vpack.c.b16 %v545, %v544
  %v626 = vpack.c.b16 %v547, %v546
  %v627 = vpack.c.b16 %v549, %v548
  %v628 = vpack.c.b16 %v551, %v550
  %v629 = vpack.c.b16 %v553, %v552
  %v630 = vpack.c.b16 %v555, %v554
  %v631 = vpack.c.b16 %v557, %v556
  %v632 = vpack.c.b16 %v559, %v558
  %v633 = vpack.c.b16 %v561, %v560
  %706 = vmatprep.subr.bf16.mxu0 0
  %707 = vmatpush1.bf16.msra.mxu0 %v569
  %708 = vmatprep.subr.bf16.mxu0 0
  %709 = vmatpush1.bf16.msra.mxu0 %v568
  %710 = vmatprep.subr.bf16.mxu0 0
  %711 = vmatpush1.bf16.msra.mxu0 %v567
  %712 = vmatprep.subr.bf16.mxu0 0
  %713 = vmatpush1.bf16.msra.mxu0 %v566
  %714 = vmatprep.subr.bf16.mxu0 0
  %715 = vmatpush1.bf16.msra.mxu0 %v565
  %716 = vmatprep.subr.bf16.mxu0 0
  %717 = vmatpush1.bf16.msra.mxu0 %v564
  %718 = vmatprep.subr.bf16.mxu0 0
  %719 = vmatpush1.bf16.msra.mxu0 %v563
  %720 = vmatprep.subr.bf16.mxu0 0
  %721 = vmatpush1.bf16.msra.mxu0 %v562
  %722 = vmatprep.subr.bf16.mxu0 0
  %723 = vmatpush2.bf16.msra.mxu0 %v577
  %724 = vmatprep.subr.bf16.mxu0 0
  %725 = vmatpush2.bf16.msra.mxu0 %v576
  %726 = vmatprep.subr.bf16.mxu0 0
  %727 = vmatpush2.bf16.msra.mxu0 %v575
  %728 = vmatprep.subr.bf16.mxu0 0
  %729 = vmatpush2.bf16.msra.mxu0 %v574
  %730 = vmatprep.subr.bf16.mxu0 0
  %731 = vmatpush2.bf16.msra.mxu0 %v573
  %732 = vmatprep.subr.bf16.mxu0 0
  %733 = vmatpush2.bf16.msra.mxu0 %v572
  %734 = vmatprep.subr.bf16.mxu0 0
  %735 = vmatpush2.bf16.msra.mxu0 %v571
  %736 = vmatprep.subr.bf16.mxu0 0
  %737 = vmatpush2.bf16.msra.mxu0 %v570
  %738 = vmatprep.mubr.bf16.mxu0 %v239
  %739 = vmatmul.mubr.bf16.gmra.mxu0 %v238
  %v740 = vpop.f32.mrf.mxu0
  %v741 = vadd.f32 0.0, %v740
  %v742 = vpop.f32.mrf.mxu0
  %v743 = vpop.f32.mrf.mxu0
  %v744 = vadd.f32 0.0, %v743
  %v745 = vpop.f32.mrf.mxu0
  %746 = vmatprep.mubr.bf16.mxu0 %v248
  %747 = vmatmul.mubr.bf16.gmra.mxu0 %v247
  %v748 = vpop.f32.mrf.mxu0
  %v749 = vadd.f32 0.0, %v748
  %v750 = vpop.f32.mrf.mxu0
  %v751 = vpop.f32.mrf.mxu0
  %v752 = vadd.f32 0.0, %v751
  %v753 = vpop.f32.mrf.mxu0
  %754 = vdwg.mxu0
  %755 = vmatprep.subr.bf16.mxu0 0
  %756 = vmatpush1.bf16.msra.mxu0 %v585
  %757 = vmatprep.subr.bf16.mxu0 0
  %758 = vmatpush1.bf16.msra.mxu0 %v584
  %759 = vmatprep.subr.bf16.mxu0 0
  %760 = vmatpush1.bf16.msra.mxu0 %v583
  %761 = vmatprep.subr.bf16.mxu0 0
  %762 = vmatpush1.bf16.msra.mxu0 %v582
  %763 = vmatprep.subr.bf16.mxu0 0
  %764 = vmatpush1.bf16.msra.mxu0 %v581
  %765 = vmatprep.subr.bf16.mxu0 0
  %766 = vmatpush1.bf16.msra.mxu0 %v580
  %767 = vmatprep.subr.bf16.mxu0 0
  %768 = vmatpush1.bf16.msra.mxu0 %v579
  %769 = vmatprep.subr.bf16.mxu0 0
  %770 = vmatpush1.bf16.msra.mxu0 %v578
  %771 = vmatprep.subr.bf16.mxu0 0
  %772 = vmatpush2.bf16.msra.mxu0 %v593
  %773 = vmatprep.subr.bf16.mxu0 0
  %774 = vmatpush2.bf16.msra.mxu0 %v592
  %775 = vmatprep.subr.bf16.mxu0 0
  %776 = vmatpush2.bf16.msra.mxu0 %v591
  %777 = vmatprep.subr.bf16.mxu0 0
  %778 = vmatpush2.bf16.msra.mxu0 %v590
  %779 = vmatprep.subr.bf16.mxu0 0
  %780 = vmatpush2.bf16.msra.mxu0 %v589
  %781 = vmatprep.subr.bf16.mxu0 0
  %782 = vmatpush2.bf16.msra.mxu0 %v588
  %783 = vmatprep.subr.bf16.mxu0 0
  %784 = vmatpush2.bf16.msra.mxu0 %v587
  %785 = vmatprep.subr.bf16.mxu0 0
  %786 = vmatpush2.bf16.msra.mxu0 %v586
  %787 = vmatprep.mubr.bf16.mxu0 %v241
  %788 = vmatmul.mubr.bf16.gmra.mxu0 %v240
  %v789 = vpop.f32.mrf.mxu0
  %v790 = vadd.f32 %v741, %v789
  %v791 = vpop.f32.mrf.mxu0
  %v792 = vpop.f32.mrf.mxu0
  %v793 = vadd.f32 %v744, %v792
  %v794 = vpop.f32.mrf.mxu0
  %795 = vmatprep.mubr.bf16.mxu0 %v250
  %796 = vmatmul.mubr.bf16.gmra.mxu0 %v249
  %v797 = vpop.f32.mrf.mxu0
  %v798 = vadd.f32 %v749, %v797
  %v799 = vpop.f32.mrf.mxu0
  %v800 = vpop.f32.mrf.mxu0
  %v801 = vadd.f32 %v752, %v800
  %v802 = vpop.f32.mrf.mxu0
  %803 = vdwg.mxu0
  %804 = vmatprep.subr.bf16.mxu0 0
  %805 = vmatpush1.bf16.msra.mxu0 %v601
  %806 = vmatprep.subr.bf16.mxu0 0
  %807 = vmatpush1.bf16.msra.mxu0 %v600
  %808 = vmatprep.subr.bf16.mxu0 0
  %809 = vmatpush1.bf16.msra.mxu0 %v599
  %810 = vmatprep.subr.bf16.mxu0 0
  %811 = vmatpush1.bf16.msra.mxu0 %v598
  %812 = vmatprep.subr.bf16.mxu0 0
  %813 = vmatpush1.bf16.msra.mxu0 %v597
  %814 = vmatprep.subr.bf16.mxu0 0
  %815 = vmatpush1.bf16.msra.mxu0 %v596
  %816 = vmatprep.subr.bf16.mxu0 0
  %817 = vmatpush1.bf16.msra.mxu0 %v595
  %818 = vmatprep.subr.bf16.mxu0 0
  %819 = vmatpush1.bf16.msra.mxu0 %v594
  %820 = vmatprep.subr.bf16.mxu0 0
  %821 = vmatpush2.bf16.msra.mxu0 %v609
  %822 = vmatprep.subr.bf16.mxu0 0
  %823 = vmatpush2.bf16.msra.mxu0 %v608
  %824 = vmatprep.subr.bf16.mxu0 0
  %825 = vmatpush2.bf16.msra.mxu0 %v607
  %826 = vmatprep.subr.bf16.mxu0 0
  %827 = vmatpush2.bf16.msra.mxu0 %v606
  %828 = vmatprep.subr.bf16.mxu0 0
  %829 = vmatpush2.bf16.msra.mxu0 %v605
  %830 = vmatprep.subr.bf16.mxu0 0
  %831 = vmatpush2.bf16.msra.mxu0 %v604
  %832 = vmatprep.subr.bf16.mxu0 0
  %833 = vmatpush2.bf16.msra.mxu0 %v603
  %834 = vmatprep.subr.bf16.mxu0 0
  %835 = vmatpush2.bf16.msra.mxu0 %v602
  %836 = vmatprep.mubr.bf16.mxu0 %v243
  %837 = vmatmul.mubr.bf16.gmra.mxu0 %v242
  %v838 = vpop.f32.mrf.mxu0
  %v839 = vadd.f32 %v790, %v838
  %v840 = vpop.f32.mrf.mxu0
  %v841 = vpop.f32.mrf.mxu0
  %v842 = vadd.f32 %v793, %v841
  %v843 = vpop.f32.mrf.mxu0
  %844 = vmatprep.mubr.bf16.mxu0 %v252
  %845 = vmatmul.mubr.bf16.gmra.mxu0 %v251
  %v846 = vpop.f32.mrf.mxu0
  %v847 = vadd.f32 %v798, %v846
  %v848 = vpop.f32.mrf.mxu0
  %v849 = vpop.f32.mrf.mxu0
  %v850 = vadd.f32 %v801, %v849
  %v851 = vpop.f32.mrf.mxu0
  %852 = vdwg.mxu0
  %853 = vmatprep.subr.bf16.mxu0 0
  %854 = vmatpush1.bf16.msra.mxu0 %v617
  %855 = vmatprep.subr.bf16.mxu0 0
  %856 = vmatpush1.bf16.msra.mxu0 %v616
  %857 = vmatprep.subr.bf16.mxu0 0
  %858 = vmatpush1.bf16.msra.mxu0 %v615
  %859 = vmatprep.subr.bf16.mxu0 0
  %860 = vmatpush1.bf16.msra.mxu0 %v614
  %861 = vmatprep.subr.bf16.mxu0 0
  %862 = vmatpush1.bf16.msra.mxu0 %v613
  %863 = vmatprep.subr.bf16.mxu0 0
  %864 = vmatpush1.bf16.msra.mxu0 %v612
  %865 = vmatprep.subr.bf16.mxu0 0
  %866 = vmatpush1.bf16.msra.mxu0 %v611
  %867 = vmatprep.subr.bf16.mxu0 0
  %868 = vmatpush1.bf16.msra.mxu0 %v610
  %869 = vmatprep.subr.bf16.mxu0 0
  %870 = vmatpush2.bf16.msra.mxu0 %v625
  %871 = vmatprep.subr.bf16.mxu0 0
  %872 = vmatpush2.bf16.msra.mxu0 %v624
  %873 = vmatprep.subr.bf16.mxu0 0
  %874 = vmatpush2.bf16.msra.mxu0 %v623
  %875 = vmatprep.subr.bf16.mxu0 0
  %876 = vmatpush2.bf16.msra.mxu0 %v622
  %877 = vmatprep.subr.bf16.mxu0 0
  %878 = vmatpush2.bf16.msra.mxu0 %v621
  %879 = vmatprep.subr.bf16.mxu0 0
  %880 = vmatpush2.bf16.msra.mxu0 %v620
  %881 = vmatprep.subr.bf16.mxu0 0
  %882 = vmatpush2.bf16.msra.mxu0 %v619
  %883 = vmatprep.subr.bf16.mxu0 0
  %884 = vmatpush2.bf16.msra.mxu0 %v618
  %885 = vmatprep.mubr.bf16.mxu0 %v245
  %886 = vmatmul.mubr.bf16.gmra.mxu0 %v244
  %v887 = vpop.f32.mrf.mxu0
  %v888 = vadd.f32 %v839, %v887
  %v889 = vpop.f32.mrf.mxu0
  %v890 = vpop.f32.mrf.mxu0
  %v891 = vadd.f32 %v842, %v890
  %v892 = vpop.f32.mrf.mxu0
  %893 = vmatprep.mubr.bf16.mxu0 %v254
  %894 = vmatmul.mubr.bf16.gmra.mxu0 %v253
  %v895 = vpop.f32.mrf.mxu0
  %v896 = vadd.f32 %v847, %v895
  %v897 = vpop.f32.mrf.mxu0
  %v898 = vpop.f32.mrf.mxu0
  %v899 = vadd.f32 %v850, %v898
  %v900 = vpop.f32.mrf.mxu0
  %901 = vdwg.mxu0
  %902 = vmatprep.subr.bf16.mxu0 0
  %903 = vmatpush1.bf16.msra.mxu0 %v633
  %904 = vmatprep.subr.bf16.mxu0 0
  %905 = vmatpush1.bf16.msra.mxu0 %v632
  %906 = vmatprep.subr.bf16.mxu0 0
  %907 = vmatpush1.bf16.msra.mxu0 %v631
  %908 = vmatprep.subr.bf16.mxu0 0
  %909 = vmatpush1.bf16.msra.mxu0 %v630
  %910 = vmatprep.subr.bf16.mxu0 0
  %911 = vmatpush1.bf16.msra.mxu0 %v629
  %912 = vmatprep.subr.bf16.mxu0 0
  %913 = vmatpush1.bf16.msra.mxu0 %v628
  %914 = vmatprep.subr.bf16.mxu0 0
  %915 = vmatpush1.bf16.msra.mxu0 %v627
  %916 = vmatprep.subr.bf16.mxu0 0
  %917 = vmatpush1.bf16.msra.mxu0 %v626
  %918 = vmatprep.subr.bf16.mxu0 0
  %919 = vmatpush2.bf16.msra.mxu0 0
  %920 = vmatprep.subr.bf16.mxu0 0
  %921 = vmatpush2.bf16.msra.mxu0 0
  %922 = vmatprep.subr.bf16.mxu0 0
  %923 = vmatpush2.bf16.msra.mxu0 0
  %924 = vmatprep.subr.bf16.mxu0 0
  %925 = vmatpush2.bf16.msra.mxu0 0
  %926 = vmatprep.subr.bf16.mxu0 0
  %927 = vmatpush2.bf16.msra.mxu0 0
  %928 = vmatprep.subr.bf16.mxu0 0
  %929 = vmatpush2.bf16.msra.mxu0 0
  %930 = vmatprep.subr.bf16.mxu0 0
  %931 = vmatpush2.bf16.msra.mxu0 0
  %932 = vmatprep.subr.bf16.mxu0 0
  %933 = vmatpush2.bf16.msra.mxu0 0
  %934 = vmatprep.mubr.bf16.mxu0 0
  %935 = vmatmul.mubr.bf16.gmra.mxu0 %v246
  %v936 = vpop.f32.mrf.mxu0
  %v937 = vadd.f32 %v888, %v936
  %v938 = vpop.f32.mrf.mxu0
  %v939 = vpop.f32.mrf.mxu0
  %v940 = vadd.f32 %v891, %v939
  %v941 = vpop.f32.mrf.mxu0
  %942 = vmatprep.mubr.bf16.mxu0 0
  %943 = vmatmul.mubr.bf16.gmra.mxu0 %v255
  %v944 = vpop.f32.mrf.mxu0
  %v945 = vadd.f32 %v896, %v944
  %v946 = vpop.f32.mrf.mxu0
  %v947 = vpop.f32.mrf.mxu0
  %v948 = vadd.f32 %v899, %v947
  %v949 = vpop.f32.mrf.mxu0
  %950 = vdwg.mxu0
  %v951 = vld [vmem:[%s2] sm:$0x1]
  %v953 = vlaneseq
  %v954 = vshrl.u32 %v953, 7
  %v955 = vsub.s32 0, %v954
  %v956 = vrot.slane %v951, %v955
  %v958 = vmul.f32 %v937, %v956
  %v959 = vmul.f32 %v940, %v956
  %v960 = vmul.f32 %v945, %v956
  %v961 = vmul.f32 %v948, %v956
  %v962 = vld [vmem:[%s3] sm:$0x1]
  %v964 = vlaneseq
  %v965 = vshrl.u32 %v964, 7
  %v966 = vsub.s32 0, %v965
  %v967 = vrot.slane %v962, %v966
  %v969 = vadd.f32 %v958, %v967
  %v970 = vadd.f32 %v959, %v967
  %v971 = vadd.f32 %v960, %v967
  %v972 = vadd.f32 %v961, %v967
  %v973 = vmax.f32 %v969, 0.0
  %v974 = vmax.f32 %v970, 0.0
  %v975 = vmax.f32 %v971, 0.0
  %v976 = vmax.f32 %v972, 0.0
  %977 = vst [vmem:[%s4] sm:$0xff] %v973
  %978 = vst [vmem:[%s4 + $0x8] sm:$0xff] %v974
  %979 = vst [vmem:[%s4 + $0x10] sm:$0xff] %v975
  %980 = vst [vmem:[%s4 + $0x18] sm:$0xff] %v976
  // Predicated region
  $region18: #{net_forward.8} parent=0 // pred_check
    _
  $region19: #{net_forward.8} parent=0 // pred_check_branch
    %982 = sbr.rel (0) target = $region21
  $region20: #{net_forward.8} parent=0 // pred_region
    _
  $region21: #{net_forward.8} parent=0 // pred_fallthru
    _
  // Predicated region
  $region22: #{net_forward.8} parent=0 // pred_check
    _
  $region23: #{net_forward.8} parent=0 // pred_check_branch
    %984 = sbr.rel (0) target = $region25
  $region24: #{net_forward.8} parent=0 // pred_region
    _
  $region25: #{net_forward.8} parent=0 // pred_fallthru
    _

</llo_original>
